<compile_context>
chip_gen: v5e
topology: v5e:2x2
jax: 0.10.0
libtpu: 0.0.40
codegen_flags: <defaults>
</compile_context>

<pallas_src>
import functools

import numpy as np
import jax
import jax.numpy as jnp
from jax import lax
from jax.experimental import pallas as pl
from jax.experimental.pallas import tpu as pltpu


# --------------------------------------------------------------------------- #
# Kernel 1: fused ConvBlock  (Conv 3x3 + BN + ReLU + MaxPool)                  #
# --------------------------------------------------------------------------- #

def conv_block_kernel(xps_ref, wbs_ref, scale_ref, shift_ref, o_ref, *, tp, fp, Tt):
    """Fused Conv2d(3x3, pad 1) + eval BatchNorm + ReLU + MaxPool2d((tp, fp)).

    xps_ref   : (tp, L, (F+2)*Cin)           padded rows split by time-pool parity
    wbs_ref   : (fp*3, (F+2)*Cin, (F//fp)*Cout) banded im2col weights, index fq*3+dt
    scale/shift: (1, (F//fp)*Cout)            folded BN (tiled over pooled freq)
    o_ref     : (Tt, (F//fp)*Cout)            pooled NHWC output, lanes = (f', cout)
    """
    # Preload the tp parity slabs once.
    slabs = [xps_ref[r] for r in range(tp)]          # each (L, (F+2)*Cin)
    result = None
    for t_p in range(tp):                            # time-pool branch
        for fq in range(fp):                         # freq-pool branch
            acc = None
            for dt in range(3):                      # 3x3 kernel, time taps
                q = t_p + dt
                rows = slabs[q % tp][(q // tp):(q // tp) + Tt, :]
                part = jnp.dot(rows, wbs_ref[fq * 3 + dt],
                               preferred_element_type=jnp.float32)
                acc = part if acc is None else acc + part
            branch = jnp.maximum(acc * scale_ref[...] + shift_ref[...], 0.0)
            result = branch if result is None else jnp.maximum(result, branch)
    o_ref[...] = result


def conv_block_call(x_nhwc, cb, tp, fp):
    """x_nhwc: (B, T, F, Cin) -> (B, T//tp, F//fp, Cout)."""
    B, T, F, Cin = x_nhwc.shape
    W = cb["w"]                                      # (Cout, Cin, 3, 3) PyTorch layout
    Cout = W.shape[0]
    assert T % tp == 0 and F % fp == 0  # TODO(synk): non-divisible pool sizes (PyTorch floor) unsupported
    Tt, F2 = T // tp, F // fp
    Win, Wout = (F + 2) * Cin, F2 * Cout

    # Banded, frequency-pool-split weight matrices (built once, constant-folded).
    sel = np.zeros((fp, 3, F + 2, F2), np.float32)
    for fq in range(fp):
        for df in range(3):
            for f2 in range(F2):
                sel[fq, df, f2 * fp + fq + df, f2] = 1.0
    Wt = jnp.transpose(W, (2, 3, 1, 0))              # (dt, df, cin, cout)
    wbs = jnp.einsum("qgif,tgco->qticfo", jnp.asarray(sel), Wt)
    wbs = wbs.reshape(fp * 3, Win, Wout)

    # Fold conv bias + eval BatchNorm into scale/shift, tiled over pooled freq.
    scale = cb["bn_g"] / jnp.sqrt(cb["bn_var"] + 1e-5)
    shift = (cb["b"] - cb["bn_mean"]) * scale + cb["bn_b"]
    scale_t = jnp.tile(scale, F2).reshape(1, Wout)
    shift_t = jnp.tile(shift, F2).reshape(1, Wout)

    # Zero-pad (conv padding=1), flatten lanes to (freq, chan), split time rows
    # by pooling parity so the kernel only needs contiguous row slices.
    xp = jnp.pad(x_nhwc, ((0, 0), (1, 1), (1, 1), (0, 0)))
    xpf = xp.reshape(B, T + 2, Win)
    Lr = -(-(T + 2) // tp)
    streams = []
    for r in range(tp):
        s = xpf[:, r::tp, :]
        if s.shape[1] < Lr:
            s = jnp.pad(s, ((0, 0), (0, Lr - s.shape[1]), (0, 0)))
        streams.append(s)
    xps = jnp.stack(streams, axis=1)                 # (B, tp, Lr, Win)

    y = pl.pallas_call(
        functools.partial(conv_block_kernel, tp=tp, fp=fp, Tt=Tt),
        out_shape=jax.ShapeDtypeStruct((B, Tt, Wout), jnp.float32),
        grid=(B,),
        in_specs=[
            pl.BlockSpec((None, tp, Lr, Win), lambda b: (b, 0, 0, 0)),
            pl.BlockSpec((fp * 3, Win, Wout), lambda b: (0, 0, 0)),
            pl.BlockSpec((1, Wout), lambda b: (0, 0)),
            pl.BlockSpec((1, Wout), lambda b: (0, 0)),
        ],
        out_specs=pl.BlockSpec((None, Tt, Wout), lambda b: (b, 0, 0)),
        compiler_params=pltpu.CompilerParams(dimension_semantics=("parallel",)),
    )(xps, wbs, scale_t, shift_t)
    return y.reshape(B, Tt, F2, Cout)


# --------------------------------------------------------------------------- #
# Kernel 2: fused GRU + tanh-gate + MHSA(+LN) + FNN head                       #
# --------------------------------------------------------------------------- #

def head_kernel(*refs, T, B, H, heads, nb_rnn, nb_attn, nb_fnn):
    """Everything after the conv stack, in one program.

    Input rows of x are in (t, b) order: row t*B + b is timestep t of batch b.
    Output rows are in (b, t) order: row b*T + t, ready to reshape to (B, T, out).
    """
    n_in = 1 + 4 * nb_rnn + 6 * nb_attn + 2 * nb_fnn + 2
    in_refs, o_ref = refs[:n_in], refs[n_in]
    seq_scr, hbt_scr, ctx_scr = refs[n_in + 1:]
    x_ref = in_refs[0]
    idx = 1
    f32 = jnp.float32

    # -------- bidirectional multi-layer GRU (fully unrolled, PyTorch gate order)
    cur = x_ref[...]                                  # (T*B, Din), (t, b) rows
    for _ in range(nb_rnn):
        wih_ref, whh_ref, bih_ref, bhh_ref = in_refs[idx:idx + 4]
        idx += 4
        for d in range(2):                            # 0 = forward, 1 = backward
            # input projection hoisted out of the recurrence (one big matmul)
            gi_all = jnp.dot(cur, wih_ref[d], preferred_element_type=f32) + bih_ref[d]
            whh = whh_ref[d]
            bhh = bhh_ref[d]
            h = jnp.zeros((B, H), f32)
            for s in range(T):
                t = s if d == 0 else T - 1 - s
                gi = gi_all[t * B:(t + 1) * B, :]
                gh = jnp.dot(h, whh, preferred_element_type=f32) + bhh
                r = jax.nn.sigmoid(gi[:, :H] + gh[:, :H])
                z = jax.nn.sigmoid(gi[:, H:2 * H] + gh[:, H:2 * H])
                n = jnp.tanh(gi[:, 2 * H:] + r * gh[:, 2 * H:])
                h = (1.0 - z) * n + z * h
                seq_scr[t * B:(t + 1) * B, d * H:(d + 1) * H] = h
        cur = seq_scr[...]                            # (T*B, 2H)

    # -------- SELD tanh gate + (t, b) -> (b, t) row reorder (stays in VMEM)
    g = jnp.tanh(cur)
    gated = g[:, H:2 * H] * g[:, :H]                  # (T*B, H)
    for b in range(B):
        for t in range(T):
            hbt_scr[b * T + t:b * T + t + 1, :] = gated[t * B + b:t * B + b + 1, :]
    h_cur = hbt_scr[...]                              # (B*T, H), (b, t) rows

    # -------- MHSA blocks + residual LayerNorm
    E = H
    Dh = E // heads
    scale = 1.0 / (Dh ** 0.5)
    for _ in range(nb_attn):
        w_in_ref, b_in_ref, w_out_ref, b_out_ref, ln_g_ref, ln_b_ref = in_refs[idx:idx + 6]
        idx += 6
        qkv = jnp.dot(h_cur, w_in_ref[...], preferred_element_type=f32) + b_in_ref[...]
        q = qkv[:, :E] * scale
        k = qkv[:, E:2 * E]
        v = qkv[:, 2 * E:]
        for b in range(B):
            qb = q[b * T:(b + 1) * T, :]
            kb = k[b * T:(b + 1) * T, :]
            vb = v[b * T:(b + 1) * T, :]
            for hh in range(heads):
                qh = qb[:, hh * Dh:(hh + 1) * Dh]
                kh = kb[:, hh * Dh:(hh + 1) * Dh]
                vh = vb[:, hh * Dh:(hh + 1) * Dh]
                s = lax.dot_general(qh, kh, (((1,), (1,)), ((), ())),
                                    preferred_element_type=f32)
                s = s - jnp.max(s, axis=-1, keepdims=True)
                p = jnp.exp(s)
                p = p * pl.reciprocal(jnp.sum(p, axis=-1, keepdims=True), approx=True)
                ctx_scr[b * T:(b + 1) * T, hh * Dh:(hh + 1) * Dh] = jnp.dot(
                    p, vh, preferred_element_type=f32)
        attn = jnp.dot(ctx_scr[...], w_out_ref[...], preferred_element_type=f32) + b_out_ref[...]
        y = attn + h_cur
        mean = jnp.mean(y, axis=-1, keepdims=True)
        var = jnp.mean(jnp.square(y - mean), axis=-1, keepdims=True)
        h_cur = (y - mean) * lax.rsqrt(var + 1e-5) * ln_g_ref[...] + ln_b_ref[...]

    # -------- FNN head (hidden linears have no activation, output is tanh)
    for _ in range(nb_fnn):
        w_ref, b_ref = in_refs[idx:idx + 2]
        idx += 2
        h_cur = jnp.dot(h_cur, w_ref[...], preferred_element_type=f32) + b_ref[...]
    w_ref, b_ref = in_refs[idx:idx + 2]
    o_ref[...] = jnp.tanh(jnp.dot(h_cur, w_ref[...], preferred_element_type=f32) + b_ref[...])


def head_forward(x2, P, hp, T, B):
    """x2: (T*B, D) in (t, b) row order -> (B*T, out_dim) in (b, t) row order."""
    H = hp["rnn_size"]
    args = [x2]
    for L in P["gru_layers"]:
        args += [L["wih"], L["whh"], L["bih"], L["bhh"]]
    for blk in P["mhsa_blocks"]:
        args += [blk["w_in"], blk["b_in"], blk["w_out"], blk["b_out"],
                 blk["ln_g"], blk["ln_b"]]
    for (w, b) in P["fnn_hidden"]:
        args += [w, b]
    w_out, b_out = P["fnn_out"]
    args += [w_out, b_out]
    out_dim = w_out.shape[1]

    kernel = functools.partial(
        head_kernel, T=T, B=B, H=H, heads=hp["nb_heads"],
        nb_rnn=len(P["gru_layers"]), nb_attn=len(P["mhsa_blocks"]),
        nb_fnn=len(P["fnn_hidden"]))

    return pl.pallas_call(
        kernel,
        out_shape=jax.ShapeDtypeStruct((B * T, out_dim), jnp.float32),
        scratch_shapes=[
            pltpu.VMEM((T * B, 2 * H), jnp.float32),   # per-layer GRU output
            pltpu.VMEM((B * T, H), jnp.float32),       # gated, (b, t) rows
            pltpu.VMEM((B * T, H), jnp.float32),       # attention context
        ],
    )(*args)


# ------------------------------ full forward -------------------------------- #

def seld_forward(x, P, hp):
    """x: (batch, mic_channels, time_steps, mel_bins) -- PyTorch NCHW."""
    B = x.shape[0]
    h = jnp.transpose(x, (0, 2, 3, 1))                # NCHW -> NHWC (B, T, mel, C)
    for i, cb in enumerate(P["conv_blocks"]):
        h = conv_block_call(h, cb, hp["t_pool_size"][i], hp["f_pool_size"][i])

    _, Tt, Ft, Ct = h.shape
    # matches torch: x.transpose(1, 2).view(B, T', C*F')  (channel-major, freq-minor)
    h = jnp.transpose(h, (0, 1, 3, 2)).reshape(B, Tt, Ct * Ft)
    # head kernel consumes time-major rows: (T'*B, D) in (t, b) order
    x2 = jnp.transpose(h, (1, 0, 2)).reshape(Tt * B, Ct * Ft)

    out = head_forward(x2, P, hp, Tt, B)              # (B*T', out_dim), (b, t) rows
    return out.reshape(B, Tt, -1)


# --------------------------- deterministic params ---------------------------- #

def uinit(key, shape, scale=0.1):
    return jax.random.uniform(key, shape, jnp.float32, -scale, scale)


def init_model(key, hp, fc):
    keys = iter(jax.random.split(key, 64))
    P = {}
    nf = hp["nb_cnn2d_filt"]
    H = hp["rnn_size"]

    P["conv_blocks"] = []
    cin = fc["num_feat_chans"]
    for _ in range(len(hp["f_pool_size"])):
        P["conv_blocks"].append(dict(
            w=uinit(next(keys), (nf, cin, 3, 3)),
            b=uinit(next(keys), (nf,)),
            bn_g=1.0 + uinit(next(keys), (nf,)),
            bn_b=uinit(next(keys), (nf,)),
            bn_mean=uinit(next(keys), (nf,)),
            bn_var=1.0 + jnp.abs(uinit(next(keys), (nf,))),
        ))
        cin = nf

    fprod = 1
    for f in hp["f_pool_size"]:
        fprod *= f
    gru_in = nf * (fc["nb_mel_bins"] // fprod)

    P["gru_layers"] = []
    din = gru_in
    for _ in range(hp["nb_rnn_layers"]):
        P["gru_layers"].append(dict(
            wih=uinit(next(keys), (2, din, 3 * H)),    # W_ih^T, stacked fwd/bwd
            whh=uinit(next(keys), (2, H, 3 * H)),      # W_hh^T
            bih=uinit(next(keys), (2, 1, 3 * H)),
            bhh=uinit(next(keys), (2, 1, 3 * H)),
        ))
        din = 2 * H

    P["mhsa_blocks"] = []
    for _ in range(hp["nb_self_attn_layers"]):
        P["mhsa_blocks"].append(dict(
            w_in=uinit(next(keys), (H, 3 * H)),        # in_proj_weight^T
            b_in=uinit(next(keys), (1, 3 * H)),
            w_out=uinit(next(keys), (H, H)),           # out_proj.weight^T
            b_out=uinit(next(keys), (1, H)),
            ln_g=1.0 + uinit(next(keys), (1, H)),
            ln_b=uinit(next(keys), (1, H)),
        ))

    P["fnn_hidden"] = []
    din = H
    for _ in range(hp["nb_fnn_layers"]):
        P["fnn_hidden"].append((uinit(next(keys), (din, hp["fnn_size"])),
                                uinit(next(keys), (1, hp["fnn_size"]))))
        din = hp["fnn_size"]
    out_dim = fc["unique_classes"] * 3 * 3
    P["fnn_out"] = (uinit(next(keys), (din, out_dim)),
                    uinit(next(keys), (1, out_dim)))
    return P


# ---------------------------------- main ------------------------------------ #

if __name__ == "__main__":
    hp = dict(t_pool_size=[2, 2], f_pool_size=[2, 2], nb_cnn2d_filt=16,
              dropout_rate=0.0, rnn_size=32, nb_rnn_layers=2,
              nb_self_attn_layers=1, nb_heads=4, nb_fnn_layers=1, fnn_size=32)
    fc = dict(num_feat_chans=4, nb_mel_bins=16, unique_classes=3)

    key = jax.random.PRNGKey(0)
    kx, kp = jax.random.split(key)
    # (batch, mic_channels, time_steps, mel_bins)
    x = jax.random.normal(kx, (2, 4, 16, 16), jnp.float32)
    P = init_model(kp, hp, fc)

    fwd = jax.jit(lambda xx: seld_forward(xx, P, hp))
    out = jax.block_until_ready(fwd(x))

    expected_T = 16 // (hp["t_pool_size"][0] * hp["t_pool_size"][1])
    assert out.shape == (2, expected_T, fc["unique_classes"] * 9), out.shape
    assert jnp.all(jnp.isfinite(out))
    print("KERNEL_OK")
</pallas_src>

<mosaic_0001>
module attributes {stable_mosaic.version = 11 : i64} {
  func.func @conv_block_kernel(%arg0: i32, %arg1: memref<1x2x9x72xf32, #tpu.memory_space<vmem>>, %arg2: memref<6x72x128xf32, #tpu.memory_space<vmem>>, %arg3: memref<1x128xf32, #tpu.memory_space<vmem>>, %arg4: memref<1x128xf32, #tpu.memory_space<vmem>>, %arg5: memref<1x8x128xf32, #tpu.memory_space<vmem>>) attributes {dimension_semantics = [#tpu.dimension_semantics<parallel>], iteration_bounds = array<i64: 2>, scalar_prefetch = 0 : i64, scratch_operands = 0 : i64, tpu.core_type = #tpu.core_type<tc>, window_params = [{transform_indices = @transform_0, window_bounds = array<i64: 1, 2, 9, 72>}, {pipeline_mode = #tpu.pipeline_mode<synchronous>, transform_indices = @transform_1, window_bounds = array<i64: 6, 72, 128>}, {pipeline_mode = #tpu.pipeline_mode<synchronous>, transform_indices = @transform_2, window_bounds = array<i64: 1, 128>}, {pipeline_mode = #tpu.pipeline_mode<synchronous>, transform_indices = @transform_3, window_bounds = array<i64: 1, 128>}, {transform_indices = @transform_4, window_bounds = array<i64: 1, 8, 128>}]} {
    %c0 = arith.constant 0 : index
    %c0_0 = arith.constant 0 : index
    %c0_1 = arith.constant 0 : index
    %c0_2 = arith.constant 0 : index
    %0 = vector.load %arg1[%c0, %c0_0, %c0_1, %c0_2] : memref<1x2x9x72xf32, #tpu.memory_space<vmem>>, vector<1x1x9x72xf32>
    %1 = vector.shape_cast %0 : vector<1x1x9x72xf32> to vector<9x72xf32>
    %c0_3 = arith.constant 0 : index
    %c1 = arith.constant 1 : index
    %c0_4 = arith.constant 0 : index
    %c0_5 = arith.constant 0 : index
    %2 = vector.load %arg1[%c0_3, %c1, %c0_4, %c0_5] : memref<1x2x9x72xf32, #tpu.memory_space<vmem>>, vector<1x1x9x72xf32>
    %3 = vector.shape_cast %2 : vector<1x1x9x72xf32> to vector<9x72xf32>
    %4 = vector.extract_strided_slice %1 {offsets = [0, 0], sizes = [8, 72], strides = [1, 1]} : vector<9x72xf32> to vector<8x72xf32>
    %c0_6 = arith.constant 0 : index
    %c0_7 = arith.constant 0 : index
    %c0_8 = arith.constant 0 : index
    %5 = vector.load %arg2[%c0_6, %c0_7, %c0_8] : memref<6x72x128xf32, #tpu.memory_space<vmem>>, vector<1x72x128xf32>
    %6 = vector.shape_cast %5 : vector<1x72x128xf32> to vector<72x128xf32>
    %cst = arith.constant dense<0.000000e+00> : vector<8x128xf32>
    %7 = tpu.matmul %4, %6, %cst {dimension_numbers = #tpu.dot_dimension_numbers<[1], [0], [0], [1], [0, 0, 1, 1], [], []>} : vector<8x72xf32>, vector<72x128xf32>, vector<8x128xf32> -> vector<8x128xf32>
    %8 = vector.extract_strided_slice %3 {offsets = [0, 0], sizes = [8, 72], strides = [1, 1]} : vector<9x72xf32> to vector<8x72xf32>
    %c1_9 = arith.constant 1 : index
    %c0_10 = arith.constant 0 : index
    %c0_11 = arith.constant 0 : index
    %9 = vector.load %arg2[%c1_9, %c0_10, %c0_11] : memref<6x72x128xf32, #tpu.memory_space<vmem>>, vector<1x72x128xf32>
    %10 = vector.shape_cast %9 : vector<1x72x128xf32> to vector<72x128xf32>
    %cst_12 = arith.constant dense<0.000000e+00> : vector<8x128xf32>
    %11 = tpu.matmul %8, %10, %cst_12 {dimension_numbers = #tpu.dot_dimension_numbers<[1], [0], [0], [1], [0, 0, 1, 1], [], []>} : vector<8x72xf32>, vector<72x128xf32>, vector<8x128xf32> -> vector<8x128xf32>
    %12 = arith.addf %7, %11 : vector<8x128xf32>
    %13 = vector.extract_strided_slice %1 {offsets = [1, 0], sizes = [8, 72], strides = [1, 1]} : vector<9x72xf32> to vector<8x72xf32>
    %c2 = arith.constant 2 : index
    %c0_13 = arith.constant 0 : index
    %c0_14 = arith.constant 0 : index
    %14 = vector.load %arg2[%c2, %c0_13, %c0_14] : memref<6x72x128xf32, #tpu.memory_space<vmem>>, vector<1x72x128xf32>
    %15 = vector.shape_cast %14 : vector<1x72x128xf32> to vector<72x128xf32>
    %cst_15 = arith.constant dense<0.000000e+00> : vector<8x128xf32>
    %16 = tpu.matmul %13, %15, %cst_15 {dimension_numbers = #tpu.dot_dimension_numbers<[1], [0], [0], [1], [0, 0, 1, 1], [], []>} : vector<8x72xf32>, vector<72x128xf32>, vector<8x128xf32> -> vector<8x128xf32>
    %17 = arith.addf %12, %16 : vector<8x128xf32>
    %c0_16 = arith.constant 0 : index
    %c0_17 = arith.constant 0 : index
    %18 = vector.load %arg3[%c0_16, %c0_17] : memref<1x128xf32, #tpu.memory_space<vmem>>, vector<1x128xf32>
    %19 = vector.broadcast %18 : vector<1x128xf32> to vector<8x128xf32>
    %20 = arith.mulf %17, %19 : vector<8x128xf32>
    %c0_18 = arith.constant 0 : index
    %c0_19 = arith.constant 0 : index
    %21 = vector.load %arg4[%c0_18, %c0_19] : memref<1x128xf32, #tpu.memory_space<vmem>>, vector<1x128xf32>
    %22 = vector.broadcast %21 : vector<1x128xf32> to vector<8x128xf32>
    %23 = arith.addf %20, %22 : vector<8x128xf32>
    %cst_20 = arith.constant 0.000000e+00 : f32
    %24 = vector.broadcast %cst_20 : f32 to vector<8x128xf32>
    %25 = arith.maximumf %23, %24 : vector<8x128xf32>
    %26 = vector.extract_strided_slice %1 {offsets = [0, 0], sizes = [8, 72], strides = [1, 1]} : vector<9x72xf32> to vector<8x72xf32>
    %c3 = arith.constant 3 : index
    %c0_21 = arith.constant 0 : index
    %c0_22 = arith.constant 0 : index
    %27 = vector.load %arg2[%c3, %c0_21, %c0_22] : memref<6x72x128xf32, #tpu.memory_space<vmem>>, vector<1x72x128xf32>
    %28 = vector.shape_cast %27 : vector<1x72x128xf32> to vector<72x128xf32>
    %cst_23 = arith.constant dense<0.000000e+00> : vector<8x128xf32>
    %29 = tpu.matmul %26, %28, %cst_23 {dimension_numbers = #tpu.dot_dimension_numbers<[1], [0], [0], [1], [0, 0, 1, 1], [], []>} : vector<8x72xf32>, vector<72x128xf32>, vector<8x128xf32> -> vector<8x128xf32>
    %30 = vector.extract_strided_slice %3 {offsets = [0, 0], sizes = [8, 72], strides = [1, 1]} : vector<9x72xf32> to vector<8x72xf32>
    %c4 = arith.constant 4 : index
    %c0_24 = arith.constant 0 : index
    %c0_25 = arith.constant 0 : index
    %31 = vector.load %arg2[%c4, %c0_24, %c0_25] : memref<6x72x128xf32, #tpu.memory_space<vmem>>, vector<1x72x128xf32>
    %32 = vector.shape_cast %31 : vector<1x72x128xf32> to vector<72x128xf32>
    %cst_26 = arith.constant dense<0.000000e+00> : vector<8x128xf32>
    %33 = tpu.matmul %30, %32, %cst_26 {dimension_numbers = #tpu.dot_dimension_numbers<[1], [0], [0], [1], [0, 0, 1, 1], [], []>} : vector<8x72xf32>, vector<72x128xf32>, vector<8x128xf32> -> vector<8x128xf32>
    %34 = arith.addf %29, %33 : vector<8x128xf32>
    %35 = vector.extract_strided_slice %1 {offsets = [1, 0], sizes = [8, 72], strides = [1, 1]} : vector<9x72xf32> to vector<8x72xf32>
    %c5 = arith.constant 5 : index
    %c0_27 = arith.constant 0 : index
    %c0_28 = arith.constant 0 : index
    %36 = vector.load %arg2[%c5, %c0_27, %c0_28] : memref<6x72x128xf32, #tpu.memory_space<vmem>>, vector<1x72x128xf32>
    %37 = vector.shape_cast %36 : vector<1x72x128xf32> to vector<72x128xf32>
    %cst_29 = arith.constant dense<0.000000e+00> : vector<8x128xf32>
    %38 = tpu.matmul %35, %37, %cst_29 {dimension_numbers = #tpu.dot_dimension_numbers<[1], [0], [0], [1], [0, 0, 1, 1], [], []>} : vector<8x72xf32>, vector<72x128xf32>, vector<8x128xf32> -> vector<8x128xf32>
    %39 = arith.addf %34, %38 : vector<8x128xf32>
    %c0_30 = arith.constant 0 : index
    %c0_31 = arith.constant 0 : index
    %40 = vector.load %arg3[%c0_30, %c0_31] : memref<1x128xf32, #tpu.memory_space<vmem>>, vector<1x128xf32>
    %41 = vector.broadcast %40 : vector<1x128xf32> to vector<8x128xf32>
    %42 = arith.mulf %39, %41 : vector<8x128xf32>
    %c0_32 = arith.constant 0 : index
    %c0_33 = arith.constant 0 : index
    %43 = vector.load %arg4[%c0_32, %c0_33] : memref<1x128xf32, #tpu.memory_space<vmem>>, vector<1x128xf32>
    %44 = vector.broadcast %43 : vector<1x128xf32> to vector<8x128xf32>
    %45 = arith.addf %42, %44 : vector<8x128xf32>
    %cst_34 = arith.constant 0.000000e+00 : f32
    %46 = vector.broadcast %cst_34 : f32 to vector<8x128xf32>
    %47 = arith.maximumf %45, %46 : vector<8x128xf32>
    %48 = arith.maximumf %25, %47 : vector<8x128xf32>
    %49 = vector.extract_strided_slice %3 {offsets = [0, 0], sizes = [8, 72], strides = [1, 1]} : vector<9x72xf32> to vector<8x72xf32>
    %c0_35 = arith.constant 0 : index
    %c0_36 = arith.constant 0 : index
    %c0_37 = arith.constant 0 : index
    %50 = vector.load %arg2[%c0_35, %c0_36, %c0_37] : memref<6x72x128xf32, #tpu.memory_space<vmem>>, vector<1x72x128xf32>
    %51 = vector.shape_cast %50 : vector<1x72x128xf32> to vector<72x128xf32>
    %cst_38 = arith.constant dense<0.000000e+00> : vector<8x128xf32>
    %52 = tpu.matmul %49, %51, %cst_38 {dimension_numbers = #tpu.dot_dimension_numbers<[1], [0], [0], [1], [0, 0, 1, 1], [], []>} : vector<8x72xf32>, vector<72x128xf32>, vector<8x128xf32> -> vector<8x128xf32>
    %53 = vector.extract_strided_slice %1 {offsets = [1, 0], sizes = [8, 72], strides = [1, 1]} : vector<9x72xf32> to vector<8x72xf32>
    %c1_39 = arith.constant 1 : index
    %c0_40 = arith.constant 0 : index
    %c0_41 = arith.constant 0 : index
    %54 = vector.load %arg2[%c1_39, %c0_40, %c0_41] : memref<6x72x128xf32, #tpu.memory_space<vmem>>, vector<1x72x128xf32>
    %55 = vector.shape_cast %54 : vector<1x72x128xf32> to vector<72x128xf32>
    %cst_42 = arith.constant dense<0.000000e+00> : vector<8x128xf32>
    %56 = tpu.matmul %53, %55, %cst_42 {dimension_numbers = #tpu.dot_dimension_numbers<[1], [0], [0], [1], [0, 0, 1, 1], [], []>} : vector<8x72xf32>, vector<72x128xf32>, vector<8x128xf32> -> vector<8x128xf32>
    %57 = arith.addf %52, %56 : vector<8x128xf32>
    %58 = vector.extract_strided_slice %3 {offsets = [1, 0], sizes = [8, 72], strides = [1, 1]} : vector<9x72xf32> to vector<8x72xf32>
    %c2_43 = arith.constant 2 : index
    %c0_44 = arith.constant 0 : index
    %c0_45 = arith.constant 0 : index
    %59 = vector.load %arg2[%c2_43, %c0_44, %c0_45] : memref<6x72x128xf32, #tpu.memory_space<vmem>>, vector<1x72x128xf32>
    %60 = vector.shape_cast %59 : vector<1x72x128xf32> to vector<72x128xf32>
    %cst_46 = arith.constant dense<0.000000e+00> : vector<8x128xf32>
    %61 = tpu.matmul %58, %60, %cst_46 {dimension_numbers = #tpu.dot_dimension_numbers<[1], [0], [0], [1], [0, 0, 1, 1], [], []>} : vector<8x72xf32>, vector<72x128xf32>, vector<8x128xf32> -> vector<8x128xf32>
    %62 = arith.addf %57, %61 : vector<8x128xf32>
    %c0_47 = arith.constant 0 : index
    %c0_48 = arith.constant 0 : index
    %63 = vector.load %arg3[%c0_47, %c0_48] : memref<1x128xf32, #tpu.memory_space<vmem>>, vector<1x128xf32>
    %64 = vector.broadcast %63 : vector<1x128xf32> to vector<8x128xf32>
    %65 = arith.mulf %62, %64 : vector<8x128xf32>
    %c0_49 = arith.constant 0 : index
    %c0_50 = arith.constant 0 : index
    %66 = vector.load %arg4[%c0_49, %c0_50] : memref<1x128xf32, #tpu.memory_space<vmem>>, vector<1x128xf32>
    %67 = vector.broadcast %66 : vector<1x128xf32> to vector<8x128xf32>
    %68 = arith.addf %65, %67 : vector<8x128xf32>
    %cst_51 = arith.constant 0.000000e+00 : f32
    %69 = vector.broadcast %cst_51 : f32 to vector<8x128xf32>
    %70 = arith.maximumf %68, %69 : vector<8x128xf32>
    %71 = arith.maximumf %48, %70 : vector<8x128xf32>
    %72 = vector.extract_strided_slice %3 {offsets = [0, 0], sizes = [8, 72], strides = [1, 1]} : vector<9x72xf32> to vector<8x72xf32>
    %c3_52 = arith.constant 3 : index
    %c0_53 = arith.constant 0 : index
    %c0_54 = arith.constant 0 : index
    %73 = vector.load %arg2[%c3_52, %c0_53, %c0_54] : memref<6x72x128xf32, #tpu.memory_space<vmem>>, vector<1x72x128xf32>
    %74 = vector.shape_cast %73 : vector<1x72x128xf32> to vector<72x128xf32>
    %cst_55 = arith.constant dense<0.000000e+00> : vector<8x128xf32>
    %75 = tpu.matmul %72, %74, %cst_55 {dimension_numbers = #tpu.dot_dimension_numbers<[1], [0], [0], [1], [0, 0, 1, 1], [], []>} : vector<8x72xf32>, vector<72x128xf32>, vector<8x128xf32> -> vector<8x128xf32>
    %76 = vector.extract_strided_slice %1 {offsets = [1, 0], sizes = [8, 72], strides = [1, 1]} : vector<9x72xf32> to vector<8x72xf32>
    %c4_56 = arith.constant 4 : index
    %c0_57 = arith.constant 0 : index
    %c0_58 = arith.constant 0 : index
    %77 = vector.load %arg2[%c4_56, %c0_57, %c0_58] : memref<6x72x128xf32, #tpu.memory_space<vmem>>, vector<1x72x128xf32>
    %78 = vector.shape_cast %77 : vector<1x72x128xf32> to vector<72x128xf32>
    %cst_59 = arith.constant dense<0.000000e+00> : vector<8x128xf32>
    %79 = tpu.matmul %76, %78, %cst_59 {dimension_numbers = #tpu.dot_dimension_numbers<[1], [0], [0], [1], [0, 0, 1, 1], [], []>} : vector<8x72xf32>, vector<72x128xf32>, vector<8x128xf32> -> vector<8x128xf32>
    %80 = arith.addf %75, %79 : vector<8x128xf32>
    %81 = vector.extract_strided_slice %3 {offsets = [1, 0], sizes = [8, 72], strides = [1, 1]} : vector<9x72xf32> to vector<8x72xf32>
    %c5_60 = arith.constant 5 : index
    %c0_61 = arith.constant 0 : index
    %c0_62 = arith.constant 0 : index
    %82 = vector.load %arg2[%c5_60, %c0_61, %c0_62] : memref<6x72x128xf32, #tpu.memory_space<vmem>>, vector<1x72x128xf32>
    %83 = vector.shape_cast %82 : vector<1x72x128xf32> to vector<72x128xf32>
    %cst_63 = arith.constant dense<0.000000e+00> : vector<8x128xf32>
    %84 = tpu.matmul %81, %83, %cst_63 {dimension_numbers = #tpu.dot_dimension_numbers<[1], [0], [0], [1], [0, 0, 1, 1], [], []>} : vector<8x72xf32>, vector<72x128xf32>, vector<8x128xf32> -> vector<8x128xf32>
    %85 = arith.addf %80, %84 : vector<8x128xf32>
    %c0_64 = arith.constant 0 : index
    %c0_65 = arith.constant 0 : index
    %86 = vector.load %arg3[%c0_64, %c0_65] : memref<1x128xf32, #tpu.memory_space<vmem>>, vector<1x128xf32>
    %87 = vector.broadcast %86 : vector<1x128xf32> to vector<8x128xf32>
    %88 = arith.mulf %85, %87 : vector<8x128xf32>
    %c0_66 = arith.constant 0 : index
    %c0_67 = arith.constant 0 : index
    %89 = vector.load %arg4[%c0_66, %c0_67] : memref<1x128xf32, #tpu.memory_space<vmem>>, vector<1x128xf32>
    %90 = vector.broadcast %89 : vector<1x128xf32> to vector<8x128xf32>
    %91 = arith.addf %88, %90 : vector<8x128xf32>
    %cst_68 = arith.constant 0.000000e+00 : f32
    %92 = vector.broadcast %cst_68 : f32 to vector<8x128xf32>
    %93 = arith.maximumf %91, %92 : vector<8x128xf32>
    %94 = arith.maximumf %71, %93 : vector<8x128xf32>
    %c0_69 = arith.constant 0 : index
    %c0_70 = arith.constant 0 : index
    %c0_71 = arith.constant 0 : index
    %95 = vector.load %arg5[%c0_69, %c0_70, %c0_71] : memref<1x8x128xf32, #tpu.memory_space<vmem>>, vector<1x8x128xf32>
    %96 = vector.shape_cast %95 : vector<1x8x128xf32> to vector<8x128xf32>
    %97 = vector.shape_cast %94 : vector<8x128xf32> to vector<1x8x128xf32>
    tpu.vector_store %arg5[%c0_69, %c0_70, %c0_71], %97 {strides = array<i32>} : memref<1x8x128xf32, #tpu.memory_space<vmem>>, vector<1x8x128xf32>,
    return
  }
  func.func @transform_0(%arg0: i32) -> (i32, i32, i32, i32) {
    %c0_i32 = arith.constant 0 : i32
    %c0_i32_0 = arith.constant 0 : i32
    %c0_i32_1 = arith.constant 0 : i32
    %c0_i32_2 = arith.constant 0 : i32
    return %arg0, %c0_i32, %c0_i32_0, %c0_i32_1 : i32, i32, i32, i32
  }
  func.func @transform_1(%arg0: i32) -> (i32, i32, i32) {
    %c0_i32 = arith.constant 0 : i32
    %c0_i32_0 = arith.constant 0 : i32
    %c0_i32_1 = arith.constant 0 : i32
    %c0_i32_2 = arith.constant 0 : i32
    return %c0_i32, %c0_i32_0, %c0_i32_1 : i32, i32, i32
  }
  func.func @transform_2(%arg0: i32) -> (i32, i32) {
    %c0_i32 = arith.constant 0 : i32
    %c0_i32_0 = arith.constant 0 : i32
    %c0_i32_1 = arith.constant 0 : i32
    return %c0_i32, %c0_i32_0 : i32, i32
  }
  func.func @transform_3(%arg0: i32) -> (i32, i32) {
    %c0_i32 = arith.constant 0 : i32
    %c0_i32_0 = arith.constant 0 : i32
    %c0_i32_1 = arith.constant 0 : i32
    return %c0_i32, %c0_i32_0 : i32, i32
  }
  func.func @transform_4(%arg0: i32) -> (i32, i32, i32) {
    %c0_i32 = arith.constant 0 : i32
    %c0_i32_0 = arith.constant 0 : i32
    %c0_i32_1 = arith.constant 0 : i32
    return %arg0, %c0_i32, %c0_i32_0 : i32, i32, i32
  }
}

module attributes {stable_mosaic.version = 11 : i64} {
  func.func @conv_block_kernel(%arg0: i32, %arg1: memref<1x2x5x160xf32, #tpu.memory_space<vmem>>, %arg2: memref<6x160x64xf32, #tpu.memory_space<vmem>>, %arg3: memref<1x64xf32, #tpu.memory_space<vmem>>, %arg4: memref<1x64xf32, #tpu.memory_space<vmem>>, %arg5: memref<1x4x64xf32, #tpu.memory_space<vmem>>) attributes {dimension_semantics = [#tpu.dimension_semantics<parallel>], iteration_bounds = array<i64: 2>, scalar_prefetch = 0 : i64, scratch_operands = 0 : i64, tpu.core_type = #tpu.core_type<tc>, window_params = [{transform_indices = @transform_0, window_bounds = array<i64: 1, 2, 5, 160>}, {pipeline_mode = #tpu.pipeline_mode<synchronous>, transform_indices = @transform_1, window_bounds = array<i64: 6, 160, 64>}, {pipeline_mode = #tpu.pipeline_mode<synchronous>, transform_indices = @transform_2, window_bounds = array<i64: 1, 64>}, {pipeline_mode = #tpu.pipeline_mode<synchronous>, transform_indices = @transform_3, window_bounds = array<i64: 1, 64>}, {transform_indices = @transform_4, window_bounds = array<i64: 1, 4, 64>}]} {
    %c0 = arith.constant 0 : index
    %c0_0 = arith.constant 0 : index
    %c0_1 = arith.constant 0 : index
    %c0_2 = arith.constant 0 : index
    %0 = vector.load %arg1[%c0, %c0_0, %c0_1, %c0_2] : memref<1x2x5x160xf32, #tpu.memory_space<vmem>>, vector<1x1x5x160xf32>
    %1 = vector.shape_cast %0 : vector<1x1x5x160xf32> to vector<5x160xf32>
    %c0_3 = arith.constant 0 : index
    %c1 = arith.constant 1 : index
    %c0_4 = arith.constant 0 : index
    %c0_5 = arith.constant 0 : index
    %2 = vector.load %arg1[%c0_3, %c1, %c0_4, %c0_5] : memref<1x2x5x160xf32, #tpu.memory_space<vmem>>, vector<1x1x5x160xf32>
    %3 = vector.shape_cast %2 : vector<1x1x5x160xf32> to vector<5x160xf32>
    %4 = vector.extract_strided_slice %1 {offsets = [0, 0], sizes = [4, 160], strides = [1, 1]} : vector<5x160xf32> to vector<4x160xf32>
    %c0_6 = arith.constant 0 : index
    %c0_7 = arith.constant 0 : index
    %c0_8 = arith.constant 0 : index
    %5 = vector.load %arg2[%c0_6, %c0_7, %c0_8] : memref<6x160x64xf32, #tpu.memory_space<vmem>>, vector<1x160x64xf32>
    %6 = vector.shape_cast %5 : vector<1x160x64xf32> to vector<160x64xf32>
    %cst = arith.constant dense<0.000000e+00> : vector<4x64xf32>
    %7 = tpu.matmul %4, %6, %cst {dimension_numbers = #tpu.dot_dimension_numbers<[1], [0], [0], [1], [0, 0, 1, 1], [], []>} : vector<4x160xf32>, vector<160x64xf32>, vector<4x64xf32> -> vector<4x64xf32>
    %8 = vector.extract_strided_slice %3 {offsets = [0, 0], sizes = [4, 160], strides = [1, 1]} : vector<5x160xf32> to vector<4x160xf32>
    %c1_9 = arith.constant 1 : index
    %c0_10 = arith.constant 0 : index
    %c0_11 = arith.constant 0 : index
    %9 = vector.load %arg2[%c1_9, %c0_10, %c0_11] : memref<6x160x64xf32, #tpu.memory_space<vmem>>, vector<1x160x64xf32>
    %10 = vector.shape_cast %9 : vector<1x160x64xf32> to vector<160x64xf32>
    %cst_12 = arith.constant dense<0.000000e+00> : vector<4x64xf32>
    %11 = tpu.matmul %8, %10, %cst_12 {dimension_numbers = #tpu.dot_dimension_numbers<[1], [0], [0], [1], [0, 0, 1, 1], [], []>} : vector<4x160xf32>, vector<160x64xf32>, vector<4x64xf32> -> vector<4x64xf32>
    %12 = arith.addf %7, %11 : vector<4x64xf32>
    %13 = vector.extract_strided_slice %1 {offsets = [1, 0], sizes = [4, 160], strides = [1, 1]} : vector<5x160xf32> to vector<4x160xf32>
    %c2 = arith.constant 2 : index
    %c0_13 = arith.constant 0 : index
    %c0_14 = arith.constant 0 : index
    %14 = vector.load %arg2[%c2, %c0_13, %c0_14] : memref<6x160x64xf32, #tpu.memory_space<vmem>>, vector<1x160x64xf32>
    %15 = vector.shape_cast %14 : vector<1x160x64xf32> to vector<160x64xf32>
    %cst_15 = arith.constant dense<0.000000e+00> : vector<4x64xf32>
    %16 = tpu.matmul %13, %15, %cst_15 {dimension_numbers = #tpu.dot_dimension_numbers<[1], [0], [0], [1], [0, 0, 1, 1], [], []>} : vector<4x160xf32>, vector<160x64xf32>, vector<4x64xf32> -> vector<4x64xf32>
    %17 = arith.addf %12, %16 : vector<4x64xf32>
    %c0_16 = arith.constant 0 : index
    %c0_17 = arith.constant 0 : index
    %18 = vector.load %arg3[%c0_16, %c0_17] : memref<1x64xf32, #tpu.memory_space<vmem>>, vector<1x64xf32>
    %19 = vector.broadcast %18 : vector<1x64xf32> to vector<4x64xf32>
    %20 = arith.mulf %17, %19 : vector<4x64xf32>
    %c0_18 = arith.constant 0 : index
    %c0_19 = arith.constant 0 : index
    %21 = vector.load %arg4[%c0_18, %c0_19] : memref<1x64xf32, #tpu.memory_space<vmem>>, vector<1x64xf32>
    %22 = vector.broadcast %21 : vector<1x64xf32> to vector<4x64xf32>
    %23 = arith.addf %20, %22 : vector<4x64xf32>
    %cst_20 = arith.constant 0.000000e+00 : f32
    %24 = vector.broadcast %cst_20 : f32 to vector<4x64xf32>
    %25 = arith.maximumf %23, %24 : vector<4x64xf32>
    %26 = vector.extract_strided_slice %1 {offsets = [0, 0], sizes = [4, 160], strides = [1, 1]} : vector<5x160xf32> to vector<4x160xf32>
    %c3 = arith.constant 3 : index
    %c0_21 = arith.constant 0 : index
    %c0_22 = arith.constant 0 : index
    %27 = vector.load %arg2[%c3, %c0_21, %c0_22] : memref<6x160x64xf32, #tpu.memory_space<vmem>>, vector<1x160x64xf32>
    %28 = vector.shape_cast %27 : vector<1x160x64xf32> to vector<160x64xf32>
    %cst_23 = arith.constant dense<0.000000e+00> : vector<4x64xf32>
    %29 = tpu.matmul %26, %28, %cst_23 {dimension_numbers = #tpu.dot_dimension_numbers<[1], [0], [0], [1], [0, 0, 1, 1], [], []>} : vector<4x160xf32>, vector<160x64xf32>, vector<4x64xf32> -> vector<4x64xf32>
    %30 = vector.extract_strided_slice %3 {offsets = [0, 0], sizes = [4, 160], strides = [1, 1]} : vector<5x160xf32> to vector<4x160xf32>
    %c4 = arith.constant 4 : index
    %c0_24 = arith.constant 0 : index
    %c0_25 = arith.constant 0 : index
    %31 = vector.load %arg2[%c4, %c0_24, %c0_25] : memref<6x160x64xf32, #tpu.memory_space<vmem>>, vector<1x160x64xf32>
    %32 = vector.shape_cast %31 : vector<1x160x64xf32> to vector<160x64xf32>
    %cst_26 = arith.constant dense<0.000000e+00> : vector<4x64xf32>
    %33 = tpu.matmul %30, %32, %cst_26 {dimension_numbers = #tpu.dot_dimension_numbers<[1], [0], [0], [1], [0, 0, 1, 1], [], []>} : vector<4x160xf32>, vector<160x64xf32>, vector<4x64xf32> -> vector<4x64xf32>
    %34 = arith.addf %29, %33 : vector<4x64xf32>
    %35 = vector.extract_strided_slice %1 {offsets = [1, 0], sizes = [4, 160], strides = [1, 1]} : vector<5x160xf32> to vector<4x160xf32>
    %c5 = arith.constant 5 : index
    %c0_27 = arith.constant 0 : index
    %c0_28 = arith.constant 0 : index
    %36 = vector.load %arg2[%c5, %c0_27, %c0_28] : memref<6x160x64xf32, #tpu.memory_space<vmem>>, vector<1x160x64xf32>
    %37 = vector.shape_cast %36 : vector<1x160x64xf32> to vector<160x64xf32>
    %cst_29 = arith.constant dense<0.000000e+00> : vector<4x64xf32>
    %38 = tpu.matmul %35, %37, %cst_29 {dimension_numbers = #tpu.dot_dimension_numbers<[1], [0], [0], [1], [0, 0, 1, 1], [], []>} : vector<4x160xf32>, vector<160x64xf32>, vector<4x64xf32> -> vector<4x64xf32>
    %39 = arith.addf %34, %38 : vector<4x64xf32>
    %c0_30 = arith.constant 0 : index
    %c0_31 = arith.constant 0 : index
    %40 = vector.load %arg3[%c0_30, %c0_31] : memref<1x64xf32, #tpu.memory_space<vmem>>, vector<1x64xf32>
    %41 = vector.broadcast %40 : vector<1x64xf32> to vector<4x64xf32>
    %42 = arith.mulf %39, %41 : vector<4x64xf32>
    %c0_32 = arith.constant 0 : index
    %c0_33 = arith.constant 0 : index
    %43 = vector.load %arg4[%c0_32, %c0_33] : memref<1x64xf32, #tpu.memory_space<vmem>>, vector<1x64xf32>
    %44 = vector.broadcast %43 : vector<1x64xf32> to vector<4x64xf32>
    %45 = arith.addf %42, %44 : vector<4x64xf32>
    %cst_34 = arith.constant 0.000000e+00 : f32
    %46 = vector.broadcast %cst_34 : f32 to vector<4x64xf32>
    %47 = arith.maximumf %45, %46 : vector<4x64xf32>
    %48 = arith.maximumf %25, %47 : vector<4x64xf32>
    %49 = vector.extract_strided_slice %3 {offsets = [0, 0], sizes = [4, 160], strides = [1, 1]} : vector<5x160xf32> to vector<4x160xf32>
    %c0_35 = arith.constant 0 : index
    %c0_36 = arith.constant 0 : index
    %c0_37 = arith.constant 0 : index
    %50 = vector.load %arg2[%c0_35, %c0_36, %c0_37] : memref<6x160x64xf32, #tpu.memory_space<vmem>>, vector<1x160x64xf32>
    %51 = vector.shape_cast %50 : vector<1x160x64xf32> to vector<160x64xf32>
    %cst_38 = arith.constant dense<0.000000e+00> : vector<4x64xf32>
    %52 = tpu.matmul %49, %51, %cst_38 {dimension_numbers = #tpu.dot_dimension_numbers<[1], [0], [0], [1], [0, 0, 1, 1], [], []>} : vector<4x160xf32>, vector<160x64xf32>, vector<4x64xf32> -> vector<4x64xf32>
    %53 = vector.extract_strided_slice %1 {offsets = [1, 0], sizes = [4, 160], strides = [1, 1]} : vector<5x160xf32> to vector<4x160xf32>
    %c1_39 = arith.constant 1 : index
    %c0_40 = arith.constant 0 : index
    %c0_41 = arith.constant 0 : index
    %54 = vector.load %arg2[%c1_39, %c0_40, %c0_41] : memref<6x160x64xf32, #tpu.memory_space<vmem>>, vector<1x160x64xf32>
    %55 = vector.shape_cast %54 : vector<1x160x64xf32> to vector<160x64xf32>
    %cst_42 = arith.constant dense<0.000000e+00> : vector<4x64xf32>
    %56 = tpu.matmul %53, %55, %cst_42 {dimension_numbers = #tpu.dot_dimension_numbers<[1], [0], [0], [1], [0, 0, 1, 1], [], []>} : vector<4x160xf32>, vector<160x64xf32>, vector<4x64xf32> -> vector<4x64xf32>
    %57 = arith.addf %52, %56 : vector<4x64xf32>
    %58 = vector.extract_strided_slice %3 {offsets = [1, 0], sizes = [4, 160], strides = [1, 1]} : vector<5x160xf32> to vector<4x160xf32>
    %c2_43 = arith.constant 2 : index
    %c0_44 = arith.constant 0 : index
    %c0_45 = arith.constant 0 : index
    %59 = vector.load %arg2[%c2_43, %c0_44, %c0_45] : memref<6x160x64xf32, #tpu.memory_space<vmem>>, vector<1x160x64xf32>
    %60 = vector.shape_cast %59 : vector<1x160x64xf32> to vector<160x64xf32>
    %cst_46 = arith.constant dense<0.000000e+00> : vector<4x64xf32>
    %61 = tpu.matmul %58, %60, %cst_46 {dimension_numbers = #tpu.dot_dimension_numbers<[1], [0], [0], [1], [0, 0, 1, 1], [], []>} : vector<4x160xf32>, vector<160x64xf32>, vector<4x64xf32> -> vector<4x64xf32>
    %62 = arith.addf %57, %61 : vector<4x64xf32>
    %c0_47 = arith.constant 0 : index
    %c0_48 = arith.constant 0 : index
    %63 = vector.load %arg3[%c0_47, %c0_48] : memref<1x64xf32, #tpu.memory_space<vmem>>, vector<1x64xf32>
    %64 = vector.broadcast %63 : vector<1x64xf32> to vector<4x64xf32>
    %65 = arith.mulf %62, %64 : vector<4x64xf32>
    %c0_49 = arith.constant 0 : index
    %c0_50 = arith.constant 0 : index
    %66 = vector.load %arg4[%c0_49, %c0_50] : memref<1x64xf32, #tpu.memory_space<vmem>>, vector<1x64xf32>
    %67 = vector.broadcast %66 : vector<1x64xf32> to vector<4x64xf32>
    %68 = arith.addf %65, %67 : vector<4x64xf32>
    %cst_51 = arith.constant 0.000000e+00 : f32
    %69 = vector.broadcast %cst_51 : f32 to vector<4x64xf32>
    %70 = arith.maximumf %68, %69 : vector<4x64xf32>
    %71 = arith.maximumf %48, %70 : vector<4x64xf32>
    %72 = vector.extract_strided_slice %3 {offsets = [0, 0], sizes = [4, 160], strides = [1, 1]} : vector<5x160xf32> to vector<4x160xf32>
    %c3_52 = arith.constant 3 : index
    %c0_53 = arith.constant 0 : index
    %c0_54 = arith.constant 0 : index
    %73 = vector.load %arg2[%c3_52, %c0_53, %c0_54] : memref<6x160x64xf32, #tpu.memory_space<vmem>>, vector<1x160x64xf32>
    %74 = vector.shape_cast %73 : vector<1x160x64xf32> to vector<160x64xf32>
    %cst_55 = arith.constant dense<0.000000e+00> : vector<4x64xf32>
    %75 = tpu.matmul %72, %74, %cst_55 {dimension_numbers = #tpu.dot_dimension_numbers<[1], [0], [0], [1], [0, 0, 1, 1], [], []>} : vector<4x160xf32>, vector<160x64xf32>, vector<4x64xf32> -> vector<4x64xf32>
    %76 = vector.extract_strided_slice %1 {offsets = [1, 0], sizes = [4, 160], strides = [1, 1]} : vector<5x160xf32> to vector<4x160xf32>
    %c4_56 = arith.constant 4 : index
    %c0_57 = arith.constant 0 : index
    %c0_58 = arith.constant 0 : index
    %77 = vector.load %arg2[%c4_56, %c0_57, %c0_58] : memref<6x160x64xf32, #tpu.memory_space<vmem>>, vector<1x160x64xf32>
    %78 = vector.shape_cast %77 : vector<1x160x64xf32> to vector<160x64xf32>
    %cst_59 = arith.constant dense<0.000000e+00> : vector<4x64xf32>
    %79 = tpu.matmul %76, %78, %cst_59 {dimension_numbers = #tpu.dot_dimension_numbers<[1], [0], [0], [1], [0, 0, 1, 1], [], []>} : vector<4x160xf32>, vector<160x64xf32>, vector<4x64xf32> -> vector<4x64xf32>
    %80 = arith.addf %75, %79 : vector<4x64xf32>
    %81 = vector.extract_strided_slice %3 {offsets = [1, 0], sizes = [4, 160], strides = [1, 1]} : vector<5x160xf32> to vector<4x160xf32>
    %c5_60 = arith.constant 5 : index
    %c0_61 = arith.constant 0 : index
    %c0_62 = arith.constant 0 : index
    %82 = vector.load %arg2[%c5_60, %c0_61, %c0_62] : memref<6x160x64xf32, #tpu.memory_space<vmem>>, vector<1x160x64xf32>
    %83 = vector.shape_cast %82 : vector<1x160x64xf32> to vector<160x64xf32>
    %cst_63 = arith.constant dense<0.000000e+00> : vector<4x64xf32>
    %84 = tpu.matmul %81, %83, %cst_63 {dimension_numbers = #tpu.dot_dimension_numbers<[1], [0], [0], [1], [0, 0, 1, 1], [], []>} : vector<4x160xf32>, vector<160x64xf32>, vector<4x64xf32> -> vector<4x64xf32>
    %85 = arith.addf %80, %84 : vector<4x64xf32>
    %c0_64 = arith.constant 0 : index
    %c0_65 = arith.constant 0 : index
    %86 = vector.load %arg3[%c0_64, %c0_65] : memref<1x64xf32, #tpu.memory_space<vmem>>, vector<1x64xf32>
    %87 = vector.broadcast %86 : vector<1x64xf32> to vector<4x64xf32>
    %88 = arith.mulf %85, %87 : vector<4x64xf32>
    %c0_66 = arith.constant 0 : index
    %c0_67 = arith.constant 0 : index
    %89 = vector.load %arg4[%c0_66, %c0_67] : memref<1x64xf32, #tpu.memory_space<vmem>>, vector<1x64xf32>
    %90 = vector.broadcast %89 : vector<1x64xf32> to vector<4x64xf32>
    %91 = arith.addf %88, %90 : vector<4x64xf32>
    %cst_68 = arith.constant 0.000000e+00 : f32
    %92 = vector.broadcast %cst_68 : f32 to vector<4x64xf32>
    %93 = arith.maximumf %91, %92 : vector<4x64xf32>
    %94 = arith.maximumf %71, %93 : vector<4x64xf32>
    %c0_69 = arith.constant 0 : index
    %c0_70 = arith.constant 0 : index
    %c0_71 = arith.constant 0 : index
    %95 = vector.load %arg5[%c0_69, %c0_70, %c0_71] : memref<1x4x64xf32, #tpu.memory_space<vmem>>, vector<1x4x64xf32>
    %96 = vector.shape_cast %95 : vector<1x4x64xf32> to vector<4x64xf32>
    %97 = vector.shape_cast %94 : vector<4x64xf32> to vector<1x4x64xf32>
    tpu.vector_store %arg5[%c0_69, %c0_70, %c0_71], %97 {strides = array<i32>} : memref<1x4x64xf32, #tpu.memory_space<vmem>>, vector<1x4x64xf32>,
    return
  }
  func.func @transform_0(%arg0: i32) -> (i32, i32, i32, i32) {
    %c0_i32 = arith.constant 0 : i32
    %c0_i32_0 = arith.constant 0 : i32
    %c0_i32_1 = arith.constant 0 : i32
    %c0_i32_2 = arith.constant 0 : i32
    return %arg0, %c0_i32, %c0_i32_0, %c0_i32_1 : i32, i32, i32, i32
  }
  func.func @transform_1(%arg0: i32) -> (i32, i32, i32) {
    %c0_i32 = arith.constant 0 : i32
    %c0_i32_0 = arith.constant 0 : i32
    %c0_i32_1 = arith.constant 0 : i32
    %c0_i32_2 = arith.constant 0 : i32
    return %c0_i32, %c0_i32_0, %c0_i32_1 : i32, i32, i32
  }
  func.func @transform_2(%arg0: i32) -> (i32, i32) {
    %c0_i32 = arith.constant 0 : i32
    %c0_i32_0 = arith.constant 0 : i32
    %c0_i32_1 = arith.constant 0 : i32
    return %c0_i32, %c0_i32_0 : i32, i32
  }
  func.func @transform_3(%arg0: i32) -> (i32, i32) {
    %c0_i32 = arith.constant 0 : i32
    %c0_i32_0 = arith.constant 0 : i32
    %c0_i32_1 = arith.constant 0 : i32
    return %c0_i32, %c0_i32_0 : i32, i32
  }
  func.func @transform_4(%arg0: i32) -> (i32, i32, i32) {
    %c0_i32 = arith.constant 0 : i32
    %c0_i32_0 = arith.constant 0 : i32
    %c0_i32_1 = arith.constant 0 : i32
    return %arg0, %c0_i32, %c0_i32_0 : i32, i32, i32
  }
}

module attributes {stable_mosaic.version = 11 : i64} {
  func.func @head_kernel(%arg0: memref<8x64xf32, #tpu.memory_space<vmem>>, %arg1: memref<2x64x96xf32, #tpu.memory_space<vmem>>, %arg2: memref<2x32x96xf32, #tpu.memory_space<vmem>>, %arg3: memref<2x1x96xf32, #tpu.memory_space<vmem>>, %arg4: memref<2x1x96xf32, #tpu.memory_space<vmem>>, %arg5: memref<2x64x96xf32, #tpu.memory_space<vmem>>, %arg6: memref<2x32x96xf32, #tpu.memory_space<vmem>>, %arg7: memref<2x1x96xf32, #tpu.memory_space<vmem>>, %arg8: memref<2x1x96xf32, #tpu.memory_space<vmem>>, %arg9: memref<32x96xf32, #tpu.memory_space<vmem>>, %arg10: memref<1x96xf32, #tpu.memory_space<vmem>>, %arg11: memref<32x32xf32, #tpu.memory_space<vmem>>, %arg12: memref<1x32xf32, #tpu.memory_space<vmem>>, %arg13: memref<1x32xf32, #tpu.memory_space<vmem>>, %arg14: memref<1x32xf32, #tpu.memory_space<vmem>>, %arg15: memref<32x32xf32, #tpu.memory_space<vmem>>, %arg16: memref<1x32xf32, #tpu.memory_space<vmem>>, %arg17: memref<32x27xf32, #tpu.memory_space<vmem>>, %arg18: memref<1x27xf32, #tpu.memory_space<vmem>>, %arg19: memref<8x27xf32, #tpu.memory_space<vmem>>, %arg20: memref<8x64xf32, #tpu.memory_space<vmem>>, %arg21: memref<8x32xf32, #tpu.memory_space<vmem>>, %arg22: memref<8x32xf32, #tpu.memory_space<vmem>>) attributes {dimension_semantics = [], scalar_prefetch = 0 : i64, scratch_operands = 3 : i64, tpu.core_type = #tpu.core_type<tc>} {
    %c0 = arith.constant 0 : index
    %c0_0 = arith.constant 0 : index
    %0 = vector.load %arg0[%c0, %c0_0] : memref<8x64xf32, #tpu.memory_space<vmem>>, vector<8x64xf32>
    %c0_1 = arith.constant 0 : index
    %c0_2 = arith.constant 0 : index
    %c0_3 = arith.constant 0 : index
    %1 = vector.load %arg1[%c0_1, %c0_2, %c0_3] : memref<2x64x96xf32, #tpu.memory_space<vmem>>, vector<1x64x96xf32>
    %2 = vector.shape_cast %1 : vector<1x64x96xf32> to vector<64x96xf32>
    %cst = arith.constant dense<0.000000e+00> : vector<8x96xf32>
    %3 = tpu.matmul %0, %2, %cst {dimension_numbers = #tpu.dot_dimension_numbers<[1], [0], [0], [1], [0, 0, 1, 1], [], []>} : vector<8x64xf32>, vector<64x96xf32>, vector<8x96xf32> -> vector<8x96xf32>
    %c0_4 = arith.constant 0 : index
    %c0_5 = arith.constant 0 : index
    %c0_6 = arith.constant 0 : index
    %4 = vector.load %arg3[%c0_4, %c0_5, %c0_6] : memref<2x1x96xf32, #tpu.memory_space<vmem>>, vector<1x1x96xf32>
    %5 = vector.shape_cast %4 : vector<1x1x96xf32> to vector<1x96xf32>
    %6 = vector.broadcast %5 : vector<1x96xf32> to vector<8x96xf32>
    %7 = arith.addf %3, %6 : vector<8x96xf32>
    %c0_7 = arith.constant 0 : index
    %c0_8 = arith.constant 0 : index
    %c0_9 = arith.constant 0 : index
    %8 = vector.load %arg2[%c0_7, %c0_8, %c0_9] : memref<2x32x96xf32, #tpu.memory_space<vmem>>, vector<1x32x96xf32>
    %9 = vector.shape_cast %8 : vector<1x32x96xf32> to vector<32x96xf32>
    %c0_10 = arith.constant 0 : index
    %c0_11 = arith.constant 0 : index
    %c0_12 = arith.constant 0 : index
    %10 = vector.load %arg4[%c0_10, %c0_11, %c0_12] : memref<2x1x96xf32, #tpu.memory_space<vmem>>, vector<1x1x96xf32>
    %11 = vector.shape_cast %10 : vector<1x1x96xf32> to vector<1x96xf32>
    %cst_13 = arith.constant 0.000000e+00 : f32
    %12 = vector.broadcast %cst_13 : f32 to vector<2x32xf32>
    %13 = vector.extract_strided_slice %7 {offsets = [0, 0], sizes = [2, 96], strides = [1, 1]} : vector<8x96xf32> to vector<2x96xf32>
    %cst_14 = arith.constant dense<0.000000e+00> : vector<2x96xf32>
    %14 = tpu.matmul %12, %9, %cst_14 {dimension_numbers = #tpu.dot_dimension_numbers<[1], [0], [0], [1], [0, 0, 1, 1], [], []>} : vector<2x32xf32>, vector<32x96xf32>, vector<2x96xf32> -> vector<2x96xf32>
    %15 = vector.broadcast %11 : vector<1x96xf32> to vector<2x96xf32>
    %16 = arith.addf %14, %15 : vector<2x96xf32>
    %17 = vector.extract_strided_slice %13 {offsets = [0, 0], sizes = [2, 32], strides = [1, 1]} : vector<2x96xf32> to vector<2x32xf32>
    %18 = vector.extract_strided_slice %16 {offsets = [0, 0], sizes = [2, 32], strides = [1, 1]} : vector<2x96xf32> to vector<2x32xf32>
    %19 = arith.addf %17, %18 : vector<2x32xf32>
    %20 = arith.negf %19 : vector<2x32xf32>
    %21 = math.exp %20 : vector<2x32xf32>
    %cst_15 = arith.constant 1.000000e+00 : f32
    %22 = vector.broadcast %cst_15 : f32 to vector<2x32xf32>
    %23 = arith.addf %22, %21 : vector<2x32xf32>
    %24 = arith.divf %22, %23 : vector<2x32xf32>
    %25 = vector.extract_strided_slice %13 {offsets = [0, 32], sizes = [2, 32], strides = [1, 1]} : vector<2x96xf32> to vector<2x32xf32>
    %26 = vector.extract_strided_slice %16 {offsets = [0, 32], sizes = [2, 32], strides = [1, 1]} : vector<2x96xf32> to vector<2x32xf32>
    %27 = arith.addf %25, %26 : vector<2x32xf32>
    %28 = arith.negf %27 : vector<2x32xf32>
    %29 = math.exp %28 : vector<2x32xf32>
    %cst_16 = arith.constant 1.000000e+00 : f32
    %30 = vector.broadcast %cst_16 : f32 to vector<2x32xf32>
    %31 = arith.addf %30, %29 : vector<2x32xf32>
    %32 = arith.divf %30, %31 : vector<2x32xf32>
    %33 = vector.extract_strided_slice %13 {offsets = [0, 64], sizes = [2, 32], strides = [1, 1]} : vector<2x96xf32> to vector<2x32xf32>
    %34 = vector.extract_strided_slice %16 {offsets = [0, 64], sizes = [2, 32], strides = [1, 1]} : vector<2x96xf32> to vector<2x32xf32>
    %35 = arith.mulf %24, %34 : vector<2x32xf32>
    %36 = arith.addf %33, %35 : vector<2x32xf32>
    %37 = math.tanh %36 : vector<2x32xf32>
    %cst_17 = arith.constant 1.000000e+00 : f32
    %38 = vector.broadcast %cst_17 : f32 to vector<2x32xf32>
    %39 = arith.subf %38, %32 : vector<2x32xf32>
    %40 = arith.mulf %39, %37 : vector<2x32xf32>
    %41 = arith.mulf %32, %12 : vector<2x32xf32>
    %42 = arith.addf %40, %41 : vector<2x32xf32>
    %c0_18 = arith.constant 0 : index
    %c0_19 = arith.constant 0 : index
    %43 = vector.load %arg20[%c0_18, %c0_19] : memref<8x64xf32, #tpu.memory_space<vmem>>, vector<2x32xf32>
    tpu.vector_store %arg20[%c0_18, %c0_19], %42 {strides = array<i32>} : memref<8x64xf32, #tpu.memory_space<vmem>>, vector<2x32xf32>,
    %44 = vector.extract_strided_slice %7 {offsets = [2, 0], sizes = [2, 96], strides = [1, 1]} : vector<8x96xf32> to vector<2x96xf32>
    %cst_20 = arith.constant dense<0.000000e+00> : vector<2x96xf32>
    %45 = tpu.matmul %42, %9, %cst_20 {dimension_numbers = #tpu.dot_dimension_numbers<[1], [0], [0], [1], [0, 0, 1, 1], [], []>} : vector<2x32xf32>, vector<32x96xf32>, vector<2x96xf32> -> vector<2x96xf32>
    %46 = vector.broadcast %11 : vector<1x96xf32> to vector<2x96xf32>
    %47 = arith.addf %45, %46 : vector<2x96xf32>
    %48 = vector.extract_strided_slice %44 {offsets = [0, 0], sizes = [2, 32], strides = [1, 1]} : vector<2x96xf32> to vector<2x32xf32>
    %49 = vector.extract_strided_slice %47 {offsets = [0, 0], sizes = [2, 32], strides = [1, 1]} : vector<2x96xf32> to vector<2x32xf32>
    %50 = arith.addf %48, %49 : vector<2x32xf32>
    %51 = arith.negf %50 : vector<2x32xf32>
    %52 = math.exp %51 : vector<2x32xf32>
    %cst_21 = arith.constant 1.000000e+00 : f32
    %53 = vector.broadcast %cst_21 : f32 to vector<2x32xf32>
    %54 = arith.addf %53, %52 : vector<2x32xf32>
    %55 = arith.divf %53, %54 : vector<2x32xf32>
    %56 = vector.extract_strided_slice %44 {offsets = [0, 32], sizes = [2, 32], strides = [1, 1]} : vector<2x96xf32> to vector<2x32xf32>
    %57 = vector.extract_strided_slice %47 {offsets = [0, 32], sizes = [2, 32], strides = [1, 1]} : vector<2x96xf32> to vector<2x32xf32>
    %58 = arith.addf %56, %57 : vector<2x32xf32>
    %59 = arith.negf %58 : vector<2x32xf32>
    %60 = math.exp %59 : vector<2x32xf32>
    %cst_22 = arith.constant 1.000000e+00 : f32
    %61 = vector.broadcast %cst_22 : f32 to vector<2x32xf32>
    %62 = arith.addf %61, %60 : vector<2x32xf32>
    %63 = arith.divf %61, %62 : vector<2x32xf32>
    %64 = vector.extract_strided_slice %44 {offsets = [0, 64], sizes = [2, 32], strides = [1, 1]} : vector<2x96xf32> to vector<2x32xf32>
    %65 = vector.extract_strided_slice %47 {offsets = [0, 64], sizes = [2, 32], strides = [1, 1]} : vector<2x96xf32> to vector<2x32xf32>
    %66 = arith.mulf %55, %65 : vector<2x32xf32>
    %67 = arith.addf %64, %66 : vector<2x32xf32>
    %68 = math.tanh %67 : vector<2x32xf32>
    %cst_23 = arith.constant 1.000000e+00 : f32
    %69 = vector.broadcast %cst_23 : f32 to vector<2x32xf32>
    %70 = arith.subf %69, %63 : vector<2x32xf32>
    %71 = arith.mulf %70, %68 : vector<2x32xf32>
    %72 = arith.mulf %63, %42 : vector<2x32xf32>
    %73 = arith.addf %71, %72 : vector<2x32xf32>
    %c2 = arith.constant 2 : index
    %c0_24 = arith.constant 0 : index
    %74 = vector.load %arg20[%c2, %c0_24] : memref<8x64xf32, #tpu.memory_space<vmem>>, vector<2x32xf32>
    tpu.vector_store %arg20[%c2, %c0_24], %73 {strides = array<i32>} : memref<8x64xf32, #tpu.memory_space<vmem>>, vector<2x32xf32>,
    %75 = vector.extract_strided_slice %7 {offsets = [4, 0], sizes = [2, 96], strides = [1, 1]} : vector<8x96xf32> to vector<2x96xf32>
    %cst_25 = arith.constant dense<0.000000e+00> : vector<2x96xf32>
    %76 = tpu.matmul %73, %9, %cst_25 {dimension_numbers = #tpu.dot_dimension_numbers<[1], [0], [0], [1], [0, 0, 1, 1], [], []>} : vector<2x32xf32>, vector<32x96xf32>, vector<2x96xf32> -> vector<2x96xf32>
    %77 = vector.broadcast %11 : vector<1x96xf32> to vector<2x96xf32>
    %78 = arith.addf %76, %77 : vector<2x96xf32>
    %79 = vector.extract_strided_slice %75 {offsets = [0, 0], sizes = [2, 32], strides = [1, 1]} : vector<2x96xf32> to vector<2x32xf32>
    %80 = vector.extract_strided_slice %78 {offsets = [0, 0], sizes = [2, 32], strides = [1, 1]} : vector<2x96xf32> to vector<2x32xf32>
    %81 = arith.addf %79, %80 : vector<2x32xf32>
    %82 = arith.negf %81 : vector<2x32xf32>
    %83 = math.exp %82 : vector<2x32xf32>
    %cst_26 = arith.constant 1.000000e+00 : f32
    %84 = vector.broadcast %cst_26 : f32 to vector<2x32xf32>
    %85 = arith.addf %84, %83 : vector<2x32xf32>
    %86 = arith.divf %84, %85 : vector<2x32xf32>
    %87 = vector.extract_strided_slice %75 {offsets = [0, 32], sizes = [2, 32], strides = [1, 1]} : vector<2x96xf32> to vector<2x32xf32>
    %88 = vector.extract_strided_slice %78 {offsets = [0, 32], sizes = [2, 32], strides = [1, 1]} : vector<2x96xf32> to vector<2x32xf32>
    %89 = arith.addf %87, %88 : vector<2x32xf32>
    %90 = arith.negf %89 : vector<2x32xf32>
    %91 = math.exp %90 : vector<2x32xf32>
    %cst_27 = arith.constant 1.000000e+00 : f32
    %92 = vector.broadcast %cst_27 : f32 to vector<2x32xf32>
    %93 = arith.addf %92, %91 : vector<2x32xf32>
    %94 = arith.divf %92, %93 : vector<2x32xf32>
    %95 = vector.extract_strided_slice %75 {offsets = [0, 64], sizes = [2, 32], strides = [1, 1]} : vector<2x96xf32> to vector<2x32xf32>
    %96 = vector.extract_strided_slice %78 {offsets = [0, 64], sizes = [2, 32], strides = [1, 1]} : vector<2x96xf32> to vector<2x32xf32>
    %97 = arith.mulf %86, %96 : vector<2x32xf32>
    %98 = arith.addf %95, %97 : vector<2x32xf32>
    %99 = math.tanh %98 : vector<2x32xf32>
    %cst_28 = arith.constant 1.000000e+00 : f32
    %100 = vector.broadcast %cst_28 : f32 to vector<2x32xf32>
    %101 = arith.subf %100, %94 : vector<2x32xf32>
    %102 = arith.mulf %101, %99 : vector<2x32xf32>
    %103 = arith.mulf %94, %73 : vector<2x32xf32>
    %104 = arith.addf %102, %103 : vector<2x32xf32>
    %c4 = arith.constant 4 : index
    %c0_29 = arith.constant 0 : index
    %105 = vector.load %arg20[%c4, %c0_29] : memref<8x64xf32, #tpu.memory_space<vmem>>, vector<2x32xf32>
    tpu.vector_store %arg20[%c4, %c0_29], %104 {strides = array<i32>} : memref<8x64xf32, #tpu.memory_space<vmem>>, vector<2x32xf32>,
    %106 = vector.extract_strided_slice %7 {offsets = [6, 0], sizes = [2, 96], strides = [1, 1]} : vector<8x96xf32> to vector<2x96xf32>
    %cst_30 = arith.constant dense<0.000000e+00> : vector<2x96xf32>
    %107 = tpu.matmul %104, %9, %cst_30 {dimension_numbers = #tpu.dot_dimension_numbers<[1], [0], [0], [1], [0, 0, 1, 1], [], []>} : vector<2x32xf32>, vector<32x96xf32>, vector<2x96xf32> -> vector<2x96xf32>
    %108 = vector.broadcast %11 : vector<1x96xf32> to vector<2x96xf32>
    %109 = arith.addf %107, %108 : vector<2x96xf32>
    %110 = vector.extract_strided_slice %106 {offsets = [0, 0], sizes = [2, 32], strides = [1, 1]} : vector<2x96xf32> to vector<2x32xf32>
    %111 = vector.extract_strided_slice %109 {offsets = [0, 0], sizes = [2, 32], strides = [1, 1]} : vector<2x96xf32> to vector<2x32xf32>
    %112 = arith.addf %110, %111 : vector<2x32xf32>
    %113 = arith.negf %112 : vector<2x32xf32>
    %114 = math.exp %113 : vector<2x32xf32>
    %cst_31 = arith.constant 1.000000e+00 : f32
    %115 = vector.broadcast %cst_31 : f32 to vector<2x32xf32>
    %116 = arith.addf %115, %114 : vector<2x32xf32>
    %117 = arith.divf %115, %116 : vector<2x32xf32>
    %118 = vector.extract_strided_slice %106 {offsets = [0, 32], sizes = [2, 32], strides = [1, 1]} : vector<2x96xf32> to vector<2x32xf32>
    %119 = vector.extract_strided_slice %109 {offsets = [0, 32], sizes = [2, 32], strides = [1, 1]} : vector<2x96xf32> to vector<2x32xf32>
    %120 = arith.addf %118, %119 : vector<2x32xf32>
    %121 = arith.negf %120 : vector<2x32xf32>
    %122 = math.exp %121 : vector<2x32xf32>
    %cst_32 = arith.constant 1.000000e+00 : f32
    %123 = vector.broadcast %cst_32 : f32 to vector<2x32xf32>
    %124 = arith.addf %123, %122 : vector<2x32xf32>
    %125 = arith.divf %123, %124 : vector<2x32xf32>
    %126 = vector.extract_strided_slice %106 {offsets = [0, 64], sizes = [2, 32], strides = [1, 1]} : vector<2x96xf32> to vector<2x32xf32>
    %127 = vector.extract_strided_slice %109 {offsets = [0, 64], sizes = [2, 32], strides = [1, 1]} : vector<2x96xf32> to vector<2x32xf32>
    %128 = arith.mulf %117, %127 : vector<2x32xf32>
    %129 = arith.addf %126, %128 : vector<2x32xf32>
    %130 = math.tanh %129 : vector<2x32xf32>
    %cst_33 = arith.constant 1.000000e+00 : f32
    %131 = vector.broadcast %cst_33 : f32 to vector<2x32xf32>
    %132 = arith.subf %131, %125 : vector<2x32xf32>
    %133 = arith.mulf %132, %130 : vector<2x32xf32>
    %134 = arith.mulf %125, %104 : vector<2x32xf32>
    %135 = arith.addf %133, %134 : vector<2x32xf32>
    %c6 = arith.constant 6 : index
    %c0_34 = arith.constant 0 : index
    %136 = vector.load %arg20[%c6, %c0_34] : memref<8x64xf32, #tpu.memory_space<vmem>>, vector<2x32xf32>
    tpu.vector_store %arg20[%c6, %c0_34], %135 {strides = array<i32>} : memref<8x64xf32, #tpu.memory_space<vmem>>, vector<2x32xf32>,
    %c1 = arith.constant 1 : index
    %c0_35 = arith.constant 0 : index
    %c0_36 = arith.constant 0 : index
    %137 = vector.load %arg1[%c1, %c0_35, %c0_36] : memref<2x64x96xf32, #tpu.memory_space<vmem>>, vector<1x64x96xf32>
    %138 = vector.shape_cast %137 : vector<1x64x96xf32> to vector<64x96xf32>
    %cst_37 = arith.constant dense<0.000000e+00> : vector<8x96xf32>
    %139 = tpu.matmul %0, %138, %cst_37 {dimension_numbers = #tpu.dot_dimension_numbers<[1], [0], [0], [1], [0, 0, 1, 1], [], []>} : vector<8x64xf32>, vector<64x96xf32>, vector<8x96xf32> -> vector<8x96xf32>
    %c1_38 = arith.constant 1 : index
    %c0_39 = arith.constant 0 : index
    %c0_40 = arith.constant 0 : index
    %140 = vector.load %arg3[%c1_38, %c0_39, %c0_40] : memref<2x1x96xf32, #tpu.memory_space<vmem>>, vector<1x1x96xf32>
    %141 = vector.shape_cast %140 : vector<1x1x96xf32> to vector<1x96xf32>
    %142 = vector.broadcast %141 : vector<1x96xf32> to vector<8x96xf32>
    %143 = arith.addf %139, %142 : vector<8x96xf32>
    %c1_41 = arith.constant 1 : index
    %c0_42 = arith.constant 0 : index
    %c0_43 = arith.constant 0 : index
    %144 = vector.load %arg2[%c1_41, %c0_42, %c0_43] : memref<2x32x96xf32, #tpu.memory_space<vmem>>, vector<1x32x96xf32>
    %145 = vector.shape_cast %144 : vector<1x32x96xf32> to vector<32x96xf32>
    %c1_44 = arith.constant 1 : index
    %c0_45 = arith.constant 0 : index
    %c0_46 = arith.constant 0 : index
    %146 = vector.load %arg4[%c1_44, %c0_45, %c0_46] : memref<2x1x96xf32, #tpu.memory_space<vmem>>, vector<1x1x96xf32>
    %147 = vector.shape_cast %146 : vector<1x1x96xf32> to vector<1x96xf32>
    %cst_47 = arith.constant 0.000000e+00 : f32
    %148 = vector.broadcast %cst_47 : f32 to vector<2x32xf32>
    %149 = vector.extract_strided_slice %143 {offsets = [6, 0], sizes = [2, 96], strides = [1, 1]} : vector<8x96xf32> to vector<2x96xf32>
    %cst_48 = arith.constant dense<0.000000e+00> : vector<2x96xf32>
    %150 = tpu.matmul %148, %145, %cst_48 {dimension_numbers = #tpu.dot_dimension_numbers<[1], [0], [0], [1], [0, 0, 1, 1], [], []>} : vector<2x32xf32>, vector<32x96xf32>, vector<2x96xf32> -> vector<2x96xf32>
    %151 = vector.broadcast %147 : vector<1x96xf32> to vector<2x96xf32>
    %152 = arith.addf %150, %151 : vector<2x96xf32>
    %153 = vector.extract_strided_slice %149 {offsets = [0, 0], sizes = [2, 32], strides = [1, 1]} : vector<2x96xf32> to vector<2x32xf32>
    %154 = vector.extract_strided_slice %152 {offsets = [0, 0], sizes = [2, 32], strides = [1, 1]} : vector<2x96xf32> to vector<2x32xf32>
    %155 = arith.addf %153, %154 : vector<2x32xf32>
    %156 = arith.negf %155 : vector<2x32xf32>
    %157 = math.exp %156 : vector<2x32xf32>
    %cst_49 = arith.constant 1.000000e+00 : f32
    %158 = vector.broadcast %cst_49 : f32 to vector<2x32xf32>
    %159 = arith.addf %158, %157 : vector<2x32xf32>
    %160 = arith.divf %158, %159 : vector<2x32xf32>
    %161 = vector.extract_strided_slice %149 {offsets = [0, 32], sizes = [2, 32], strides = [1, 1]} : vector<2x96xf32> to vector<2x32xf32>
    %162 = vector.extract_strided_slice %152 {offsets = [0, 32], sizes = [2, 32], strides = [1, 1]} : vector<2x96xf32> to vector<2x32xf32>
    %163 = arith.addf %161, %162 : vector<2x32xf32>
    %164 = arith.negf %163 : vector<2x32xf32>
    %165 = math.exp %164 : vector<2x32xf32>
    %cst_50 = arith.constant 1.000000e+00 : f32
    %166 = vector.broadcast %cst_50 : f32 to vector<2x32xf32>
    %167 = arith.addf %166, %165 : vector<2x32xf32>
    %168 = arith.divf %166, %167 : vector<2x32xf32>
    %169 = vector.extract_strided_slice %149 {offsets = [0, 64], sizes = [2, 32], strides = [1, 1]} : vector<2x96xf32> to vector<2x32xf32>
    %170 = vector.extract_strided_slice %152 {offsets = [0, 64], sizes = [2, 32], strides = [1, 1]} : vector<2x96xf32> to vector<2x32xf32>
    %171 = arith.mulf %160, %170 : vector<2x32xf32>
    %172 = arith.addf %169, %171 : vector<2x32xf32>
    %173 = math.tanh %172 : vector<2x32xf32>
    %cst_51 = arith.constant 1.000000e+00 : f32
    %174 = vector.broadcast %cst_51 : f32 to vector<2x32xf32>
    %175 = arith.subf %174, %168 : vector<2x32xf32>
    %176 = arith.mulf %175, %173 : vector<2x32xf32>
    %177 = arith.mulf %168, %148 : vector<2x32xf32>
    %178 = arith.addf %176, %177 : vector<2x32xf32>
    %c6_52 = arith.constant 6 : index
    %c32 = arith.constant 32 : index
    %179 = vector.load %arg20[%c6_52, %c32] : memref<8x64xf32, #tpu.memory_space<vmem>>, vector<2x32xf32>
    tpu.vector_store %arg20[%c6_52, %c32], %178 {strides = array<i32>} : memref<8x64xf32, #tpu.memory_space<vmem>>, vector<2x32xf32>,
    %180 = vector.extract_strided_slice %143 {offsets = [4, 0], sizes = [2, 96], strides = [1, 1]} : vector<8x96xf32> to vector<2x96xf32>
    %cst_53 = arith.constant dense<0.000000e+00> : vector<2x96xf32>
    %181 = tpu.matmul %178, %145, %cst_53 {dimension_numbers = #tpu.dot_dimension_numbers<[1], [0], [0], [1], [0, 0, 1, 1], [], []>} : vector<2x32xf32>, vector<32x96xf32>, vector<2x96xf32> -> vector<2x96xf32>
    %182 = vector.broadcast %147 : vector<1x96xf32> to vector<2x96xf32>
    %183 = arith.addf %181, %182 : vector<2x96xf32>
    %184 = vector.extract_strided_slice %180 {offsets = [0, 0], sizes = [2, 32], strides = [1, 1]} : vector<2x96xf32> to vector<2x32xf32>
    %185 = vector.extract_strided_slice %183 {offsets = [0, 0], sizes = [2, 32], strides = [1, 1]} : vector<2x96xf32> to vector<2x32xf32>
    %186 = arith.addf %184, %185 : vector<2x32xf32>
    %187 = arith.negf %186 : vector<2x32xf32>
    %188 = math.exp %187 : vector<2x32xf32>
    %cst_54 = arith.constant 1.000000e+00 : f32
    %189 = vector.broadcast %cst_54 : f32 to vector<2x32xf32>
    %190 = arith.addf %189, %188 : vector<2x32xf32>
    %191 = arith.divf %189, %190 : vector<2x32xf32>
    %192 = vector.extract_strided_slice %180 {offsets = [0, 32], sizes = [2, 32], strides = [1, 1]} : vector<2x96xf32> to vector<2x32xf32>
    %193 = vector.extract_strided_slice %183 {offsets = [0, 32], sizes = [2, 32], strides = [1, 1]} : vector<2x96xf32> to vector<2x32xf32>
    %194 = arith.addf %192, %193 : vector<2x32xf32>
    %195 = arith.negf %194 : vector<2x32xf32>
    %196 = math.exp %195 : vector<2x32xf32>
    %cst_55 = arith.constant 1.000000e+00 : f32
    %197 = vector.broadcast %cst_55 : f32 to vector<2x32xf32>
    %198 = arith.addf %197, %196 : vector<2x32xf32>
    %199 = arith.divf %197, %198 : vector<2x32xf32>
    %200 = vector.extract_strided_slice %180 {offsets = [0, 64], sizes = [2, 32], strides = [1, 1]} : vector<2x96xf32> to vector<2x32xf32>
    %201 = vector.extract_strided_slice %183 {offsets = [0, 64], sizes = [2, 32], strides = [1, 1]} : vector<2x96xf32> to vector<2x32xf32>
    %202 = arith.mulf %191, %201 : vector<2x32xf32>
    %203 = arith.addf %200, %202 : vector<2x32xf32>
    %204 = math.tanh %203 : vector<2x32xf32>
    %cst_56 = arith.constant 1.000000e+00 : f32
    %205 = vector.broadcast %cst_56 : f32 to vector<2x32xf32>
    %206 = arith.subf %205, %199 : vector<2x32xf32>
    %207 = arith.mulf %206, %204 : vector<2x32xf32>
    %208 = arith.mulf %199, %178 : vector<2x32xf32>
    %209 = arith.addf %207, %208 : vector<2x32xf32>
    %c4_57 = arith.constant 4 : index
    %c32_58 = arith.constant 32 : index
    %210 = vector.load %arg20[%c4_57, %c32_58] : memref<8x64xf32, #tpu.memory_space<vmem>>, vector<2x32xf32>
    tpu.vector_store %arg20[%c4_57, %c32_58], %209 {strides = array<i32>} : memref<8x64xf32, #tpu.memory_space<vmem>>, vector<2x32xf32>,
    %211 = vector.extract_strided_slice %143 {offsets = [2, 0], sizes = [2, 96], strides = [1, 1]} : vector<8x96xf32> to vector<2x96xf32>
    %cst_59 = arith.constant dense<0.000000e+00> : vector<2x96xf32>
    %212 = tpu.matmul %209, %145, %cst_59 {dimension_numbers = #tpu.dot_dimension_numbers<[1], [0], [0], [1], [0, 0, 1, 1], [], []>} : vector<2x32xf32>, vector<32x96xf32>, vector<2x96xf32> -> vector<2x96xf32>
    %213 = vector.broadcast %147 : vector<1x96xf32> to vector<2x96xf32>
    %214 = arith.addf %212, %213 : vector<2x96xf32>
    %215 = vector.extract_strided_slice %211 {offsets = [0, 0], sizes = [2, 32], strides = [1, 1]} : vector<2x96xf32> to vector<2x32xf32>
    %216 = vector.extract_strided_slice %214 {offsets = [0, 0], sizes = [2, 32], strides = [1, 1]} : vector<2x96xf32> to vector<2x32xf32>
    %217 = arith.addf %215, %216 : vector<2x32xf32>
    %218 = arith.negf %217 : vector<2x32xf32>
    %219 = math.exp %218 : vector<2x32xf32>
    %cst_60 = arith.constant 1.000000e+00 : f32
    %220 = vector.broadcast %cst_60 : f32 to vector<2x32xf32>
    %221 = arith.addf %220, %219 : vector<2x32xf32>
    %222 = arith.divf %220, %221 : vector<2x32xf32>
    %223 = vector.extract_strided_slice %211 {offsets = [0, 32], sizes = [2, 32], strides = [1, 1]} : vector<2x96xf32> to vector<2x32xf32>
    %224 = vector.extract_strided_slice %214 {offsets = [0, 32], sizes = [2, 32], strides = [1, 1]} : vector<2x96xf32> to vector<2x32xf32>
    %225 = arith.addf %223, %224 : vector<2x32xf32>
    %226 = arith.negf %225 : vector<2x32xf32>
    %227 = math.exp %226 : vector<2x32xf32>
    %cst_61 = arith.constant 1.000000e+00 : f32
    %228 = vector.broadcast %cst_61 : f32 to vector<2x32xf32>
    %229 = arith.addf %228, %227 : vector<2x32xf32>
    %230 = arith.divf %228, %229 : vector<2x32xf32>
    %231 = vector.extract_strided_slice %211 {offsets = [0, 64], sizes = [2, 32], strides = [1, 1]} : vector<2x96xf32> to vector<2x32xf32>
    %232 = vector.extract_strided_slice %214 {offsets = [0, 64], sizes = [2, 32], strides = [1, 1]} : vector<2x96xf32> to vector<2x32xf32>
    %233 = arith.mulf %222, %232 : vector<2x32xf32>
    %234 = arith.addf %231, %233 : vector<2x32xf32>
    %235 = math.tanh %234 : vector<2x32xf32>
    %cst_62 = arith.constant 1.000000e+00 : f32
    %236 = vector.broadcast %cst_62 : f32 to vector<2x32xf32>
    %237 = arith.subf %236, %230 : vector<2x32xf32>
    %238 = arith.mulf %237, %235 : vector<2x32xf32>
    %239 = arith.mulf %230, %209 : vector<2x32xf32>
    %240 = arith.addf %238, %239 : vector<2x32xf32>
    %c2_63 = arith.constant 2 : index
    %c32_64 = arith.constant 32 : index
    %241 = vector.load %arg20[%c2_63, %c32_64] : memref<8x64xf32, #tpu.memory_space<vmem>>, vector<2x32xf32>
    tpu.vector_store %arg20[%c2_63, %c32_64], %240 {strides = array<i32>} : memref<8x64xf32, #tpu.memory_space<vmem>>, vector<2x32xf32>,
    %242 = vector.extract_strided_slice %143 {offsets = [0, 0], sizes = [2, 96], strides = [1, 1]} : vector<8x96xf32> to vector<2x96xf32>
    %cst_65 = arith.constant dense<0.000000e+00> : vector<2x96xf32>
    %243 = tpu.matmul %240, %145, %cst_65 {dimension_numbers = #tpu.dot_dimension_numbers<[1], [0], [0], [1], [0, 0, 1, 1], [], []>} : vector<2x32xf32>, vector<32x96xf32>, vector<2x96xf32> -> vector<2x96xf32>
    %244 = vector.broadcast %147 : vector<1x96xf32> to vector<2x96xf32>
    %245 = arith.addf %243, %244 : vector<2x96xf32>
    %246 = vector.extract_strided_slice %242 {offsets = [0, 0], sizes = [2, 32], strides = [1, 1]} : vector<2x96xf32> to vector<2x32xf32>
    %247 = vector.extract_strided_slice %245 {offsets = [0, 0], sizes = [2, 32], strides = [1, 1]} : vector<2x96xf32> to vector<2x32xf32>
    %248 = arith.addf %246, %247 : vector<2x32xf32>
    %249 = arith.negf %248 : vector<2x32xf32>
    %250 = math.exp %249 : vector<2x32xf32>
    %cst_66 = arith.constant 1.000000e+00 : f32
    %251 = vector.broadcast %cst_66 : f32 to vector<2x32xf32>
    %252 = arith.addf %251, %250 : vector<2x32xf32>
    %253 = arith.divf %251, %252 : vector<2x32xf32>
    %254 = vector.extract_strided_slice %242 {offsets = [0, 32], sizes = [2, 32], strides = [1, 1]} : vector<2x96xf32> to vector<2x32xf32>
    %255 = vector.extract_strided_slice %245 {offsets = [0, 32], sizes = [2, 32], strides = [1, 1]} : vector<2x96xf32> to vector<2x32xf32>
    %256 = arith.addf %254, %255 : vector<2x32xf32>
    %257 = arith.negf %256 : vector<2x32xf32>
    %258 = math.exp %257 : vector<2x32xf32>
    %cst_67 = arith.constant 1.000000e+00 : f32
    %259 = vector.broadcast %cst_67 : f32 to vector<2x32xf32>
    %260 = arith.addf %259, %258 : vector<2x32xf32>
    %261 = arith.divf %259, %260 : vector<2x32xf32>
    %262 = vector.extract_strided_slice %242 {offsets = [0, 64], sizes = [2, 32], strides = [1, 1]} : vector<2x96xf32> to vector<2x32xf32>
    %263 = vector.extract_strided_slice %245 {offsets = [0, 64], sizes = [2, 32], strides = [1, 1]} : vector<2x96xf32> to vector<2x32xf32>
    %264 = arith.mulf %253, %263 : vector<2x32xf32>
    %265 = arith.addf %262, %264 : vector<2x32xf32>
    %266 = math.tanh %265 : vector<2x32xf32>
    %cst_68 = arith.constant 1.000000e+00 : f32
    %267 = vector.broadcast %cst_68 : f32 to vector<2x32xf32>
    %268 = arith.subf %267, %261 : vector<2x32xf32>
    %269 = arith.mulf %268, %266 : vector<2x32xf32>
    %270 = arith.mulf %261, %240 : vector<2x32xf32>
    %271 = arith.addf %269, %270 : vector<2x32xf32>
    %c0_69 = arith.constant 0 : index
    %c32_70 = arith.constant 32 : index
    %272 = vector.load %arg20[%c0_69, %c32_70] : memref<8x64xf32, #tpu.memory_space<vmem>>, vector<2x32xf32>
    tpu.vector_store %arg20[%c0_69, %c32_70], %271 {strides = array<i32>} : memref<8x64xf32, #tpu.memory_space<vmem>>, vector<2x32xf32>,
    %c0_71 = arith.constant 0 : index
    %c0_72 = arith.constant 0 : index
    %273 = vector.load %arg20[%c0_71, %c0_72] : memref<8x64xf32, #tpu.memory_space<vmem>>, vector<8x64xf32>
    %c0_73 = arith.constant 0 : index
    %c0_74 = arith.constant 0 : index
    %c0_75 = arith.constant 0 : index
    %274 = vector.load %arg5[%c0_73, %c0_74, %c0_75] : memref<2x64x96xf32, #tpu.memory_space<vmem>>, vector<1x64x96xf32>
    %275 = vector.shape_cast %274 : vector<1x64x96xf32> to vector<64x96xf32>
    %cst_76 = arith.constant dense<0.000000e+00> : vector<8x96xf32>
    %276 = tpu.matmul %273, %275, %cst_76 {dimension_numbers = #tpu.dot_dimension_numbers<[1], [0], [0], [1], [0, 0, 1, 1], [], []>} : vector<8x64xf32>, vector<64x96xf32>, vector<8x96xf32> -> vector<8x96xf32>
    %c0_77 = arith.constant 0 : index
    %c0_78 = arith.constant 0 : index
    %c0_79 = arith.constant 0 : index
    %277 = vector.load %arg7[%c0_77, %c0_78, %c0_79] : memref<2x1x96xf32, #tpu.memory_space<vmem>>, vector<1x1x96xf32>
    %278 = vector.shape_cast %277 : vector<1x1x96xf32> to vector<1x96xf32>
    %279 = vector.broadcast %278 : vector<1x96xf32> to vector<8x96xf32>
    %280 = arith.addf %276, %279 : vector<8x96xf32>
    %c0_80 = arith.constant 0 : index
    %c0_81 = arith.constant 0 : index
    %c0_82 = arith.constant 0 : index
    %281 = vector.load %arg6[%c0_80, %c0_81, %c0_82] : memref<2x32x96xf32, #tpu.memory_space<vmem>>, vector<1x32x96xf32>
    %282 = vector.shape_cast %281 : vector<1x32x96xf32> to vector<32x96xf32>
    %c0_83 = arith.constant 0 : index
    %c0_84 = arith.constant 0 : index
    %c0_85 = arith.constant 0 : index
    %283 = vector.load %arg8[%c0_83, %c0_84, %c0_85] : memref<2x1x96xf32, #tpu.memory_space<vmem>>, vector<1x1x96xf32>
    %284 = vector.shape_cast %283 : vector<1x1x96xf32> to vector<1x96xf32>
    %cst_86 = arith.constant 0.000000e+00 : f32
    %285 = vector.broadcast %cst_86 : f32 to vector<2x32xf32>
    %286 = vector.extract_strided_slice %280 {offsets = [0, 0], sizes = [2, 96], strides = [1, 1]} : vector<8x96xf32> to vector<2x96xf32>
    %cst_87 = arith.constant dense<0.000000e+00> : vector<2x96xf32>
    %287 = tpu.matmul %285, %282, %cst_87 {dimension_numbers = #tpu.dot_dimension_numbers<[1], [0], [0], [1], [0, 0, 1, 1], [], []>} : vector<2x32xf32>, vector<32x96xf32>, vector<2x96xf32> -> vector<2x96xf32>
    %288 = vector.broadcast %284 : vector<1x96xf32> to vector<2x96xf32>
    %289 = arith.addf %287, %288 : vector<2x96xf32>
    %290 = vector.extract_strided_slice %286 {offsets = [0, 0], sizes = [2, 32], strides = [1, 1]} : vector<2x96xf32> to vector<2x32xf32>
    %291 = vector.extract_strided_slice %289 {offsets = [0, 0], sizes = [2, 32], strides = [1, 1]} : vector<2x96xf32> to vector<2x32xf32>
    %292 = arith.addf %290, %291 : vector<2x32xf32>
    %293 = arith.negf %292 : vector<2x32xf32>
    %294 = math.exp %293 : vector<2x32xf32>
    %cst_88 = arith.constant 1.000000e+00 : f32
    %295 = vector.broadcast %cst_88 : f32 to vector<2x32xf32>
    %296 = arith.addf %295, %294 : vector<2x32xf32>
    %297 = arith.divf %295, %296 : vector<2x32xf32>
    %298 = vector.extract_strided_slice %286 {offsets = [0, 32], sizes = [2, 32], strides = [1, 1]} : vector<2x96xf32> to vector<2x32xf32>
    %299 = vector.extract_strided_slice %289 {offsets = [0, 32], sizes = [2, 32], strides = [1, 1]} : vector<2x96xf32> to vector<2x32xf32>
    %300 = arith.addf %298, %299 : vector<2x32xf32>
    %301 = arith.negf %300 : vector<2x32xf32>
    %302 = math.exp %301 : vector<2x32xf32>
    %cst_89 = arith.constant 1.000000e+00 : f32
    %303 = vector.broadcast %cst_89 : f32 to vector<2x32xf32>
    %304 = arith.addf %303, %302 : vector<2x32xf32>
    %305 = arith.divf %303, %304 : vector<2x32xf32>
    %306 = vector.extract_strided_slice %286 {offsets = [0, 64], sizes = [2, 32], strides = [1, 1]} : vector<2x96xf32> to vector<2x32xf32>
    %307 = vector.extract_strided_slice %289 {offsets = [0, 64], sizes = [2, 32], strides = [1, 1]} : vector<2x96xf32> to vector<2x32xf32>
    %308 = arith.mulf %297, %307 : vector<2x32xf32>
    %309 = arith.addf %306, %308 : vector<2x32xf32>
    %310 = math.tanh %309 : vector<2x32xf32>
    %cst_90 = arith.constant 1.000000e+00 : f32
    %311 = vector.broadcast %cst_90 : f32 to vector<2x32xf32>
    %312 = arith.subf %311, %305 : vector<2x32xf32>
    %313 = arith.mulf %312, %310 : vector<2x32xf32>
    %314 = arith.mulf %305, %285 : vector<2x32xf32>
    %315 = arith.addf %313, %314 : vector<2x32xf32>
    %c0_91 = arith.constant 0 : index
    %c0_92 = arith.constant 0 : index
    %316 = vector.load %arg20[%c0_91, %c0_92] : memref<8x64xf32, #tpu.memory_space<vmem>>, vector<2x32xf32>
    tpu.vector_store %arg20[%c0_91, %c0_92], %315 {strides = array<i32>} : memref<8x64xf32, #tpu.memory_space<vmem>>, vector<2x32xf32>,
    %317 = vector.extract_strided_slice %280 {offsets = [2, 0], sizes = [2, 96], strides = [1, 1]} : vector<8x96xf32> to vector<2x96xf32>
    %cst_93 = arith.constant dense<0.000000e+00> : vector<2x96xf32>
    %318 = tpu.matmul %315, %282, %cst_93 {dimension_numbers = #tpu.dot_dimension_numbers<[1], [0], [0], [1], [0, 0, 1, 1], [], []>} : vector<2x32xf32>, vector<32x96xf32>, vector<2x96xf32> -> vector<2x96xf32>
    %319 = vector.broadcast %284 : vector<1x96xf32> to vector<2x96xf32>
    %320 = arith.addf %318, %319 : vector<2x96xf32>
    %321 = vector.extract_strided_slice %317 {offsets = [0, 0], sizes = [2, 32], strides = [1, 1]} : vector<2x96xf32> to vector<2x32xf32>
    %322 = vector.extract_strided_slice %320 {offsets = [0, 0], sizes = [2, 32], strides = [1, 1]} : vector<2x96xf32> to vector<2x32xf32>
    %323 = arith.addf %321, %322 : vector<2x32xf32>
    %324 = arith.negf %323 : vector<2x32xf32>
    %325 = math.exp %324 : vector<2x32xf32>
    %cst_94 = arith.constant 1.000000e+00 : f32
    %326 = vector.broadcast %cst_94 : f32 to vector<2x32xf32>
    %327 = arith.addf %326, %325 : vector<2x32xf32>
    %328 = arith.divf %326, %327 : vector<2x32xf32>
    %329 = vector.extract_strided_slice %317 {offsets = [0, 32], sizes = [2, 32], strides = [1, 1]} : vector<2x96xf32> to vector<2x32xf32>
    %330 = vector.extract_strided_slice %320 {offsets = [0, 32], sizes = [2, 32], strides = [1, 1]} : vector<2x96xf32> to vector<2x32xf32>
    %331 = arith.addf %329, %330 : vector<2x32xf32>
    %332 = arith.negf %331 : vector<2x32xf32>
    %333 = math.exp %332 : vector<2x32xf32>
    %cst_95 = arith.constant 1.000000e+00 : f32
    %334 = vector.broadcast %cst_95 : f32 to vector<2x32xf32>
    %335 = arith.addf %334, %333 : vector<2x32xf32>
    %336 = arith.divf %334, %335 : vector<2x32xf32>
    %337 = vector.extract_strided_slice %317 {offsets = [0, 64], sizes = [2, 32], strides = [1, 1]} : vector<2x96xf32> to vector<2x32xf32>
    %338 = vector.extract_strided_slice %320 {offsets = [0, 64], sizes = [2, 32], strides = [1, 1]} : vector<2x96xf32> to vector<2x32xf32>
    %339 = arith.mulf %328, %338 : vector<2x32xf32>
    %340 = arith.addf %337, %339 : vector<2x32xf32>
    %341 = math.tanh %340 : vector<2x32xf32>
    %cst_96 = arith.constant 1.000000e+00 : f32
    %342 = vector.broadcast %cst_96 : f32 to vector<2x32xf32>
    %343 = arith.subf %342, %336 : vector<2x32xf32>
    %344 = arith.mulf %343, %341 : vector<2x32xf32>
    %345 = arith.mulf %336, %315 : vector<2x32xf32>
    %346 = arith.addf %344, %345 : vector<2x32xf32>
    %c2_97 = arith.constant 2 : index
    %c0_98 = arith.constant 0 : index
    %347 = vector.load %arg20[%c2_97, %c0_98] : memref<8x64xf32, #tpu.memory_space<vmem>>, vector<2x32xf32>
    tpu.vector_store %arg20[%c2_97, %c0_98], %346 {strides = array<i32>} : memref<8x64xf32, #tpu.memory_space<vmem>>, vector<2x32xf32>,
    %348 = vector.extract_strided_slice %280 {offsets = [4, 0], sizes = [2, 96], strides = [1, 1]} : vector<8x96xf32> to vector<2x96xf32>
    %cst_99 = arith.constant dense<0.000000e+00> : vector<2x96xf32>
    %349 = tpu.matmul %346, %282, %cst_99 {dimension_numbers = #tpu.dot_dimension_numbers<[1], [0], [0], [1], [0, 0, 1, 1], [], []>} : vector<2x32xf32>, vector<32x96xf32>, vector<2x96xf32> -> vector<2x96xf32>
    %350 = vector.broadcast %284 : vector<1x96xf32> to vector<2x96xf32>
    %351 = arith.addf %349, %350 : vector<2x96xf32>
    %352 = vector.extract_strided_slice %348 {offsets = [0, 0], sizes = [2, 32], strides = [1, 1]} : vector<2x96xf32> to vector<2x32xf32>
    %353 = vector.extract_strided_slice %351 {offsets = [0, 0], sizes = [2, 32], strides = [1, 1]} : vector<2x96xf32> to vector<2x32xf32>
    %354 = arith.addf %352, %353 : vector<2x32xf32>
    %355 = arith.negf %354 : vector<2x32xf32>
    %356 = math.exp %355 : vector<2x32xf32>
    %cst_100 = arith.constant 1.000000e+00 : f32
    %357 = vector.broadcast %cst_100 : f32 to vector<2x32xf32>
    %358 = arith.addf %357, %356 : vector<2x32xf32>
    %359 = arith.divf %357, %358 : vector<2x32xf32>
    %360 = vector.extract_strided_slice %348 {offsets = [0, 32], sizes = [2, 32], strides = [1, 1]} : vector<2x96xf32> to vector<2x32xf32>
    %361 = vector.extract_strided_slice %351 {offsets = [0, 32], sizes = [2, 32], strides = [1, 1]} : vector<2x96xf32> to vector<2x32xf32>
    %362 = arith.addf %360, %361 : vector<2x32xf32>
    %363 = arith.negf %362 : vector<2x32xf32>
    %364 = math.exp %363 : vector<2x32xf32>
    %cst_101 = arith.constant 1.000000e+00 : f32
    %365 = vector.broadcast %cst_101 : f32 to vector<2x32xf32>
    %366 = arith.addf %365, %364 : vector<2x32xf32>
    %367 = arith.divf %365, %366 : vector<2x32xf32>
    %368 = vector.extract_strided_slice %348 {offsets = [0, 64], sizes = [2, 32], strides = [1, 1]} : vector<2x96xf32> to vector<2x32xf32>
    %369 = vector.extract_strided_slice %351 {offsets = [0, 64], sizes = [2, 32], strides = [1, 1]} : vector<2x96xf32> to vector<2x32xf32>
    %370 = arith.mulf %359, %369 : vector<2x32xf32>
    %371 = arith.addf %368, %370 : vector<2x32xf32>
    %372 = math.tanh %371 : vector<2x32xf32>
    %cst_102 = arith.constant 1.000000e+00 : f32
    %373 = vector.broadcast %cst_102 : f32 to vector<2x32xf32>
    %374 = arith.subf %373, %367 : vector<2x32xf32>
    %375 = arith.mulf %374, %372 : vector<2x32xf32>
    %376 = arith.mulf %367, %346 : vector<2x32xf32>
    %377 = arith.addf %375, %376 : vector<2x32xf32>
    %c4_103 = arith.constant 4 : index
    %c0_104 = arith.constant 0 : index
    %378 = vector.load %arg20[%c4_103, %c0_104] : memref<8x64xf32, #tpu.memory_space<vmem>>, vector<2x32xf32>
    tpu.vector_store %arg20[%c4_103, %c0_104], %377 {strides = array<i32>} : memref<8x64xf32, #tpu.memory_space<vmem>>, vector<2x32xf32>,
    %379 = vector.extract_strided_slice %280 {offsets = [6, 0], sizes = [2, 96], strides = [1, 1]} : vector<8x96xf32> to vector<2x96xf32>
    %cst_105 = arith.constant dense<0.000000e+00> : vector<2x96xf32>
    %380 = tpu.matmul %377, %282, %cst_105 {dimension_numbers = #tpu.dot_dimension_numbers<[1], [0], [0], [1], [0, 0, 1, 1], [], []>} : vector<2x32xf32>, vector<32x96xf32>, vector<2x96xf32> -> vector<2x96xf32>
    %381 = vector.broadcast %284 : vector<1x96xf32> to vector<2x96xf32>
    %382 = arith.addf %380, %381 : vector<2x96xf32>
    %383 = vector.extract_strided_slice %379 {offsets = [0, 0], sizes = [2, 32], strides = [1, 1]} : vector<2x96xf32> to vector<2x32xf32>
    %384 = vector.extract_strided_slice %382 {offsets = [0, 0], sizes = [2, 32], strides = [1, 1]} : vector<2x96xf32> to vector<2x32xf32>
    %385 = arith.addf %383, %384 : vector<2x32xf32>
    %386 = arith.negf %385 : vector<2x32xf32>
    %387 = math.exp %386 : vector<2x32xf32>
    %cst_106 = arith.constant 1.000000e+00 : f32
    %388 = vector.broadcast %cst_106 : f32 to vector<2x32xf32>
    %389 = arith.addf %388, %387 : vector<2x32xf32>
    %390 = arith.divf %388, %389 : vector<2x32xf32>
    %391 = vector.extract_strided_slice %379 {offsets = [0, 32], sizes = [2, 32], strides = [1, 1]} : vector<2x96xf32> to vector<2x32xf32>
    %392 = vector.extract_strided_slice %382 {offsets = [0, 32], sizes = [2, 32], strides = [1, 1]} : vector<2x96xf32> to vector<2x32xf32>
    %393 = arith.addf %391, %392 : vector<2x32xf32>
    %394 = arith.negf %393 : vector<2x32xf32>
    %395 = math.exp %394 : vector<2x32xf32>
    %cst_107 = arith.constant 1.000000e+00 : f32
    %396 = vector.broadcast %cst_107 : f32 to vector<2x32xf32>
    %397 = arith.addf %396, %395 : vector<2x32xf32>
    %398 = arith.divf %396, %397 : vector<2x32xf32>
    %399 = vector.extract_strided_slice %379 {offsets = [0, 64], sizes = [2, 32], strides = [1, 1]} : vector<2x96xf32> to vector<2x32xf32>
    %400 = vector.extract_strided_slice %382 {offsets = [0, 64], sizes = [2, 32], strides = [1, 1]} : vector<2x96xf32> to vector<2x32xf32>
    %401 = arith.mulf %390, %400 : vector<2x32xf32>
    %402 = arith.addf %399, %401 : vector<2x32xf32>
    %403 = math.tanh %402 : vector<2x32xf32>
    %cst_108 = arith.constant 1.000000e+00 : f32
    %404 = vector.broadcast %cst_108 : f32 to vector<2x32xf32>
    %405 = arith.subf %404, %398 : vector<2x32xf32>
    %406 = arith.mulf %405, %403 : vector<2x32xf32>
    %407 = arith.mulf %398, %377 : vector<2x32xf32>
    %408 = arith.addf %406, %407 : vector<2x32xf32>
    %c6_109 = arith.constant 6 : index
    %c0_110 = arith.constant 0 : index
    %409 = vector.load %arg20[%c6_109, %c0_110] : memref<8x64xf32, #tpu.memory_space<vmem>>, vector<2x32xf32>
    tpu.vector_store %arg20[%c6_109, %c0_110], %408 {strides = array<i32>} : memref<8x64xf32, #tpu.memory_space<vmem>>, vector<2x32xf32>,
    %c1_111 = arith.constant 1 : index
    %c0_112 = arith.constant 0 : index
    %c0_113 = arith.constant 0 : index
    %410 = vector.load %arg5[%c1_111, %c0_112, %c0_113] : memref<2x64x96xf32, #tpu.memory_space<vmem>>, vector<1x64x96xf32>
    %411 = vector.shape_cast %410 : vector<1x64x96xf32> to vector<64x96xf32>
    %cst_114 = arith.constant dense<0.000000e+00> : vector<8x96xf32>
    %412 = tpu.matmul %273, %411, %cst_114 {dimension_numbers = #tpu.dot_dimension_numbers<[1], [0], [0], [1], [0, 0, 1, 1], [], []>} : vector<8x64xf32>, vector<64x96xf32>, vector<8x96xf32> -> vector<8x96xf32>
    %c1_115 = arith.constant 1 : index
    %c0_116 = arith.constant 0 : index
    %c0_117 = arith.constant 0 : index
    %413 = vector.load %arg7[%c1_115, %c0_116, %c0_117] : memref<2x1x96xf32, #tpu.memory_space<vmem>>, vector<1x1x96xf32>
    %414 = vector.shape_cast %413 : vector<1x1x96xf32> to vector<1x96xf32>
    %415 = vector.broadcast %414 : vector<1x96xf32> to vector<8x96xf32>
    %416 = arith.addf %412, %415 : vector<8x96xf32>
    %c1_118 = arith.constant 1 : index
    %c0_119 = arith.constant 0 : index
    %c0_120 = arith.constant 0 : index
    %417 = vector.load %arg6[%c1_118, %c0_119, %c0_120] : memref<2x32x96xf32, #tpu.memory_space<vmem>>, vector<1x32x96xf32>
    %418 = vector.shape_cast %417 : vector<1x32x96xf32> to vector<32x96xf32>
    %c1_121 = arith.constant 1 : index
    %c0_122 = arith.constant 0 : index
    %c0_123 = arith.constant 0 : index
    %419 = vector.load %arg8[%c1_121, %c0_122, %c0_123] : memref<2x1x96xf32, #tpu.memory_space<vmem>>, vector<1x1x96xf32>
    %420 = vector.shape_cast %419 : vector<1x1x96xf32> to vector<1x96xf32>
    %cst_124 = arith.constant 0.000000e+00 : f32
    %421 = vector.broadcast %cst_124 : f32 to vector<2x32xf32>
    %422 = vector.extract_strided_slice %416 {offsets = [6, 0], sizes = [2, 96], strides = [1, 1]} : vector<8x96xf32> to vector<2x96xf32>
    %cst_125 = arith.constant dense<0.000000e+00> : vector<2x96xf32>
    %423 = tpu.matmul %421, %418, %cst_125 {dimension_numbers = #tpu.dot_dimension_numbers<[1], [0], [0], [1], [0, 0, 1, 1], [], []>} : vector<2x32xf32>, vector<32x96xf32>, vector<2x96xf32> -> vector<2x96xf32>
    %424 = vector.broadcast %420 : vector<1x96xf32> to vector<2x96xf32>
    %425 = arith.addf %423, %424 : vector<2x96xf32>
    %426 = vector.extract_strided_slice %422 {offsets = [0, 0], sizes = [2, 32], strides = [1, 1]} : vector<2x96xf32> to vector<2x32xf32>
    %427 = vector.extract_strided_slice %425 {offsets = [0, 0], sizes = [2, 32], strides = [1, 1]} : vector<2x96xf32> to vector<2x32xf32>
    %428 = arith.addf %426, %427 : vector<2x32xf32>
    %429 = arith.negf %428 : vector<2x32xf32>
    %430 = math.exp %429 : vector<2x32xf32>
    %cst_126 = arith.constant 1.000000e+00 : f32
    %431 = vector.broadcast %cst_126 : f32 to vector<2x32xf32>
    %432 = arith.addf %431, %430 : vector<2x32xf32>
    %433 = arith.divf %431, %432 : vector<2x32xf32>
    %434 = vector.extract_strided_slice %422 {offsets = [0, 32], sizes = [2, 32], strides = [1, 1]} : vector<2x96xf32> to vector<2x32xf32>
    %435 = vector.extract_strided_slice %425 {offsets = [0, 32], sizes = [2, 32], strides = [1, 1]} : vector<2x96xf32> to vector<2x32xf32>
    %436 = arith.addf %434, %435 : vector<2x32xf32>
    %437 = arith.negf %436 : vector<2x32xf32>
    %438 = math.exp %437 : vector<2x32xf32>
    %cst_127 = arith.constant 1.000000e+00 : f32
    %439 = vector.broadcast %cst_127 : f32 to vector<2x32xf32>
    %440 = arith.addf %439, %438 : vector<2x32xf32>
    %441 = arith.divf %439, %440 : vector<2x32xf32>
    %442 = vector.extract_strided_slice %422 {offsets = [0, 64], sizes = [2, 32], strides = [1, 1]} : vector<2x96xf32> to vector<2x32xf32>
    %443 = vector.extract_strided_slice %425 {offsets = [0, 64], sizes = [2, 32], strides = [1, 1]} : vector<2x96xf32> to vector<2x32xf32>
    %444 = arith.mulf %433, %443 : vector<2x32xf32>
    %445 = arith.addf %442, %444 : vector<2x32xf32>
    %446 = math.tanh %445 : vector<2x32xf32>
    %cst_128 = arith.constant 1.000000e+00 : f32
    %447 = vector.broadcast %cst_128 : f32 to vector<2x32xf32>
    %448 = arith.subf %447, %441 : vector<2x32xf32>
    %449 = arith.mulf %448, %446 : vector<2x32xf32>
    %450 = arith.mulf %441, %421 : vector<2x32xf32>
    %451 = arith.addf %449, %450 : vector<2x32xf32>
    %c6_129 = arith.constant 6 : index
    %c32_130 = arith.constant 32 : index
    %452 = vector.load %arg20[%c6_129, %c32_130] : memref<8x64xf32, #tpu.memory_space<vmem>>, vector<2x32xf32>
    tpu.vector_store %arg20[%c6_129, %c32_130], %451 {strides = array<i32>} : memref<8x64xf32, #tpu.memory_space<vmem>>, vector<2x32xf32>,
    %453 = vector.extract_strided_slice %416 {offsets = [4, 0], sizes = [2, 96], strides = [1, 1]} : vector<8x96xf32> to vector<2x96xf32>
    %cst_131 = arith.constant dense<0.000000e+00> : vector<2x96xf32>
    %454 = tpu.matmul %451, %418, %cst_131 {dimension_numbers = #tpu.dot_dimension_numbers<[1], [0], [0], [1], [0, 0, 1, 1], [], []>} : vector<2x32xf32>, vector<32x96xf32>, vector<2x96xf32> -> vector<2x96xf32>
    %455 = vector.broadcast %420 : vector<1x96xf32> to vector<2x96xf32>
    %456 = arith.addf %454, %455 : vector<2x96xf32>
    %457 = vector.extract_strided_slice %453 {offsets = [0, 0], sizes = [2, 32], strides = [1, 1]} : vector<2x96xf32> to vector<2x32xf32>
    %458 = vector.extract_strided_slice %456 {offsets = [0, 0], sizes = [2, 32], strides = [1, 1]} : vector<2x96xf32> to vector<2x32xf32>
    %459 = arith.addf %457, %458 : vector<2x32xf32>
    %460 = arith.negf %459 : vector<2x32xf32>
    %461 = math.exp %460 : vector<2x32xf32>
    %cst_132 = arith.constant 1.000000e+00 : f32
    %462 = vector.broadcast %cst_132 : f32 to vector<2x32xf32>
    %463 = arith.addf %462, %461 : vector<2x32xf32>
    %464 = arith.divf %462, %463 : vector<2x32xf32>
    %465 = vector.extract_strided_slice %453 {offsets = [0, 32], sizes = [2, 32], strides = [1, 1]} : vector<2x96xf32> to vector<2x32xf32>
    %466 = vector.extract_strided_slice %456 {offsets = [0, 32], sizes = [2, 32], strides = [1, 1]} : vector<2x96xf32> to vector<2x32xf32>
    %467 = arith.addf %465, %466 : vector<2x32xf32>
    %468 = arith.negf %467 : vector<2x32xf32>
    %469 = math.exp %468 : vector<2x32xf32>
    %cst_133 = arith.constant 1.000000e+00 : f32
    %470 = vector.broadcast %cst_133 : f32 to vector<2x32xf32>
    %471 = arith.addf %470, %469 : vector<2x32xf32>
    %472 = arith.divf %470, %471 : vector<2x32xf32>
    %473 = vector.extract_strided_slice %453 {offsets = [0, 64], sizes = [2, 32], strides = [1, 1]} : vector<2x96xf32> to vector<2x32xf32>
    %474 = vector.extract_strided_slice %456 {offsets = [0, 64], sizes = [2, 32], strides = [1, 1]} : vector<2x96xf32> to vector<2x32xf32>
    %475 = arith.mulf %464, %474 : vector<2x32xf32>
    %476 = arith.addf %473, %475 : vector<2x32xf32>
    %477 = math.tanh %476 : vector<2x32xf32>
    %cst_134 = arith.constant 1.000000e+00 : f32
    %478 = vector.broadcast %cst_134 : f32 to vector<2x32xf32>
    %479 = arith.subf %478, %472 : vector<2x32xf32>
    %480 = arith.mulf %479, %477 : vector<2x32xf32>
    %481 = arith.mulf %472, %451 : vector<2x32xf32>
    %482 = arith.addf %480, %481 : vector<2x32xf32>
    %c4_135 = arith.constant 4 : index
    %c32_136 = arith.constant 32 : index
    %483 = vector.load %arg20[%c4_135, %c32_136] : memref<8x64xf32, #tpu.memory_space<vmem>>, vector<2x32xf32>
    tpu.vector_store %arg20[%c4_135, %c32_136], %482 {strides = array<i32>} : memref<8x64xf32, #tpu.memory_space<vmem>>, vector<2x32xf32>,
    %484 = vector.extract_strided_slice %416 {offsets = [2, 0], sizes = [2, 96], strides = [1, 1]} : vector<8x96xf32> to vector<2x96xf32>
    %cst_137 = arith.constant dense<0.000000e+00> : vector<2x96xf32>
    %485 = tpu.matmul %482, %418, %cst_137 {dimension_numbers = #tpu.dot_dimension_numbers<[1], [0], [0], [1], [0, 0, 1, 1], [], []>} : vector<2x32xf32>, vector<32x96xf32>, vector<2x96xf32> -> vector<2x96xf32>
    %486 = vector.broadcast %420 : vector<1x96xf32> to vector<2x96xf32>
    %487 = arith.addf %485, %486 : vector<2x96xf32>
    %488 = vector.extract_strided_slice %484 {offsets = [0, 0], sizes = [2, 32], strides = [1, 1]} : vector<2x96xf32> to vector<2x32xf32>
    %489 = vector.extract_strided_slice %487 {offsets = [0, 0], sizes = [2, 32], strides = [1, 1]} : vector<2x96xf32> to vector<2x32xf32>
    %490 = arith.addf %488, %489 : vector<2x32xf32>
    %491 = arith.negf %490 : vector<2x32xf32>
    %492 = math.exp %491 : vector<2x32xf32>
    %cst_138 = arith.constant 1.000000e+00 : f32
    %493 = vector.broadcast %cst_138 : f32 to vector<2x32xf32>
    %494 = arith.addf %493, %492 : vector<2x32xf32>
    %495 = arith.divf %493, %494 : vector<2x32xf32>
    %496 = vector.extract_strided_slice %484 {offsets = [0, 32], sizes = [2, 32], strides = [1, 1]} : vector<2x96xf32> to vector<2x32xf32>
    %497 = vector.extract_strided_slice %487 {offsets = [0, 32], sizes = [2, 32], strides = [1, 1]} : vector<2x96xf32> to vector<2x32xf32>
    %498 = arith.addf %496, %497 : vector<2x32xf32>
    %499 = arith.negf %498 : vector<2x32xf32>
    %500 = math.exp %499 : vector<2x32xf32>
    %cst_139 = arith.constant 1.000000e+00 : f32
    %501 = vector.broadcast %cst_139 : f32 to vector<2x32xf32>
    %502 = arith.addf %501, %500 : vector<2x32xf32>
    %503 = arith.divf %501, %502 : vector<2x32xf32>
    %504 = vector.extract_strided_slice %484 {offsets = [0, 64], sizes = [2, 32], strides = [1, 1]} : vector<2x96xf32> to vector<2x32xf32>
    %505 = vector.extract_strided_slice %487 {offsets = [0, 64], sizes = [2, 32], strides = [1, 1]} : vector<2x96xf32> to vector<2x32xf32>
    %506 = arith.mulf %495, %505 : vector<2x32xf32>
    %507 = arith.addf %504, %506 : vector<2x32xf32>
    %508 = math.tanh %507 : vector<2x32xf32>
    %cst_140 = arith.constant 1.000000e+00 : f32
    %509 = vector.broadcast %cst_140 : f32 to vector<2x32xf32>
    %510 = arith.subf %509, %503 : vector<2x32xf32>
    %511 = arith.mulf %510, %508 : vector<2x32xf32>
    %512 = arith.mulf %503, %482 : vector<2x32xf32>
    %513 = arith.addf %511, %512 : vector<2x32xf32>
    %c2_141 = arith.constant 2 : index
    %c32_142 = arith.constant 32 : index
    %514 = vector.load %arg20[%c2_141, %c32_142] : memref<8x64xf32, #tpu.memory_space<vmem>>, vector<2x32xf32>
    tpu.vector_store %arg20[%c2_141, %c32_142], %513 {strides = array<i32>} : memref<8x64xf32, #tpu.memory_space<vmem>>, vector<2x32xf32>,
    %515 = vector.extract_strided_slice %416 {offsets = [0, 0], sizes = [2, 96], strides = [1, 1]} : vector<8x96xf32> to vector<2x96xf32>
    %cst_143 = arith.constant dense<0.000000e+00> : vector<2x96xf32>
    %516 = tpu.matmul %513, %418, %cst_143 {dimension_numbers = #tpu.dot_dimension_numbers<[1], [0], [0], [1], [0, 0, 1, 1], [], []>} : vector<2x32xf32>, vector<32x96xf32>, vector<2x96xf32> -> vector<2x96xf32>
    %517 = vector.broadcast %420 : vector<1x96xf32> to vector<2x96xf32>
    %518 = arith.addf %516, %517 : vector<2x96xf32>
    %519 = vector.extract_strided_slice %515 {offsets = [0, 0], sizes = [2, 32], strides = [1, 1]} : vector<2x96xf32> to vector<2x32xf32>
    %520 = vector.extract_strided_slice %518 {offsets = [0, 0], sizes = [2, 32], strides = [1, 1]} : vector<2x96xf32> to vector<2x32xf32>
    %521 = arith.addf %519, %520 : vector<2x32xf32>
    %522 = arith.negf %521 : vector<2x32xf32>
    %523 = math.exp %522 : vector<2x32xf32>
    %cst_144 = arith.constant 1.000000e+00 : f32
    %524 = vector.broadcast %cst_144 : f32 to vector<2x32xf32>
    %525 = arith.addf %524, %523 : vector<2x32xf32>
    %526 = arith.divf %524, %525 : vector<2x32xf32>
    %527 = vector.extract_strided_slice %515 {offsets = [0, 32], sizes = [2, 32], strides = [1, 1]} : vector<2x96xf32> to vector<2x32xf32>
    %528 = vector.extract_strided_slice %518 {offsets = [0, 32], sizes = [2, 32], strides = [1, 1]} : vector<2x96xf32> to vector<2x32xf32>
    %529 = arith.addf %527, %528 : vector<2x32xf32>
    %530 = arith.negf %529 : vector<2x32xf32>
    %531 = math.exp %530 : vector<2x32xf32>
    %cst_145 = arith.constant 1.000000e+00 : f32
    %532 = vector.broadcast %cst_145 : f32 to vector<2x32xf32>
    %533 = arith.addf %532, %531 : vector<2x32xf32>
    %534 = arith.divf %532, %533 : vector<2x32xf32>
    %535 = vector.extract_strided_slice %515 {offsets = [0, 64], sizes = [2, 32], strides = [1, 1]} : vector<2x96xf32> to vector<2x32xf32>
    %536 = vector.extract_strided_slice %518 {offsets = [0, 64], sizes = [2, 32], strides = [1, 1]} : vector<2x96xf32> to vector<2x32xf32>
    %537 = arith.mulf %526, %536 : vector<2x32xf32>
    %538 = arith.addf %535, %537 : vector<2x32xf32>
    %539 = math.tanh %538 : vector<2x32xf32>
    %cst_146 = arith.constant 1.000000e+00 : f32
    %540 = vector.broadcast %cst_146 : f32 to vector<2x32xf32>
    %541 = arith.subf %540, %534 : vector<2x32xf32>
    %542 = arith.mulf %541, %539 : vector<2x32xf32>
    %543 = arith.mulf %534, %513 : vector<2x32xf32>
    %544 = arith.addf %542, %543 : vector<2x32xf32>
    %c0_147 = arith.constant 0 : index
    %c32_148 = arith.constant 32 : index
    %545 = vector.load %arg20[%c0_147, %c32_148] : memref<8x64xf32, #tpu.memory_space<vmem>>, vector<2x32xf32>
    tpu.vector_store %arg20[%c0_147, %c32_148], %544 {strides = array<i32>} : memref<8x64xf32, #tpu.memory_space<vmem>>, vector<2x32xf32>,
    %c0_149 = arith.constant 0 : index
    %c0_150 = arith.constant 0 : index
    %546 = vector.load %arg20[%c0_149, %c0_150] : memref<8x64xf32, #tpu.memory_space<vmem>>, vector<8x64xf32>
    %547 = math.tanh %546 : vector<8x64xf32>
    %548 = vector.extract_strided_slice %547 {offsets = [0, 32], sizes = [8, 32], strides = [1, 1]} : vector<8x64xf32> to vector<8x32xf32>
    %549 = vector.extract_strided_slice %547 {offsets = [0, 0], sizes = [8, 32], strides = [1, 1]} : vector<8x64xf32> to vector<8x32xf32>
    %550 = arith.mulf %548, %549 : vector<8x32xf32>
    %551 = vector.extract_strided_slice %550 {offsets = [0, 0], sizes = [1, 32], strides = [1, 1]} : vector<8x32xf32> to vector<1x32xf32>
    %c0_151 = arith.constant 0 : index
    %c0_152 = arith.constant 0 : index
    %552 = vector.load %arg21[%c0_151, %c0_152] : memref<8x32xf32, #tpu.memory_space<vmem>>, vector<1x32xf32>
    tpu.vector_store %arg21[%c0_151, %c0_152], %551 {strides = array<i32>} : memref<8x32xf32, #tpu.memory_space<vmem>>, vector<1x32xf32>,
    %553 = vector.extract_strided_slice %550 {offsets = [2, 0], sizes = [1, 32], strides = [1, 1]} : vector<8x32xf32> to vector<1x32xf32>
    %c1_153 = arith.constant 1 : index
    %c0_154 = arith.constant 0 : index
    %554 = vector.load %arg21[%c1_153, %c0_154] : memref<8x32xf32, #tpu.memory_space<vmem>>, vector<1x32xf32>
    tpu.vector_store %arg21[%c1_153, %c0_154], %553 {strides = array<i32>} : memref<8x32xf32, #tpu.memory_space<vmem>>, vector<1x32xf32>,
    %555 = vector.extract_strided_slice %550 {offsets = [4, 0], sizes = [1, 32], strides = [1, 1]} : vector<8x32xf32> to vector<1x32xf32>
    %c2_155 = arith.constant 2 : index
    %c0_156 = arith.constant 0 : index
    %556 = vector.load %arg21[%c2_155, %c0_156] : memref<8x32xf32, #tpu.memory_space<vmem>>, vector<1x32xf32>
    tpu.vector_store %arg21[%c2_155, %c0_156], %555 {strides = array<i32>} : memref<8x32xf32, #tpu.memory_space<vmem>>, vector<1x32xf32>,
    %557 = vector.extract_strided_slice %550 {offsets = [6, 0], sizes = [1, 32], strides = [1, 1]} : vector<8x32xf32> to vector<1x32xf32>
    %c3 = arith.constant 3 : index
    %c0_157 = arith.constant 0 : index
    %558 = vector.load %arg21[%c3, %c0_157] : memref<8x32xf32, #tpu.memory_space<vmem>>, vector<1x32xf32>
    tpu.vector_store %arg21[%c3, %c0_157], %557 {strides = array<i32>} : memref<8x32xf32, #tpu.memory_space<vmem>>, vector<1x32xf32>,
    %559 = vector.extract_strided_slice %550 {offsets = [1, 0], sizes = [1, 32], strides = [1, 1]} : vector<8x32xf32> to vector<1x32xf32>
    %c4_158 = arith.constant 4 : index
    %c0_159 = arith.constant 0 : index
    %560 = vector.load %arg21[%c4_158, %c0_159] : memref<8x32xf32, #tpu.memory_space<vmem>>, vector<1x32xf32>
    tpu.vector_store %arg21[%c4_158, %c0_159], %559 {strides = array<i32>} : memref<8x32xf32, #tpu.memory_space<vmem>>, vector<1x32xf32>,
    %561 = vector.extract_strided_slice %550 {offsets = [3, 0], sizes = [1, 32], strides = [1, 1]} : vector<8x32xf32> to vector<1x32xf32>
    %c5 = arith.constant 5 : index
    %c0_160 = arith.constant 0 : index
    %562 = vector.load %arg21[%c5, %c0_160] : memref<8x32xf32, #tpu.memory_space<vmem>>, vector<1x32xf32>
    tpu.vector_store %arg21[%c5, %c0_160], %561 {strides = array<i32>} : memref<8x32xf32, #tpu.memory_space<vmem>>, vector<1x32xf32>,
    %563 = vector.extract_strided_slice %550 {offsets = [5, 0], sizes = [1, 32], strides = [1, 1]} : vector<8x32xf32> to vector<1x32xf32>
    %c6_161 = arith.constant 6 : index
    %c0_162 = arith.constant 0 : index
    %564 = vector.load %arg21[%c6_161, %c0_162] : memref<8x32xf32, #tpu.memory_space<vmem>>, vector<1x32xf32>
    tpu.vector_store %arg21[%c6_161, %c0_162], %563 {strides = array<i32>} : memref<8x32xf32, #tpu.memory_space<vmem>>, vector<1x32xf32>,
    %565 = vector.extract_strided_slice %550 {offsets = [7, 0], sizes = [1, 32], strides = [1, 1]} : vector<8x32xf32> to vector<1x32xf32>
    %c7 = arith.constant 7 : index
    %c0_163 = arith.constant 0 : index
    %566 = vector.load %arg21[%c7, %c0_163] : memref<8x32xf32, #tpu.memory_space<vmem>>, vector<1x32xf32>
    tpu.vector_store %arg21[%c7, %c0_163], %565 {strides = array<i32>} : memref<8x32xf32, #tpu.memory_space<vmem>>, vector<1x32xf32>,
    %c0_164 = arith.constant 0 : index
    %c0_165 = arith.constant 0 : index
    %567 = vector.load %arg21[%c0_164, %c0_165] : memref<8x32xf32, #tpu.memory_space<vmem>>, vector<8x32xf32>
    %c0_166 = arith.constant 0 : index
    %c0_167 = arith.constant 0 : index
    %568 = vector.load %arg9[%c0_166, %c0_167] : memref<32x96xf32, #tpu.memory_space<vmem>>, vector<32x96xf32>
    %cst_168 = arith.constant dense<0.000000e+00> : vector<8x96xf32>
    %569 = tpu.matmul %567, %568, %cst_168 {dimension_numbers = #tpu.dot_dimension_numbers<[1], [0], [0], [1], [0, 0, 1, 1], [], []>} : vector<8x32xf32>, vector<32x96xf32>, vector<8x96xf32> -> vector<8x96xf32>
    %c0_169 = arith.constant 0 : index
    %c0_170 = arith.constant 0 : index
    %570 = vector.load %arg10[%c0_169, %c0_170] : memref<1x96xf32, #tpu.memory_space<vmem>>, vector<1x96xf32>
    %571 = vector.broadcast %570 : vector<1x96xf32> to vector<8x96xf32>
    %572 = arith.addf %569, %571 : vector<8x96xf32>
    %573 = vector.extract_strided_slice %572 {offsets = [0, 0], sizes = [8, 32], strides = [1, 1]} : vector<8x96xf32> to vector<8x32xf32>
    %cst_171 = arith.constant 0.353553385 : f32
    %574 = vector.broadcast %cst_171 : f32 to vector<8x32xf32>
    %575 = arith.mulf %573, %574 : vector<8x32xf32>
    %576 = vector.extract_strided_slice %572 {offsets = [0, 32], sizes = [8, 32], strides = [1, 1]} : vector<8x96xf32> to vector<8x32xf32>
    %577 = vector.extract_strided_slice %572 {offsets = [0, 64], sizes = [8, 32], strides = [1, 1]} : vector<8x96xf32> to vector<8x32xf32>
    %578 = vector.extract_strided_slice %575 {offsets = [0, 0], sizes = [4, 32], strides = [1, 1]} : vector<8x32xf32> to vector<4x32xf32>
    %579 = vector.extract_strided_slice %576 {offsets = [0, 0], sizes = [4, 32], strides = [1, 1]} : vector<8x32xf32> to vector<4x32xf32>
    %580 = vector.extract_strided_slice %577 {offsets = [0, 0], sizes = [4, 32], strides = [1, 1]} : vector<8x32xf32> to vector<4x32xf32>
    %581 = vector.extract_strided_slice %578 {offsets = [0, 0], sizes = [4, 8], strides = [1, 1]} : vector<4x32xf32> to vector<4x8xf32>
    %582 = vector.extract_strided_slice %579 {offsets = [0, 0], sizes = [4, 8], strides = [1, 1]} : vector<4x32xf32> to vector<4x8xf32>
    %583 = vector.extract_strided_slice %580 {offsets = [0, 0], sizes = [4, 8], strides = [1, 1]} : vector<4x32xf32> to vector<4x8xf32>
    %cst_172 = arith.constant dense<0.000000e+00> : vector<4x4xf32>
    %584 = tpu.matmul %581, %582, %cst_172 {dimension_numbers = #tpu.dot_dimension_numbers<[1], [1], [0], [0], [0, 0, 1, 0], [], []>} : vector<4x8xf32>, vector<4x8xf32>, vector<4x4xf32> -> vector<4x4xf32>
    %cst_173 = arith.constant dense<0xFF800000> : vector<4xf32>
    %585 = vector.multi_reduction <maximumf>, %584, %cst_173 [1] : vector<4x4xf32> to vector<4xf32>
    %586 = vector.shape_cast %585 : vector<4xf32> to vector<4x1xf32>
    %587 = vector.broadcast %586 : vector<4x1xf32> to vector<4x4xf32>
    %588 = arith.subf %584, %587 : vector<4x4xf32>
    %589 = math.exp %588 : vector<4x4xf32>
    %cst_174 = arith.constant dense<0.000000e+00> : vector<4xf32>
    %590 = vector.multi_reduction <add>, %589, %cst_174 [1] : vector<4x4xf32> to vector<4xf32>
    %591 = vector.shape_cast %590 : vector<4xf32> to vector<4x1xf32>
    %592 = tpu.reciprocal %591 {approx = true} : vector<4x1xf32> -> vector<4x1xf32>
    %593 = vector.broadcast %592 : vector<4x1xf32> to vector<4x4xf32>
    %594 = arith.mulf %589, %593 : vector<4x4xf32>
    %cst_175 = arith.constant dense<0.000000e+00> : vector<4x8xf32>
    %595 = tpu.matmul %594, %583, %cst_175 {dimension_numbers = #tpu.dot_dimension_numbers<[1], [0], [0], [1], [0, 0, 1, 1], [], []>} : vector<4x4xf32>, vector<4x8xf32>, vector<4x8xf32> -> vector<4x8xf32>
    %c0_176 = arith.constant 0 : index
    %c0_177 = arith.constant 0 : index
    %596 = vector.load %arg22[%c0_176, %c0_177] : memref<8x32xf32, #tpu.memory_space<vmem>>, vector<4x8xf32>
    tpu.vector_store %arg22[%c0_176, %c0_177], %595 {strides = array<i32>} : memref<8x32xf32, #tpu.memory_space<vmem>>, vector<4x8xf32>,
    %597 = vector.extract_strided_slice %578 {offsets = [0, 8], sizes = [4, 8], strides = [1, 1]} : vector<4x32xf32> to vector<4x8xf32>
    %598 = vector.extract_strided_slice %579 {offsets = [0, 8], sizes = [4, 8], strides = [1, 1]} : vector<4x32xf32> to vector<4x8xf32>
    %599 = vector.extract_strided_slice %580 {offsets = [0, 8], sizes = [4, 8], strides = [1, 1]} : vector<4x32xf32> to vector<4x8xf32>
    %cst_178 = arith.constant dense<0.000000e+00> : vector<4x4xf32>
    %600 = tpu.matmul %597, %598, %cst_178 {dimension_numbers = #tpu.dot_dimension_numbers<[1], [1], [0], [0], [0, 0, 1, 0], [], []>} : vector<4x8xf32>, vector<4x8xf32>, vector<4x4xf32> -> vector<4x4xf32>
    %cst_179 = arith.constant dense<0xFF800000> : vector<4xf32>
    %601 = vector.multi_reduction <maximumf>, %600, %cst_179 [1] : vector<4x4xf32> to vector<4xf32>
    %602 = vector.shape_cast %601 : vector<4xf32> to vector<4x1xf32>
    %603 = vector.broadcast %602 : vector<4x1xf32> to vector<4x4xf32>
    %604 = arith.subf %600, %603 : vector<4x4xf32>
    %605 = math.exp %604 : vector<4x4xf32>
    %cst_180 = arith.constant dense<0.000000e+00> : vector<4xf32>
    %606 = vector.multi_reduction <add>, %605, %cst_180 [1] : vector<4x4xf32> to vector<4xf32>
    %607 = vector.shape_cast %606 : vector<4xf32> to vector<4x1xf32>
    %608 = tpu.reciprocal %607 {approx = true} : vector<4x1xf32> -> vector<4x1xf32>
    %609 = vector.broadcast %608 : vector<4x1xf32> to vector<4x4xf32>
    %610 = arith.mulf %605, %609 : vector<4x4xf32>
    %cst_181 = arith.constant dense<0.000000e+00> : vector<4x8xf32>
    %611 = tpu.matmul %610, %599, %cst_181 {dimension_numbers = #tpu.dot_dimension_numbers<[1], [0], [0], [1], [0, 0, 1, 1], [], []>} : vector<4x4xf32>, vector<4x8xf32>, vector<4x8xf32> -> vector<4x8xf32>
    %c0_182 = arith.constant 0 : index
    %c8 = arith.constant 8 : index
    %612 = vector.load %arg22[%c0_182, %c8] : memref<8x32xf32, #tpu.memory_space<vmem>>, vector<4x8xf32>
    tpu.vector_store %arg22[%c0_182, %c8], %611 {strides = array<i32>} : memref<8x32xf32, #tpu.memory_space<vmem>>, vector<4x8xf32>,
    %613 = vector.extract_strided_slice %578 {offsets = [0, 16], sizes = [4, 8], strides = [1, 1]} : vector<4x32xf32> to vector<4x8xf32>
    %614 = vector.extract_strided_slice %579 {offsets = [0, 16], sizes = [4, 8], strides = [1, 1]} : vector<4x32xf32> to vector<4x8xf32>
    %615 = vector.extract_strided_slice %580 {offsets = [0, 16], sizes = [4, 8], strides = [1, 1]} : vector<4x32xf32> to vector<4x8xf32>
    %cst_183 = arith.constant dense<0.000000e+00> : vector<4x4xf32>
    %616 = tpu.matmul %613, %614, %cst_183 {dimension_numbers = #tpu.dot_dimension_numbers<[1], [1], [0], [0], [0, 0, 1, 0], [], []>} : vector<4x8xf32>, vector<4x8xf32>, vector<4x4xf32> -> vector<4x4xf32>
    %cst_184 = arith.constant dense<0xFF800000> : vector<4xf32>
    %617 = vector.multi_reduction <maximumf>, %616, %cst_184 [1] : vector<4x4xf32> to vector<4xf32>
    %618 = vector.shape_cast %617 : vector<4xf32> to vector<4x1xf32>
    %619 = vector.broadcast %618 : vector<4x1xf32> to vector<4x4xf32>
    %620 = arith.subf %616, %619 : vector<4x4xf32>
    %621 = math.exp %620 : vector<4x4xf32>
    %cst_185 = arith.constant dense<0.000000e+00> : vector<4xf32>
    %622 = vector.multi_reduction <add>, %621, %cst_185 [1] : vector<4x4xf32> to vector<4xf32>
    %623 = vector.shape_cast %622 : vector<4xf32> to vector<4x1xf32>
    %624 = tpu.reciprocal %623 {approx = true} : vector<4x1xf32> -> vector<4x1xf32>
    %625 = vector.broadcast %624 : vector<4x1xf32> to vector<4x4xf32>
    %626 = arith.mulf %621, %625 : vector<4x4xf32>
    %cst_186 = arith.constant dense<0.000000e+00> : vector<4x8xf32>
    %627 = tpu.matmul %626, %615, %cst_186 {dimension_numbers = #tpu.dot_dimension_numbers<[1], [0], [0], [1], [0, 0, 1, 1], [], []>} : vector<4x4xf32>, vector<4x8xf32>, vector<4x8xf32> -> vector<4x8xf32>
    %c0_187 = arith.constant 0 : index
    %c16 = arith.constant 16 : index
    %628 = vector.load %arg22[%c0_187, %c16] : memref<8x32xf32, #tpu.memory_space<vmem>>, vector<4x8xf32>
    tpu.vector_store %arg22[%c0_187, %c16], %627 {strides = array<i32>} : memref<8x32xf32, #tpu.memory_space<vmem>>, vector<4x8xf32>,
    %629 = vector.extract_strided_slice %578 {offsets = [0, 24], sizes = [4, 8], strides = [1, 1]} : vector<4x32xf32> to vector<4x8xf32>
    %630 = vector.extract_strided_slice %579 {offsets = [0, 24], sizes = [4, 8], strides = [1, 1]} : vector<4x32xf32> to vector<4x8xf32>
    %631 = vector.extract_strided_slice %580 {offsets = [0, 24], sizes = [4, 8], strides = [1, 1]} : vector<4x32xf32> to vector<4x8xf32>
    %cst_188 = arith.constant dense<0.000000e+00> : vector<4x4xf32>
    %632 = tpu.matmul %629, %630, %cst_188 {dimension_numbers = #tpu.dot_dimension_numbers<[1], [1], [0], [0], [0, 0, 1, 0], [], []>} : vector<4x8xf32>, vector<4x8xf32>, vector<4x4xf32> -> vector<4x4xf32>
    %cst_189 = arith.constant dense<0xFF800000> : vector<4xf32>
    %633 = vector.multi_reduction <maximumf>, %632, %cst_189 [1] : vector<4x4xf32> to vector<4xf32>
    %634 = vector.shape_cast %633 : vector<4xf32> to vector<4x1xf32>
    %635 = vector.broadcast %634 : vector<4x1xf32> to vector<4x4xf32>
    %636 = arith.subf %632, %635 : vector<4x4xf32>
    %637 = math.exp %636 : vector<4x4xf32>
    %cst_190 = arith.constant dense<0.000000e+00> : vector<4xf32>
    %638 = vector.multi_reduction <add>, %637, %cst_190 [1] : vector<4x4xf32> to vector<4xf32>
    %639 = vector.shape_cast %638 : vector<4xf32> to vector<4x1xf32>
    %640 = tpu.reciprocal %639 {approx = true} : vector<4x1xf32> -> vector<4x1xf32>
    %641 = vector.broadcast %640 : vector<4x1xf32> to vector<4x4xf32>
    %642 = arith.mulf %637, %641 : vector<4x4xf32>
    %cst_191 = arith.constant dense<0.000000e+00> : vector<4x8xf32>
    %643 = tpu.matmul %642, %631, %cst_191 {dimension_numbers = #tpu.dot_dimension_numbers<[1], [0], [0], [1], [0, 0, 1, 1], [], []>} : vector<4x4xf32>, vector<4x8xf32>, vector<4x8xf32> -> vector<4x8xf32>
    %c0_192 = arith.constant 0 : index
    %c24 = arith.constant 24 : index
    %644 = vector.load %arg22[%c0_192, %c24] : memref<8x32xf32, #tpu.memory_space<vmem>>, vector<4x8xf32>
    tpu.vector_store %arg22[%c0_192, %c24], %643 {strides = array<i32>} : memref<8x32xf32, #tpu.memory_space<vmem>>, vector<4x8xf32>,
    %645 = vector.extract_strided_slice %575 {offsets = [4, 0], sizes = [4, 32], strides = [1, 1]} : vector<8x32xf32> to vector<4x32xf32>
    %646 = vector.extract_strided_slice %576 {offsets = [4, 0], sizes = [4, 32], strides = [1, 1]} : vector<8x32xf32> to vector<4x32xf32>
    %647 = vector.extract_strided_slice %577 {offsets = [4, 0], sizes = [4, 32], strides = [1, 1]} : vector<8x32xf32> to vector<4x32xf32>
    %648 = vector.extract_strided_slice %645 {offsets = [0, 0], sizes = [4, 8], strides = [1, 1]} : vector<4x32xf32> to vector<4x8xf32>
    %649 = vector.extract_strided_slice %646 {offsets = [0, 0], sizes = [4, 8], strides = [1, 1]} : vector<4x32xf32> to vector<4x8xf32>
    %650 = vector.extract_strided_slice %647 {offsets = [0, 0], sizes = [4, 8], strides = [1, 1]} : vector<4x32xf32> to vector<4x8xf32>
    %cst_193 = arith.constant dense<0.000000e+00> : vector<4x4xf32>
    %651 = tpu.matmul %648, %649, %cst_193 {dimension_numbers = #tpu.dot_dimension_numbers<[1], [1], [0], [0], [0, 0, 1, 0], [], []>} : vector<4x8xf32>, vector<4x8xf32>, vector<4x4xf32> -> vector<4x4xf32>
    %cst_194 = arith.constant dense<0xFF800000> : vector<4xf32>
    %652 = vector.multi_reduction <maximumf>, %651, %cst_194 [1] : vector<4x4xf32> to vector<4xf32>
    %653 = vector.shape_cast %652 : vector<4xf32> to vector<4x1xf32>
    %654 = vector.broadcast %653 : vector<4x1xf32> to vector<4x4xf32>
    %655 = arith.subf %651, %654 : vector<4x4xf32>
    %656 = math.exp %655 : vector<4x4xf32>
    %cst_195 = arith.constant dense<0.000000e+00> : vector<4xf32>
    %657 = vector.multi_reduction <add>, %656, %cst_195 [1] : vector<4x4xf32> to vector<4xf32>
    %658 = vector.shape_cast %657 : vector<4xf32> to vector<4x1xf32>
    %659 = tpu.reciprocal %658 {approx = true} : vector<4x1xf32> -> vector<4x1xf32>
    %660 = vector.broadcast %659 : vector<4x1xf32> to vector<4x4xf32>
    %661 = arith.mulf %656, %660 : vector<4x4xf32>
    %cst_196 = arith.constant dense<0.000000e+00> : vector<4x8xf32>
    %662 = tpu.matmul %661, %650, %cst_196 {dimension_numbers = #tpu.dot_dimension_numbers<[1], [0], [0], [1], [0, 0, 1, 1], [], []>} : vector<4x4xf32>, vector<4x8xf32>, vector<4x8xf32> -> vector<4x8xf32>
    %c4_197 = arith.constant 4 : index
    %c0_198 = arith.constant 0 : index
    %663 = vector.load %arg22[%c4_197, %c0_198] : memref<8x32xf32, #tpu.memory_space<vmem>>, vector<4x8xf32>
    tpu.vector_store %arg22[%c4_197, %c0_198], %662 {strides = array<i32>} : memref<8x32xf32, #tpu.memory_space<vmem>>, vector<4x8xf32>,
    %664 = vector.extract_strided_slice %645 {offsets = [0, 8], sizes = [4, 8], strides = [1, 1]} : vector<4x32xf32> to vector<4x8xf32>
    %665 = vector.extract_strided_slice %646 {offsets = [0, 8], sizes = [4, 8], strides = [1, 1]} : vector<4x32xf32> to vector<4x8xf32>
    %666 = vector.extract_strided_slice %647 {offsets = [0, 8], sizes = [4, 8], strides = [1, 1]} : vector<4x32xf32> to vector<4x8xf32>
    %cst_199 = arith.constant dense<0.000000e+00> : vector<4x4xf32>
    %667 = tpu.matmul %664, %665, %cst_199 {dimension_numbers = #tpu.dot_dimension_numbers<[1], [1], [0], [0], [0, 0, 1, 0], [], []>} : vector<4x8xf32>, vector<4x8xf32>, vector<4x4xf32> -> vector<4x4xf32>
    %cst_200 = arith.constant dense<0xFF800000> : vector<4xf32>
    %668 = vector.multi_reduction <maximumf>, %667, %cst_200 [1] : vector<4x4xf32> to vector<4xf32>
    %669 = vector.shape_cast %668 : vector<4xf32> to vector<4x1xf32>
    %670 = vector.broadcast %669 : vector<4x1xf32> to vector<4x4xf32>
    %671 = arith.subf %667, %670 : vector<4x4xf32>
    %672 = math.exp %671 : vector<4x4xf32>
    %cst_201 = arith.constant dense<0.000000e+00> : vector<4xf32>
    %673 = vector.multi_reduction <add>, %672, %cst_201 [1] : vector<4x4xf32> to vector<4xf32>
    %674 = vector.shape_cast %673 : vector<4xf32> to vector<4x1xf32>
    %675 = tpu.reciprocal %674 {approx = true} : vector<4x1xf32> -> vector<4x1xf32>
    %676 = vector.broadcast %675 : vector<4x1xf32> to vector<4x4xf32>
    %677 = arith.mulf %672, %676 : vector<4x4xf32>
    %cst_202 = arith.constant dense<0.000000e+00> : vector<4x8xf32>
    %678 = tpu.matmul %677, %666, %cst_202 {dimension_numbers = #tpu.dot_dimension_numbers<[1], [0], [0], [1], [0, 0, 1, 1], [], []>} : vector<4x4xf32>, vector<4x8xf32>, vector<4x8xf32> -> vector<4x8xf32>
    %c4_203 = arith.constant 4 : index
    %c8_204 = arith.constant 8 : index
    %679 = vector.load %arg22[%c4_203, %c8_204] : memref<8x32xf32, #tpu.memory_space<vmem>>, vector<4x8xf32>
    tpu.vector_store %arg22[%c4_203, %c8_204], %678 {strides = array<i32>} : memref<8x32xf32, #tpu.memory_space<vmem>>, vector<4x8xf32>,
    %680 = vector.extract_strided_slice %645 {offsets = [0, 16], sizes = [4, 8], strides = [1, 1]} : vector<4x32xf32> to vector<4x8xf32>
    %681 = vector.extract_strided_slice %646 {offsets = [0, 16], sizes = [4, 8], strides = [1, 1]} : vector<4x32xf32> to vector<4x8xf32>
    %682 = vector.extract_strided_slice %647 {offsets = [0, 16], sizes = [4, 8], strides = [1, 1]} : vector<4x32xf32> to vector<4x8xf32>
    %cst_205 = arith.constant dense<0.000000e+00> : vector<4x4xf32>
    %683 = tpu.matmul %680, %681, %cst_205 {dimension_numbers = #tpu.dot_dimension_numbers<[1], [1], [0], [0], [0, 0, 1, 0], [], []>} : vector<4x8xf32>, vector<4x8xf32>, vector<4x4xf32> -> vector<4x4xf32>
    %cst_206 = arith.constant dense<0xFF800000> : vector<4xf32>
    %684 = vector.multi_reduction <maximumf>, %683, %cst_206 [1] : vector<4x4xf32> to vector<4xf32>
    %685 = vector.shape_cast %684 : vector<4xf32> to vector<4x1xf32>
    %686 = vector.broadcast %685 : vector<4x1xf32> to vector<4x4xf32>
    %687 = arith.subf %683, %686 : vector<4x4xf32>
    %688 = math.exp %687 : vector<4x4xf32>
    %cst_207 = arith.constant dense<0.000000e+00> : vector<4xf32>
    %689 = vector.multi_reduction <add>, %688, %cst_207 [1] : vector<4x4xf32> to vector<4xf32>
    %690 = vector.shape_cast %689 : vector<4xf32> to vector<4x1xf32>
    %691 = tpu.reciprocal %690 {approx = true} : vector<4x1xf32> -> vector<4x1xf32>
    %692 = vector.broadcast %691 : vector<4x1xf32> to vector<4x4xf32>
    %693 = arith.mulf %688, %692 : vector<4x4xf32>
    %cst_208 = arith.constant dense<0.000000e+00> : vector<4x8xf32>
    %694 = tpu.matmul %693, %682, %cst_208 {dimension_numbers = #tpu.dot_dimension_numbers<[1], [0], [0], [1], [0, 0, 1, 1], [], []>} : vector<4x4xf32>, vector<4x8xf32>, vector<4x8xf32> -> vector<4x8xf32>
    %c4_209 = arith.constant 4 : index
    %c16_210 = arith.constant 16 : index
    %695 = vector.load %arg22[%c4_209, %c16_210] : memref<8x32xf32, #tpu.memory_space<vmem>>, vector<4x8xf32>
    tpu.vector_store %arg22[%c4_209, %c16_210], %694 {strides = array<i32>} : memref<8x32xf32, #tpu.memory_space<vmem>>, vector<4x8xf32>,
    %696 = vector.extract_strided_slice %645 {offsets = [0, 24], sizes = [4, 8], strides = [1, 1]} : vector<4x32xf32> to vector<4x8xf32>
    %697 = vector.extract_strided_slice %646 {offsets = [0, 24], sizes = [4, 8], strides = [1, 1]} : vector<4x32xf32> to vector<4x8xf32>
    %698 = vector.extract_strided_slice %647 {offsets = [0, 24], sizes = [4, 8], strides = [1, 1]} : vector<4x32xf32> to vector<4x8xf32>
    %cst_211 = arith.constant dense<0.000000e+00> : vector<4x4xf32>
    %699 = tpu.matmul %696, %697, %cst_211 {dimension_numbers = #tpu.dot_dimension_numbers<[1], [1], [0], [0], [0, 0, 1, 0], [], []>} : vector<4x8xf32>, vector<4x8xf32>, vector<4x4xf32> -> vector<4x4xf32>
    %cst_212 = arith.constant dense<0xFF800000> : vector<4xf32>
    %700 = vector.multi_reduction <maximumf>, %699, %cst_212 [1] : vector<4x4xf32> to vector<4xf32>
    %701 = vector.shape_cast %700 : vector<4xf32> to vector<4x1xf32>
    %702 = vector.broadcast %701 : vector<4x1xf32> to vector<4x4xf32>
    %703 = arith.subf %699, %702 : vector<4x4xf32>
    %704 = math.exp %703 : vector<4x4xf32>
    %cst_213 = arith.constant dense<0.000000e+00> : vector<4xf32>
    %705 = vector.multi_reduction <add>, %704, %cst_213 [1] : vector<4x4xf32> to vector<4xf32>
    %706 = vector.shape_cast %705 : vector<4xf32> to vector<4x1xf32>
    %707 = tpu.reciprocal %706 {approx = true} : vector<4x1xf32> -> vector<4x1xf32>
    %708 = vector.broadcast %707 : vector<4x1xf32> to vector<4x4xf32>
    %709 = arith.mulf %704, %708 : vector<4x4xf32>
    %cst_214 = arith.constant dense<0.000000e+00> : vector<4x8xf32>
    %710 = tpu.matmul %709, %698, %cst_214 {dimension_numbers = #tpu.dot_dimension_numbers<[1], [0], [0], [1], [0, 0, 1, 1], [], []>} : vector<4x4xf32>, vector<4x8xf32>, vector<4x8xf32> -> vector<4x8xf32>
    %c4_215 = arith.constant 4 : index
    %c24_216 = arith.constant 24 : index
    %711 = vector.load %arg22[%c4_215, %c24_216] : memref<8x32xf32, #tpu.memory_space<vmem>>, vector<4x8xf32>
    tpu.vector_store %arg22[%c4_215, %c24_216], %710 {strides = array<i32>} : memref<8x32xf32, #tpu.memory_space<vmem>>, vector<4x8xf32>,
    %c0_217 = arith.constant 0 : index
    %c0_218 = arith.constant 0 : index
    %712 = vector.load %arg22[%c0_217, %c0_218] : memref<8x32xf32, #tpu.memory_space<vmem>>, vector<8x32xf32>
    %c0_219 = arith.constant 0 : index
    %c0_220 = arith.constant 0 : index
    %713 = vector.load %arg11[%c0_219, %c0_220] : memref<32x32xf32, #tpu.memory_space<vmem>>, vector<32x32xf32>
    %cst_221 = arith.constant dense<0.000000e+00> : vector<8x32xf32>
    %714 = tpu.matmul %712, %713, %cst_221 {dimension_numbers = #tpu.dot_dimension_numbers<[1], [0], [0], [1], [0, 0, 1, 1], [], []>} : vector<8x32xf32>, vector<32x32xf32>, vector<8x32xf32> -> vector<8x32xf32>
    %c0_222 = arith.constant 0 : index
    %c0_223 = arith.constant 0 : index
    %715 = vector.load %arg12[%c0_222, %c0_223] : memref<1x32xf32, #tpu.memory_space<vmem>>, vector<1x32xf32>
    %716 = vector.broadcast %715 : vector<1x32xf32> to vector<8x32xf32>
    %717 = arith.addf %714, %716 : vector<8x32xf32>
    %718 = arith.addf %717, %567 : vector<8x32xf32>
    %cst_224 = arith.constant dense<0.000000e+00> : vector<8xf32>
    %719 = vector.multi_reduction <add>, %718, %cst_224 [1] : vector<8x32xf32> to vector<8xf32>
    %720 = vector.shape_cast %719 : vector<8xf32> to vector<8x1xf32>
    %cst_225 = arith.constant 3.200000e+01 : f32
    %721 = vector.broadcast %cst_225 : f32 to vector<8x1xf32>
    %722 = arith.divf %720, %721 : vector<8x1xf32>
    %723 = vector.broadcast %722 : vector<8x1xf32> to vector<8x32xf32>
    %724 = arith.subf %718, %723 : vector<8x32xf32>
    %725 = arith.mulf %724, %724 : vector<8x32xf32>
    %cst_226 = arith.constant dense<0.000000e+00> : vector<8xf32>
    %726 = vector.multi_reduction <add>, %725, %cst_226 [1] : vector<8x32xf32> to vector<8xf32>
    %727 = vector.shape_cast %726 : vector<8xf32> to vector<8x1xf32>
    %cst_227 = arith.constant 3.200000e+01 : f32
    %728 = vector.broadcast %cst_227 : f32 to vector<8x1xf32>
    %729 = arith.divf %727, %728 : vector<8x1xf32>
    %730 = vector.broadcast %722 : vector<8x1xf32> to vector<8x32xf32>
    %731 = arith.subf %718, %730 : vector<8x32xf32>
    %cst_228 = arith.constant 9.99999974E-6 : f32
    %732 = vector.broadcast %cst_228 : f32 to vector<8x1xf32>
    %733 = arith.addf %729, %732 : vector<8x1xf32>
    %734 = math.rsqrt %733 : vector<8x1xf32>
    %735 = vector.broadcast %734 : vector<8x1xf32> to vector<8x32xf32>
    %736 = arith.mulf %731, %735 : vector<8x32xf32>
    %c0_229 = arith.constant 0 : index
    %c0_230 = arith.constant 0 : index
    %737 = vector.load %arg13[%c0_229, %c0_230] : memref<1x32xf32, #tpu.memory_space<vmem>>, vector<1x32xf32>
    %738 = vector.broadcast %737 : vector<1x32xf32> to vector<8x32xf32>
    %739 = arith.mulf %736, %738 : vector<8x32xf32>
    %c0_231 = arith.constant 0 : index
    %c0_232 = arith.constant 0 : index
    %740 = vector.load %arg14[%c0_231, %c0_232] : memref<1x32xf32, #tpu.memory_space<vmem>>, vector<1x32xf32>
    %741 = vector.broadcast %740 : vector<1x32xf32> to vector<8x32xf32>
    %742 = arith.addf %739, %741 : vector<8x32xf32>
    %c0_233 = arith.constant 0 : index
    %c0_234 = arith.constant 0 : index
    %743 = vector.load %arg15[%c0_233, %c0_234] : memref<32x32xf32, #tpu.memory_space<vmem>>, vector<32x32xf32>
    %cst_235 = arith.constant dense<0.000000e+00> : vector<8x32xf32>
    %744 = tpu.matmul %742, %743, %cst_235 {dimension_numbers = #tpu.dot_dimension_numbers<[1], [0], [0], [1], [0, 0, 1, 1], [], []>} : vector<8x32xf32>, vector<32x32xf32>, vector<8x32xf32> -> vector<8x32xf32>
    %c0_236 = arith.constant 0 : index
    %c0_237 = arith.constant 0 : index
    %745 = vector.load %arg16[%c0_236, %c0_237] : memref<1x32xf32, #tpu.memory_space<vmem>>, vector<1x32xf32>
    %746 = vector.broadcast %745 : vector<1x32xf32> to vector<8x32xf32>
    %747 = arith.addf %744, %746 : vector<8x32xf32>
    %c0_238 = arith.constant 0 : index
    %c0_239 = arith.constant 0 : index
    %748 = vector.load %arg17[%c0_238, %c0_239] : memref<32x27xf32, #tpu.memory_space<vmem>>, vector<32x27xf32>
    %cst_240 = arith.constant dense<0.000000e+00> : vector<8x27xf32>
    %749 = tpu.matmul %747, %748, %cst_240 {dimension_numbers = #tpu.dot_dimension_numbers<[1], [0], [0], [1], [0, 0, 1, 1], [], []>} : vector<8x32xf32>, vector<32x27xf32>, vector<8x27xf32> -> vector<8x27xf32>
    %c0_241 = arith.constant 0 : index
    %c0_242 = arith.constant 0 : index
    %750 = vector.load %arg18[%c0_241, %c0_242] : memref<1x27xf32, #tpu.memory_space<vmem>>, vector<1x27xf32>
    %751 = vector.broadcast %750 : vector<1x27xf32> to vector<8x27xf32>
    %752 = arith.addf %749, %751 : vector<8x27xf32>
    %753 = math.tanh %752 : vector<8x27xf32>
    %c0_243 = arith.constant 0 : index
    %c0_244 = arith.constant 0 : index
    %754 = vector.load %arg19[%c0_243, %c0_244] : memref<8x27xf32, #tpu.memory_space<vmem>>, vector<8x27xf32>
    tpu.vector_store %arg19[%c0_243, %c0_244], %753 {strides = array<i32>} : memref<8x27xf32, #tpu.memory_space<vmem>>, vector<8x27xf32>,
    return
  }
}

</mosaic_0001>

<llo_original>
// kernel: tile.18
$region0: #{tile.18}
  #allocation0 [shape = 's32[1]{0}', space=sflag, size = 0x4, scoped, tag = 'scoped memory for tile.18']
  %s0 = inlined_call_operand.vmem [shape: f32[16], index: 0, kind: input, shape index: {}]
  %s1 = inlined_call_operand.vmem [shape: f32[8,16], index: 1, kind: output, shape index: {}]
  // Predicated region
  $region2: #{tile.18} parent=0 // pred_check
    _
  $region3: #{tile.18} parent=0 // pred_check_branch
    %3 = sbr.rel (0) target = $region5
  $region4: #{tile.18} parent=0 // pred_region
    _
  $region5: #{tile.18} parent=0 // pred_fallthru
    _
  %v4 = vld [vmem:[%s0] ss:$0 sm:$0xff]
  %5 = vst [vmem:[%s1] sm:$0xff] %v4

// kernel: tile.19
$region0: #{tile.19}
  %s0 = inlined_call_operand.vmem [shape: f32[8,16], index: 0, kind: input, shape index: {}]
  %s1 = inlined_call_operand.vmem [shape: f32[1,128], index: 1, kind: output, shape index: {}]
  $region1: #{tile.19} parent=0
    #allocation0 [shape = 'u8[4096]{0}', space=vmem, size = 0x1000, scoped, tag = 'scoped mem for output reshape']
    %v2 = vld [vmem:[%s0] sm:$0x1]
    %vm3 = vcmask 130048
    %4 = vst.msk [vmem:[#allocation0] sm:$0x1] %vm3, %v2
    %s5 = scalar_lea.vmem %s0, 7
    %v6 = vld [vmem:[%s5] sm:$0x1]
    %7 = vrot.lane.b32.xlu0 %v6, 112
    %v8 = vpop.permute.xlu0 %7
    %vm9 = vcmask 1048448
    %10 = vst.msk [vmem:[#allocation0] sm:$0x1] %vm9, %v8
    %s11 = scalar_lea.vmem %s0, 6
    %v12 = vld [vmem:[%s11] sm:$0x1]
    %13 = vrot.lane.b32.xlu0 %v12, 96
    %v14 = vpop.permute.xlu0 %13
    %vm15 = vcmask 917248
    %16 = vst.msk [vmem:[#allocation0] sm:$0x1] %vm15, %v14
    %s17 = scalar_lea.vmem %s0, 5
    %v18 = vld [vmem:[%s17] sm:$0x1]
    %19 = vrot.lane.b32.xlu0 %v18, 80
    %v20 = vpop.permute.xlu0 %19
    %vm21 = vcmask 786048
    %22 = vst.msk [vmem:[#allocation0] sm:$0x1] %vm21, %v20
    %s23 = scalar_lea.vmem %s0, 4
    %v24 = vld [vmem:[%s23] sm:$0x1]
    %25 = vrot.lane.b32.xlu0 %v24, 64
    %v26 = vpop.permute.xlu0 %25
    %vm27 = vcmask 654848
    %28 = vst.msk [vmem:[#allocation0] sm:$0x1] %vm27, %v26
    %s29 = scalar_lea.vmem %s0, 3
    %v30 = vld [vmem:[%s29] sm:$0x1]
    %31 = vrot.lane.b32.xlu0 %v30, 48
    %v32 = vpop.permute.xlu0 %31
    %vm33 = vcmask 523648
    %34 = vst.msk [vmem:[#allocation0] sm:$0x1] %vm33, %v32
    %s35 = scalar_lea.vmem %s0, 2
    %v36 = vld [vmem:[%s35] sm:$0x1]
    %37 = vrot.lane.b32.xlu0 %v36, 32
    %v38 = vpop.permute.xlu0 %37
    %vm39 = vcmask 392448
    %40 = vst.msk [vmem:[#allocation0] sm:$0x1] %vm39, %v38
    %s41 = scalar_lea.vmem %s0, 1
    %v42 = vld [vmem:[%s41] sm:$0x1]
    %43 = vrot.lane.b32.xlu0 %v42, 16
    %v44 = vpop.permute.xlu0 %43
    %vm45 = vcmask 261248
    %46 = vst.msk [vmem:[#allocation0] sm:$0x1] %vm45, %v44
    %s48 = ssub.s32 2, 1
    %v49 = vld [vmem:[#allocation0] sm:%s48]
    %s51 = ssub.s32 2, 1
    %52 = vst [vmem:[%s1] sm:%s51] %v49

// kernel: tile.26
$region0: #{tile.26}
  #allocation0 [shape = 's32[1]{0}', space=sflag, size = 0x4, scoped, tag = 'scoped memory for tile.26']
  %s0 = inlined_call_operand.vmem [shape: f32[16], index: 0, kind: input, shape index: {}]
  %s1 = inlined_call_operand.vmem [shape: f32[4,16], index: 1, kind: output, shape index: {}]
  // Predicated region
  $region2: #{tile.26} parent=0 // pred_check
    _
  $region3: #{tile.26} parent=0 // pred_check_branch
    %3 = sbr.rel (0) target = $region5
  $region4: #{tile.26} parent=0 // pred_region
    _
  $region5: #{tile.26} parent=0 // pred_fallthru
    _
  %v4 = vld [vmem:[%s0] ss:$0 sm:$0xff]
  %5 = vst [vmem:[%s1] sm:$0xf] %v4

// kernel: tile.27
$region0: #{tile.27}
  %s0 = inlined_call_operand.vmem [shape: f32[4,16], index: 0, kind: input, shape index: {}]
  %s1 = inlined_call_operand.vmem [shape: f32[1,64], index: 1, kind: output, shape index: {}]
  $region1: #{tile.27} parent=0
    #allocation0 [shape = 'u8[4096]{0}', space=vmem, size = 0x1000, scoped, tag = 'scoped mem for output reshape']
    #allocation1 [shape = 'u8[4096]{0}', space=vmem, size = 0x1000, scoped, tag = 'scoped mem for input reshape']
    %s3 = ssub.s32 16, 1
    %v4 = vld [vmem:[%s0] sm:%s3]
    %5 = vst [vmem:[#allocation1] sm:%s3] %v4
    %v6 = vld [vmem:[#allocation1] sm:$0x1]
    %vm7 = vcmask 130048
    %8 = vst.msk [vmem:[#allocation0] sm:$0x1] %vm7, %v6
    %s9 = scalar_lea.vmem [#allocation1], 3
    %v10 = vld [vmem:[%s9] sm:$0x1]
    %11 = vrot.lane.b32.xlu0 %v10, 48
    %v12 = vpop.permute.xlu0 %11
    %vm13 = vcmask 523648
    %14 = vst.msk [vmem:[#allocation0] sm:$0x1] %vm13, %v12
    %s15 = scalar_lea.vmem [#allocation1], 2
    %v16 = vld [vmem:[%s15] sm:$0x1]
    %17 = vrot.lane.b32.xlu0 %v16, 32
    %v18 = vpop.permute.xlu0 %17
    %vm19 = vcmask 392448
    %20 = vst.msk [vmem:[#allocation0] sm:$0x1] %vm19, %v18
    %s21 = scalar_lea.vmem [#allocation1], 1
    %v22 = vld [vmem:[%s21] sm:$0x1]
    %23 = vrot.lane.b32.xlu0 %v22, 16
    %v24 = vpop.permute.xlu0 %23
    %vm25 = vcmask 261248
    %26 = vst.msk [vmem:[#allocation0] sm:$0x1] %vm25, %v24
    %s28 = ssub.s32 2, 1
    %v29 = vld [vmem:[#allocation0] sm:%s28]
    %s31 = ssub.s32 2, 1
    %32 = vst [vmem:[%s1] sm:%s31] %v29

// kernel: _lambda_.3
$region0: #{_lambda_.3}
  #allocation0 [shape = 'u32[]', space=smem, size = 0x4, offset = 0x4, fixed_abs, tag = 'smem constant byte address 0x4 - core index']
  #allocation1 [shape = 'u32[72,128]{1,0:T(1,128)}', space=vmem, size = 0x9000, scoped, tag = 'internal scratch']
  %s0 = inlined_call_operand.vmem [shape: f32[2,2,9,72], index: 0, kind: input, shape index: {}]
  %s1 = inlined_call_operand.hbm [shape: f32[6,72,128], index: 1, kind: input, shape index: {}]
  %s2 = inlined_call_operand.vmem [shape: f32[1,128], index: 2, kind: input, shape index: {}]
  %s3 = inlined_call_operand.vmem [shape: f32[1,128], index: 3, kind: input, shape index: {}]
  %s4 = inlined_call_operand.vmem [shape: f32[2,8,128], index: 4, kind: output, shape index: {}]
  %s5 = sld [smem:[#allocation0]]
  $region53: #{_lambda_.3} parent=0
    _
  %s7 = ssub.s32 1, %s5
  %s8 = scalar_select 0, %s7, %s5
  $region1: #{_lambda_.3} parent=0
    #allocation2 [shape = 'u8[221184]{0}', space=vmem, size = 0x36000, scoped, tag = 'input window, operand 1, single buffered']
    #allocation3 [shape = 's32[2]{0}', space=sflag, size = 0x8, scoped, tag = 'scoped memory for _lambda_.3']
    %9 = vsyncpa [#allocation3], 0
    loop: start=0, step=1, limit=4
    $region2: #{_lambda_.3} parent=1 // loop_pre_header
      _
    $region3: #{_lambda_.3} parent=1 // loop_header
      %s11 = sphi 0, %s15
      %p12 = scmp.ge.s32.totalorder %s11, 4
      %s21 = sphi 0, %s23
      %s24 = sphi 0, %s21
      %s25 = sphi 0, %s24
      %s41 = sphi 0, %s25
      %s45 = sphi 0, %s45
      %s47 = sphi 0, %s45
      %s48 = sphi 0, %s47
      %s62 = sphi 0, %s48
      %s66 = sphi 0, %s66
      %s68 = sphi 0, %s66
      %s69 = sphi 0, %s68
      %s83 = sphi 0, %s69
      %s87 = sphi 0, %s87
      %s89 = sphi 0, %s87
      %s90 = sphi 0, %s89
      %s104 = sphi 0, %s90
      %s110 = sphi 0, %s112
      %s113 = sphi 0, %s110
      %s114 = sphi 0, %s113
      %s130 = sphi 0, %s114
    $region4: #{_lambda_.3} parent=1 // loop_header_branch
      %14 = sbr.rel (%p12) target = $region8
    $region5: #{_lambda_.3} parent=1 // loop_body
      %s16 = ssub.s32 %s11, 1
      %s17 = ssub.s32 %s11, 2
      %s18 = sadd.s32 %s11, 1
      %s19 = ssub.s32 %s11, %s18
      %p20 = scmp.eq.s32.totalorder %s19, 0
      %s22 = sadd.s32 %s21, 1
      %s23 = scalar_select %p20, %s21, %s22
      %p26 = pneg %p20
      %p27 = scmp.eq.s32.totalorder %s11, 1
      %p28 = por %p26, %p27
      %p29 = scmp.ne.s32.totalorder %s21, %s24
      %p30 = scmp.eq.s32.totalorder %s11, 0
      %p31 = por %p29, %p30
      %p32 = scmp.ne.s32.totalorder %s21, %s24
      %p33 = scmp.eq.s32.totalorder %s16, 1
      %p34 = por %p32, %p33
      %p35 = scmp.ne.s32.totalorder %s24, %s25
      %p36 = scmp.eq.s32.totalorder %s16, 0
      %p37 = por %p35, %p36
      %p38 = scmp.ne.s32.totalorder %s24, %s25
      %p39 = scmp.eq.s32.totalorder %s17, 1
      %p40 = por %p38, %p39
      %p42 = scmp.ne.s32.totalorder %s25, %s41
      %p43 = scmp.eq.s32.totalorder %s17, 0
      %p44 = por %p42, %p43
      %s46 = sadd.s32 %s45, 1
      %p49 = scmp.eq.s32.totalorder %s11, 1
      %p50 = scmp.ne.s32.totalorder %s45, %s47
      %p51 = scmp.eq.s32.totalorder %s11, 0
      %p52 = por %p50, %p51
      %p53 = scmp.ne.s32.totalorder %s45, %s47
      %p54 = scmp.eq.s32.totalorder %s16, 1
      %p55 = por %p53, %p54
      %p56 = scmp.ne.s32.totalorder %s47, %s48
      %p57 = scmp.eq.s32.totalorder %s16, 0
      %p58 = por %p56, %p57
      %p59 = scmp.ne.s32.totalorder %s47, %s48
      %p60 = scmp.eq.s32.totalorder %s17, 1
      %p61 = por %p59, %p60
      %p63 = scmp.ne.s32.totalorder %s48, %s62
      %p64 = scmp.eq.s32.totalorder %s17, 0
      %p65 = por %p63, %p64
      %s67 = sadd.s32 %s66, 1
      %p70 = scmp.eq.s32.totalorder %s11, 1
      %p71 = scmp.ne.s32.totalorder %s66, %s68
      %p72 = scmp.eq.s32.totalorder %s11, 0
      %p73 = por %p71, %p72
      %p74 = scmp.ne.s32.totalorder %s66, %s68
      %p75 = scmp.eq.s32.totalorder %s16, 1
      %p76 = por %p74, %p75
      %p77 = scmp.ne.s32.totalorder %s68, %s69
      %p78 = scmp.eq.s32.totalorder %s16, 0
      %p79 = por %p77, %p78
      %p80 = scmp.ne.s32.totalorder %s68, %s69
      %p81 = scmp.eq.s32.totalorder %s17, 1
      %p82 = por %p80, %p81
      %p84 = scmp.ne.s32.totalorder %s69, %s83
      %p85 = scmp.eq.s32.totalorder %s17, 0
      %p86 = por %p84, %p85
      %s88 = sadd.s32 %s87, 1
      %p91 = scmp.eq.s32.totalorder %s11, 1
      %p92 = scmp.ne.s32.totalorder %s87, %s89
      %p93 = scmp.eq.s32.totalorder %s11, 0
      %p94 = por %p92, %p93
      %p95 = scmp.ne.s32.totalorder %s87, %s89
      %p96 = scmp.eq.s32.totalorder %s16, 1
      %p97 = por %p95, %p96
      %p98 = scmp.ne.s32.totalorder %s89, %s90
      %p99 = scmp.eq.s32.totalorder %s16, 0
      %p100 = por %p98, %p99
      %p101 = scmp.ne.s32.totalorder %s89, %s90
      %p102 = scmp.eq.s32.totalorder %s17, 1
      %p103 = por %p101, %p102
      %p105 = scmp.ne.s32.totalorder %s90, %s104
      %p106 = scmp.eq.s32.totalorder %s17, 0
      %p107 = por %p105, %p106
      %s108 = ssub.s32 %s11, %s18
      %p109 = scmp.eq.s32.totalorder %s108, 0
      %s111 = sadd.s32 %s110, 1
      %s112 = scalar_select %p109, %s110, %s111
      %p115 = pneg %p109
      %p116 = scmp.eq.s32.totalorder %s11, 1
      %p117 = por %p115, %p116
      %p118 = scmp.ne.s32.totalorder %s110, %s113
      %p119 = scmp.eq.s32.totalorder %s11, 0
      %p120 = por %p118, %p119
      %p121 = scmp.ne.s32.totalorder %s110, %s113
      %p122 = scmp.eq.s32.totalorder %s16, 1
      %p123 = por %p121, %p122
      %p124 = scmp.ne.s32.totalorder %s113, %s114
      %p125 = scmp.eq.s32.totalorder %s16, 0
      %p126 = por %p124, %p125
      %p127 = scmp.ne.s32.totalorder %s113, %s114
      %p128 = scmp.eq.s32.totalorder %s17, 1
      %p129 = por %p127, %p128
      %p131 = scmp.ne.s32.totalorder %s114, %s130
      %p132 = scmp.eq.s32.totalorder %s17, 0
      %p133 = por %p131, %p132
      %p134 = scmp.le.s32.totalorder 1, %s11
      %p135 = scmp.lt.s32.totalorder %s11, 3
      %p136 = pnand %p134, %p135
      %p137 = pneg %p136
      // Predicated region
      $region9: #{_lambda_.3} parent=5 // pred_check
        _
      $region10: #{_lambda_.3} parent=5 // pred_check_branch
        %139 = sbr.rel (%p136) target = $region12
      $region11: #{_lambda_.3} parent=5 // pred_region
        %s140 = ssub.s32 %s11, 1
        // Predicated region
        $region13: #{_lambda_.3} parent=11 // pred_check
          %p141 = pneg %p58
        $region14: #{_lambda_.3} parent=11 // pred_check_branch
          %143 = sbr.rel (%p141) target = $region16
        $region15: #{_lambda_.3} parent=11 // pred_region
          %145 = vsyncadd [#allocation3], 0
          %s146 = sshll.u32 %s1, 4
          %s147 = int_to_ptr.hbm [resolvable:$true] %s146
          %s148 = sshll.u32 [#allocation2], 4
          %s149 = int_to_ptr.vmem [resolvable:$true] %s148
          %154 = dma.hbm_to_vmem [thread:$0]  %s147, 6912, %s149, [#allocation3], 128, 128, 8
        $region16: #{_lambda_.3} parent=11 // pred_fallthru
          _
        // Predicated region
        $region17: #{_lambda_.3} parent=11 // pred_check
          %p155 = pneg %p79
        $region18: #{_lambda_.3} parent=11 // pred_check_branch
          %157 = sbr.rel (%p155) target = $region20
        $region19: #{_lambda_.3} parent=11 // pred_region
          _
        $region20: #{_lambda_.3} parent=11 // pred_fallthru
          _
        // Predicated region
        $region21: #{_lambda_.3} parent=11 // pred_check
          %p158 = pneg %p100
        $region22: #{_lambda_.3} parent=11 // pred_check_branch
          %160 = sbr.rel (%p158) target = $region24
        $region23: #{_lambda_.3} parent=11 // pred_region
          _
        $region24: #{_lambda_.3} parent=11 // pred_fallthru
          _
      $region12: #{_lambda_.3} parent=5 // pred_fallthru
        _
      %p161 = scmp.lt.s32.totalorder %s11, 2
      // Predicated region
      $region25: #{_lambda_.3} parent=5 // pred_check
        %p162 = pneg %p161
      $region26: #{_lambda_.3} parent=5 // pred_check_branch
        %164 = sbr.rel (%p162) target = $region28
      $region27: #{_lambda_.3} parent=5 // pred_region
        // Predicated region
        $region29: #{_lambda_.3} parent=27 // pred_check
          %p165 = pneg %p31
        $region30: #{_lambda_.3} parent=27 // pred_check_branch
          %167 = sbr.rel (%p165) target = $region32
        $region31: #{_lambda_.3} parent=27 // pred_region
          %p168 = scmp.lt.s32.totalorder %s11, 1
          %s169 = scalar_select %p168, %s11, 1
          %s170 = smul.addr %s169, 4
          %s171 = smul.addr %s170, 8
          %s172 = scalar_lea.vmem %s0, %s171
        $region32: #{_lambda_.3} parent=27 // pred_fallthru
          _
      $region28: #{_lambda_.3} parent=5 // pred_fallthru
        _
      %p173 = scmp.le.s32.totalorder 1, %s11
      %p174 = scmp.lt.s32.totalorder %s11, 3
      %p175 = pnand %p173, %p174
      %p176 = pneg %p175
      // Predicated region
      $region33: #{_lambda_.3} parent=5 // pred_check
        _
      $region34: #{_lambda_.3} parent=5 // pred_check_branch
        %178 = sbr.rel (%p175) target = $region36
      $region35: #{_lambda_.3} parent=5 // pred_region
        %s179 = ssub.s32 %s11, 1
        // Predicated region
        $region37: #{_lambda_.3} parent=35 // pred_check
          %p180 = pneg %p58
        $region38: #{_lambda_.3} parent=35 // pred_check_branch
          %182 = sbr.rel (%p180) target = $region40
        $region39: #{_lambda_.3} parent=35 // pred_region
          %184 = dma.done [#allocation3], 6912
        $region40: #{_lambda_.3} parent=35 // pred_fallthru
          _
        %p185 = scmp.lt.s32.totalorder %s16, 1
        %s186 = scalar_select %p185, %s16, 1
        %s187 = smul.addr %s186, 4
        %s188 = smul.addr %s187, 8
        %s189 = scalar_lea.vmem %s0, %s188
        %p190 = pneg %p37
        %p191 = pneg %p34
        %p192 = pneg %p58
        %p193 = pneg %p55
        %p194 = pneg %p79
        %p195 = pneg %p76
        %p196 = pneg %p100
        %p197 = pneg %p97
        %p198 = pneg %p126
        %p199 = pneg %p123
        %p200 = scmp.lt.s32.totalorder %s16, 1
        %s201 = scalar_select %p200, %s16, 1
        %s202 = smul.addr %s201, 8
        %s203 = scalar_lea.vmem %s4, %s202
        %p204 = scmp.lt.s32.totalorder %s16, 1
        %s205 = scalar_select %p204, %s16, 1
        %s206 = smul.addr %s205, 4
        %s207 = smul.addr %s206, 8
        %s208 = scalar_lea.vmem %s0, %s207
        %p209 = scmp.lt.s32.totalorder %s16, 1
        %s210 = scalar_select %p209, %s16, 1
        %s211 = smul.addr %s210, 8
        %s212 = scalar_lea.vmem %s4, %s211
        %v213 = vld [vmem:[%s208] sm:$0xff]
        %v214 = vld [vmem:[%s208 + $0x8] sm:$0x1]
        %s215 = scalar_lea.vmem %s208, 16
        %v216 = vld [vmem:[%s215] sm:$0xff]
        %v217 = vld [vmem:[%s215 + $0x8] sm:$0x1]
        %v218 = vld [vmem:[#allocation2] sm:$0xff]
        %v219 = vld [vmem:[#allocation2 + $0x8] sm:$0xff]
        %v220 = vld [vmem:[#allocation2 + $0x10] sm:$0xff]
        %v221 = vld [vmem:[#allocation2 + $0x18] sm:$0xff]
        %v222 = vld [vmem:[#allocation2 + $0x20] sm:$0xff]
        %v223 = vld [vmem:[#allocation2 + $0x28] sm:$0xff]
        %v224 = vld [vmem:[#allocation2 + $0x30] sm:$0xff]
        %v225 = vld [vmem:[#allocation2 + $0x38] sm:$0xff]
        %v226 = vld [vmem:[#allocation2 + $0x40] sm:$0xff]
        %s227 = scalar_lea.vmem [#allocation2], 72
        %v228 = vld [vmem:[%s227] sm:$0xff]
        %v229 = vld [vmem:[%s227 + $0x8] sm:$0xff]
        %v230 = vld [vmem:[%s227 + $0x10] sm:$0xff]
        %v231 = vld [vmem:[%s227 + $0x18] sm:$0xff]
        %v232 = vld [vmem:[%s227 + $0x20] sm:$0xff]
        %v233 = vld [vmem:[%s227 + $0x28] sm:$0xff]
        %v234 = vld [vmem:[%s227 + $0x30] sm:$0xff]
        %v235 = vld [vmem:[%s227 + $0x38] sm:$0xff]
        %v236 = vld [vmem:[%s227 + $0x40] sm:$0xff]
        %vm237 = vcmask 588800
        %v239 = vsel %vm237, %v216, 0
        %241 = vmatpush.msra.mxu0 0.0
        %242 = vmatpush.msra.mxu0 0.0
        %243 = vmatpush.msra.mxu0 0.0
        %244 = vmatpush.msra.mxu0 0.0
        %245 = vmatpush.msra.mxu0 0.0
        %246 = vmatpush.msra.mxu0 0.0
        %247 = vmatpush.msra.mxu0 0.0
        %248 = vmatpush.msra.mxu0 %v236
        %249 = vmatpush.msra.mxu0 %v235
        %250 = vmatpush.msra.mxu0 %v234
        %251 = vmatpush.msra.mxu0 %v233
        %252 = vmatpush.msra.mxu0 %v232
        %253 = vmatpush.msra.mxu0 %v231
        %254 = vmatpush.msra.mxu0 %v230
        %255 = vmatpush.msra.mxu0 %v229
        %256 = vmatpush.msra.mxu0 %v228
        %257 = vmatmul.f32.gmra.mxu0 %v239
        %v258 = vpop.f32.mrf.mxu0
        %v259 = vadd.f32 0.0, %v258
        %260 = vdwg.mxu0
        %v262 = vsel %vm237, %v213, 0
        %264 = vmatpush.msra.mxu0 0.0
        %265 = vmatpush.msra.mxu0 0.0
        %266 = vmatpush.msra.mxu0 0.0
        %267 = vmatpush.msra.mxu0 0.0
        %268 = vmatpush.msra.mxu0 0.0
        %269 = vmatpush.msra.mxu0 0.0
        %270 = vmatpush.msra.mxu0 0.0
        %271 = vmatpush.msra.mxu0 %v226
        %272 = vmatpush.msra.mxu0 %v225
        %273 = vmatpush.msra.mxu0 %v224
        %274 = vmatpush.msra.mxu0 %v223
        %275 = vmatpush.msra.mxu0 %v222
        %276 = vmatpush.msra.mxu0 %v221
        %277 = vmatpush.msra.mxu0 %v220
        %278 = vmatpush.msra.mxu0 %v219
        %279 = vmatpush.msra.mxu0 %v218
        %280 = vmatmul.f32.gmra.mxu0 %v262
        %v281 = vpop.f32.mrf.mxu0
        %v282 = vadd.f32 %v259, %v281
        %283 = vdwg.mxu0
        %s284 = scalar_lea.vmem [#allocation2], 144
        %v285 = vld [vmem:[%s284] sm:$0xff]
        %v286 = vld [vmem:[%s284 + $0x8] sm:$0xff]
        %v287 = vld [vmem:[%s284 + $0x10] sm:$0xff]
        %v288 = vld [vmem:[%s284 + $0x18] sm:$0xff]
        %v289 = vld [vmem:[%s284 + $0x20] sm:$0xff]
        %v290 = vld [vmem:[%s284 + $0x28] sm:$0xff]
        %v291 = vld [vmem:[%s284 + $0x30] sm:$0xff]
        %v292 = vld [vmem:[%s284 + $0x38] sm:$0xff]
        %v293 = vld [vmem:[%s284 + $0x40] sm:$0xff]
        %vm295 = vcmask 1046528
        %v296 = vrot.slane %v213, 1
        %v297 = vrot.slane %v214, 1
        %v298 = vsel %vm295, %v296, %v297
        %v299 = vsel %vm237, %v298, 0
        %301 = vmatpush.msra.mxu0 0.0
        %302 = vmatpush.msra.mxu0 0.0
        %303 = vmatpush.msra.mxu0 0.0
        %304 = vmatpush.msra.mxu0 0.0
        %305 = vmatpush.msra.mxu0 0.0
        %306 = vmatpush.msra.mxu0 0.0
        %307 = vmatpush.msra.mxu0 0.0
        %308 = vmatpush.msra.mxu0 %v293
        %309 = vmatpush.msra.mxu0 %v292
        %310 = vmatpush.msra.mxu0 %v291
        %311 = vmatpush.msra.mxu0 %v290
        %312 = vmatpush.msra.mxu0 %v289
        %313 = vmatpush.msra.mxu0 %v288
        %314 = vmatpush.msra.mxu0 %v287
        %315 = vmatpush.msra.mxu0 %v286
        %316 = vmatpush.msra.mxu0 %v285
        %317 = vmatmul.f32.gmra.mxu0 %v299
        %v318 = vpop.f32.mrf.mxu0
        %v319 = vadd.f32 0.0, %v318
        %320 = vdwg.mxu0
        %v321 = vadd.f32 %v282, %v319
        %v322 = vld [vmem:[%s2] sm:$0x1]
        %v324 = vperm.slane %v322, 0
        %v326 = vmul.f32 %v321, %v324
        %v327 = vld [vmem:[%s3] sm:$0x1]
        %v329 = vperm.slane %v327, 0
        %v331 = vadd.f32 %v326, %v329
        %v332 = vmax.f32 %v331, 0.0
        %s333 = scalar_lea.vmem [#allocation2], 216
        %v334 = vld [vmem:[%s333] sm:$0xff]
        %v335 = vld [vmem:[%s333 + $0x8] sm:$0xff]
        %v336 = vld [vmem:[%s333 + $0x10] sm:$0xff]
        %v337 = vld [vmem:[%s333 + $0x18] sm:$0xff]
        %v338 = vld [vmem:[%s333 + $0x20] sm:$0xff]
        %v339 = vld [vmem:[%s333 + $0x28] sm:$0xff]
        %v340 = vld [vmem:[%s333 + $0x30] sm:$0xff]
        %v341 = vld [vmem:[%s333 + $0x38] sm:$0xff]
        %v342 = vld [vmem:[%s333 + $0x40] sm:$0xff]
        %s343 = scalar_lea.vmem [#allocation2], 288
        %v344 = vld [vmem:[%s343] sm:$0xff]
        %v345 = vld [vmem:[%s343 + $0x8] sm:$0xff]
        %v346 = vld [vmem:[%s343 + $0x10] sm:$0xff]
        %v347 = vld [vmem:[%s343 + $0x18] sm:$0xff]
        %v348 = vld [vmem:[%s343 + $0x20] sm:$0xff]
        %v349 = vld [vmem:[%s343 + $0x28] sm:$0xff]
        %v350 = vld [vmem:[%s343 + $0x30] sm:$0xff]
        %v351 = vld [vmem:[%s343 + $0x38] sm:$0xff]
        %v352 = vld [vmem:[%s343 + $0x40] sm:$0xff]
        %353 = vmatpush.msra.mxu0 0.0
        %354 = vmatpush.msra.mxu0 0.0
        %355 = vmatpush.msra.mxu0 0.0
        %356 = vmatpush.msra.mxu0 0.0
        %357 = vmatpush.msra.mxu0 0.0
        %358 = vmatpush.msra.mxu0 0.0
        %359 = vmatpush.msra.mxu0 0.0
        %360 = vmatpush.msra.mxu0 %v352
        %361 = vmatpush.msra.mxu0 %v351
        %362 = vmatpush.msra.mxu0 %v350
        %363 = vmatpush.msra.mxu0 %v349
        %364 = vmatpush.msra.mxu0 %v348
        %365 = vmatpush.msra.mxu0 %v347
        %366 = vmatpush.msra.mxu0 %v346
        %367 = vmatpush.msra.mxu0 %v345
        %368 = vmatpush.msra.mxu0 %v344
        %369 = vmatmul.f32.gmra.mxu0 %v239
        %v370 = vpop.f32.mrf.mxu0
        %v371 = vadd.f32 0.0, %v370
        %372 = vdwg.mxu0
        %373 = vmatpush.msra.mxu0 0.0
        %374 = vmatpush.msra.mxu0 0.0
        %375 = vmatpush.msra.mxu0 0.0
        %376 = vmatpush.msra.mxu0 0.0
        %377 = vmatpush.msra.mxu0 0.0
        %378 = vmatpush.msra.mxu0 0.0
        %379 = vmatpush.msra.mxu0 0.0
        %380 = vmatpush.msra.mxu0 %v342
        %381 = vmatpush.msra.mxu0 %v341
        %382 = vmatpush.msra.mxu0 %v340
        %383 = vmatpush.msra.mxu0 %v339
        %384 = vmatpush.msra.mxu0 %v338
        %385 = vmatpush.msra.mxu0 %v337
        %386 = vmatpush.msra.mxu0 %v336
        %387 = vmatpush.msra.mxu0 %v335
        %388 = vmatpush.msra.mxu0 %v334
        %389 = vmatmul.f32.gmra.mxu0 %v262
        %v390 = vpop.f32.mrf.mxu0
        %v391 = vadd.f32 %v371, %v390
        %392 = vdwg.mxu0
        %s393 = scalar_lea.vmem [#allocation2], 360
        %v394 = vld [vmem:[%s393] sm:$0xff]
        %v395 = vld [vmem:[%s393 + $0x8] sm:$0xff]
        %v396 = vld [vmem:[%s393 + $0x10] sm:$0xff]
        %v397 = vld [vmem:[%s393 + $0x18] sm:$0xff]
        %v398 = vld [vmem:[%s393 + $0x20] sm:$0xff]
        %v399 = vld [vmem:[%s393 + $0x28] sm:$0xff]
        %v400 = vld [vmem:[%s393 + $0x30] sm:$0xff]
        %v401 = vld [vmem:[%s393 + $0x38] sm:$0xff]
        %v402 = vld [vmem:[%s393 + $0x40] sm:$0xff]
        %403 = vmatpush.msra.mxu0 0.0
        %404 = vmatpush.msra.mxu0 0.0
        %405 = vmatpush.msra.mxu0 0.0
        %406 = vmatpush.msra.mxu0 0.0
        %407 = vmatpush.msra.mxu0 0.0
        %408 = vmatpush.msra.mxu0 0.0
        %409 = vmatpush.msra.mxu0 0.0
        %410 = vmatpush.msra.mxu0 %v402
        %411 = vmatpush.msra.mxu0 %v401
        %412 = vmatpush.msra.mxu0 %v400
        %413 = vmatpush.msra.mxu0 %v399
        %414 = vmatpush.msra.mxu0 %v398
        %415 = vmatpush.msra.mxu0 %v397
        %416 = vmatpush.msra.mxu0 %v396
        %417 = vmatpush.msra.mxu0 %v395
        %418 = vmatpush.msra.mxu0 %v394
        %419 = vmatmul.f32.gmra.mxu0 %v299
        %v420 = vpop.f32.mrf.mxu0
        %v421 = vadd.f32 0.0, %v420
        %422 = vdwg.mxu0
        %v423 = vadd.f32 %v391, %v421
        %v424 = vmul.f32 %v423, %v324
        %v425 = vadd.f32 %v424, %v329
        %v426 = vmax.f32 %v425, 0.0
        %v427 = vmax.f32 %v332, %v426
        %428 = vmatpush.msra.mxu0 0.0
        %429 = vmatpush.msra.mxu0 0.0
        %430 = vmatpush.msra.mxu0 0.0
        %431 = vmatpush.msra.mxu0 0.0
        %432 = vmatpush.msra.mxu0 0.0
        %433 = vmatpush.msra.mxu0 0.0
        %434 = vmatpush.msra.mxu0 0.0
        %435 = vmatpush.msra.mxu0 %v236
        %436 = vmatpush.msra.mxu0 %v235
        %437 = vmatpush.msra.mxu0 %v234
        %438 = vmatpush.msra.mxu0 %v233
        %439 = vmatpush.msra.mxu0 %v232
        %440 = vmatpush.msra.mxu0 %v231
        %441 = vmatpush.msra.mxu0 %v230
        %442 = vmatpush.msra.mxu0 %v229
        %443 = vmatpush.msra.mxu0 %v228
        %444 = vmatmul.f32.gmra.mxu0 %v299
        %v445 = vpop.f32.mrf.mxu0
        %v446 = vadd.f32 0.0, %v445
        %447 = vdwg.mxu0
        %448 = vmatpush.msra.mxu0 0.0
        %449 = vmatpush.msra.mxu0 0.0
        %450 = vmatpush.msra.mxu0 0.0
        %451 = vmatpush.msra.mxu0 0.0
        %452 = vmatpush.msra.mxu0 0.0
        %453 = vmatpush.msra.mxu0 0.0
        %454 = vmatpush.msra.mxu0 0.0
        %455 = vmatpush.msra.mxu0 %v226
        %456 = vmatpush.msra.mxu0 %v225
        %457 = vmatpush.msra.mxu0 %v224
        %458 = vmatpush.msra.mxu0 %v223
        %459 = vmatpush.msra.mxu0 %v222
        %460 = vmatpush.msra.mxu0 %v221
        %461 = vmatpush.msra.mxu0 %v220
        %462 = vmatpush.msra.mxu0 %v219
        %463 = vmatpush.msra.mxu0 %v218
        %464 = vmatmul.f32.gmra.mxu0 %v239
        %v465 = vpop.f32.mrf.mxu0
        %v466 = vadd.f32 %v446, %v465
        %467 = vdwg.mxu0
        %v469 = vrot.slane %v216, 1
        %v470 = vrot.slane %v217, 1
        %v471 = vsel %vm295, %v469, %v470
        %v472 = vsel %vm237, %v471, 0
        %474 = vmatpush.msra.mxu0 0.0
        %475 = vmatpush.msra.mxu0 0.0
        %476 = vmatpush.msra.mxu0 0.0
        %477 = vmatpush.msra.mxu0 0.0
        %478 = vmatpush.msra.mxu0 0.0
        %479 = vmatpush.msra.mxu0 0.0
        %480 = vmatpush.msra.mxu0 0.0
        %481 = vmatpush.msra.mxu0 %v293
        %482 = vmatpush.msra.mxu0 %v292
        %483 = vmatpush.msra.mxu0 %v291
        %484 = vmatpush.msra.mxu0 %v290
        %485 = vmatpush.msra.mxu0 %v289
        %486 = vmatpush.msra.mxu0 %v288
        %487 = vmatpush.msra.mxu0 %v287
        %488 = vmatpush.msra.mxu0 %v286
        %489 = vmatpush.msra.mxu0 %v285
        %490 = vmatmul.f32.gmra.mxu0 %v472
        %v491 = vpop.f32.mrf.mxu0
        %v492 = vadd.f32 0.0, %v491
        %493 = vdwg.mxu0
        %v494 = vadd.f32 %v466, %v492
        %v495 = vmul.f32 %v494, %v324
        %v496 = vadd.f32 %v495, %v329
        %v497 = vmax.f32 %v496, 0.0
        %v498 = vmax.f32 %v427, %v497
        %499 = vmatpush.msra.mxu0 0.0
        %500 = vmatpush.msra.mxu0 0.0
        %501 = vmatpush.msra.mxu0 0.0
        %502 = vmatpush.msra.mxu0 0.0
        %503 = vmatpush.msra.mxu0 0.0
        %504 = vmatpush.msra.mxu0 0.0
        %505 = vmatpush.msra.mxu0 0.0
        %506 = vmatpush.msra.mxu0 %v352
        %507 = vmatpush.msra.mxu0 %v351
        %508 = vmatpush.msra.mxu0 %v350
        %509 = vmatpush.msra.mxu0 %v349
        %510 = vmatpush.msra.mxu0 %v348
        %511 = vmatpush.msra.mxu0 %v347
        %512 = vmatpush.msra.mxu0 %v346
        %513 = vmatpush.msra.mxu0 %v345
        %514 = vmatpush.msra.mxu0 %v344
        %515 = vmatmul.f32.gmra.mxu0 %v299
        %v516 = vpop.f32.mrf.mxu0
        %v517 = vadd.f32 0.0, %v516
        %518 = vdwg.mxu0
        %519 = vmatpush.msra.mxu0 0.0
        %520 = vmatpush.msra.mxu0 0.0
        %521 = vmatpush.msra.mxu0 0.0
        %522 = vmatpush.msra.mxu0 0.0
        %523 = vmatpush.msra.mxu0 0.0
        %524 = vmatpush.msra.mxu0 0.0
        %525 = vmatpush.msra.mxu0 0.0
        %526 = vmatpush.msra.mxu0 %v342
        %527 = vmatpush.msra.mxu0 %v341
        %528 = vmatpush.msra.mxu0 %v340
        %529 = vmatpush.msra.mxu0 %v339
        %530 = vmatpush.msra.mxu0 %v338
        %531 = vmatpush.msra.mxu0 %v337
        %532 = vmatpush.msra.mxu0 %v336
        %533 = vmatpush.msra.mxu0 %v335
        %534 = vmatpush.msra.mxu0 %v334
        %535 = vmatmul.f32.gmra.mxu0 %v239
        %v536 = vpop.f32.mrf.mxu0
        %v537 = vadd.f32 %v517, %v536
        %538 = vdwg.mxu0
        %539 = vmatpush.msra.mxu0 0.0
        %540 = vmatpush.msra.mxu0 0.0
        %541 = vmatpush.msra.mxu0 0.0
        %542 = vmatpush.msra.mxu0 0.0
        %543 = vmatpush.msra.mxu0 0.0
        %544 = vmatpush.msra.mxu0 0.0
        %545 = vmatpush.msra.mxu0 0.0
        %546 = vmatpush.msra.mxu0 %v402
        %547 = vmatpush.msra.mxu0 %v401
        %548 = vmatpush.msra.mxu0 %v400
        %549 = vmatpush.msra.mxu0 %v399
        %550 = vmatpush.msra.mxu0 %v398
        %551 = vmatpush.msra.mxu0 %v397
        %552 = vmatpush.msra.mxu0 %v396
        %553 = vmatpush.msra.mxu0 %v395
        %554 = vmatpush.msra.mxu0 %v394
        %555 = vmatmul.f32.gmra.mxu0 %v472
        %v556 = vpop.f32.mrf.mxu0
        %v557 = vadd.f32 0.0, %v556
        %558 = vdwg.mxu0
        %v559 = vadd.f32 %v537, %v557
        %v560 = vmul.f32 %v559, %v324
        %v561 = vadd.f32 %v560, %v329
        %v562 = vmax.f32 %v561, 0.0
        %v563 = vmax.f32 %v498, %v562
        %564 = vst [vmem:[%s212] sm:$0xff] %v563
        %p565 = scmp.lt.s32.totalorder %s16, 1
        %s566 = scalar_select %p565, %s16, 1
        %s567 = smul.addr %s566, 8
        %s568 = scalar_lea.vmem %s4, %s567
        // Predicated region
        $region41: #{_lambda_.3} parent=35 // pred_check
          %p569 = pneg %p123
        $region42: #{_lambda_.3} parent=35 // pred_check_branch
          %571 = sbr.rel (%p569) target = $region44
        $region43: #{_lambda_.3} parent=35 // pred_region
          _
        $region44: #{_lambda_.3} parent=35 // pred_fallthru
          _
      $region36: #{_lambda_.3} parent=5 // pred_fallthru
        _
      %p572 = scmp.le.s32.totalorder 2, %s11
      // Predicated region
      $region45: #{_lambda_.3} parent=5 // pred_check
        %p573 = pneg %p572
      $region46: #{_lambda_.3} parent=5 // pred_check_branch
        %575 = sbr.rel (%p573) target = $region48
      $region47: #{_lambda_.3} parent=5 // pred_region
        %s576 = ssub.s32 %s11, 2
        // Predicated region
        $region49: #{_lambda_.3} parent=47 // pred_check
          %p577 = pneg %p129
        $region50: #{_lambda_.3} parent=47 // pred_check_branch
          %579 = sbr.rel (%p577) target = $region52
        $region51: #{_lambda_.3} parent=47 // pred_region
          %p580 = scmp.lt.s32.totalorder %s17, 1
          %s581 = scalar_select %p580, %s17, 1
          %s582 = smul.addr %s581, 8
          %s583 = scalar_lea.vmem %s4, %s582
        $region52: #{_lambda_.3} parent=47 // pred_fallthru
          _
      $region48: #{_lambda_.3} parent=5 // pred_fallthru
        _
    $region6: #{_lambda_.3} parent=1 // loop_footer
      %s15 = sadd.s32 1, %s11
    $region7: #{_lambda_.3} parent=1 // loop_footer_branch
      %10 = sbr.rel target = $region3
    $region8: #{_lambda_.3} parent=1 // loop_exit
      _
    %584 = vsyncpa [#allocation3], 1
    %s585 = scalar_lea.sflag [#allocation3], 1
    %586 = vsyncpa %s585, 1

// kernel: _lambda_.4
$region0: #{_lambda_.4}
  #allocation0 [shape = 'u32[]', space=smem, size = 0x4, offset = 0x4, fixed_abs, tag = 'smem constant byte address 0x4 - core index']
  #allocation1 [shape = 'u32[72,128]{1,0:T(1,128)}', space=vmem, size = 0x9000, scoped, tag = 'internal scratch']
  %s0 = inlined_call_operand.vmem [shape: f32[2,2,5,160], index: 0, kind: input, shape index: {}]
  %s1 = inlined_call_operand.vmem [shape: f32[6,160,64], index: 1, kind: input, shape index: {}]
  %s2 = inlined_call_operand.vmem [shape: f32[1,64], index: 2, kind: input, shape index: {}]
  %s3 = inlined_call_operand.vmem [shape: f32[1,64], index: 3, kind: input, shape index: {}]
  %s4 = inlined_call_operand.vmem [shape: f32[2,4,64], index: 4, kind: output, shape index: {}]
  %s5 = sld [smem:[#allocation0]]
  $region49: #{_lambda_.4} parent=0
    _
  %s7 = ssub.s32 1, %s5
  %s8 = scalar_select 0, %s7, %s5
  loop: start=0, step=1, limit=4
  $region2: #{_lambda_.4} parent=0 // loop_pre_header
    _
  $region3: #{_lambda_.4} parent=0 // loop_header
    %s10 = sphi 0, %s14
    %p11 = scmp.ge.s32.totalorder %s10, 4
    %s20 = sphi 0, %s22
    %s23 = sphi 0, %s20
    %s24 = sphi 0, %s23
    %s40 = sphi 0, %s24
    %s44 = sphi 0, %s44
    %s46 = sphi 0, %s44
    %s47 = sphi 0, %s46
    %s61 = sphi 0, %s47
    %s65 = sphi 0, %s65
    %s67 = sphi 0, %s65
    %s68 = sphi 0, %s67
    %s82 = sphi 0, %s68
    %s86 = sphi 0, %s86
    %s88 = sphi 0, %s86
    %s89 = sphi 0, %s88
    %s103 = sphi 0, %s89
    %s109 = sphi 0, %s111
    %s112 = sphi 0, %s109
    %s113 = sphi 0, %s112
    %s129 = sphi 0, %s113
  $region4: #{_lambda_.4} parent=0 // loop_header_branch
    %13 = sbr.rel (%p11) target = $region8
  $region5: #{_lambda_.4} parent=0 // loop_body
    %s15 = ssub.s32 %s10, 1
    %s16 = ssub.s32 %s10, 2
    %s17 = sadd.s32 %s10, 1
    %s18 = ssub.s32 %s10, %s17
    %p19 = scmp.eq.s32.totalorder %s18, 0
    %s21 = sadd.s32 %s20, 1
    %s22 = scalar_select %p19, %s20, %s21
    %p25 = pneg %p19
    %p26 = scmp.eq.s32.totalorder %s10, 1
    %p27 = por %p25, %p26
    %p28 = scmp.ne.s32.totalorder %s20, %s23
    %p29 = scmp.eq.s32.totalorder %s10, 0
    %p30 = por %p28, %p29
    %p31 = scmp.ne.s32.totalorder %s20, %s23
    %p32 = scmp.eq.s32.totalorder %s15, 1
    %p33 = por %p31, %p32
    %p34 = scmp.ne.s32.totalorder %s23, %s24
    %p35 = scmp.eq.s32.totalorder %s15, 0
    %p36 = por %p34, %p35
    %p37 = scmp.ne.s32.totalorder %s23, %s24
    %p38 = scmp.eq.s32.totalorder %s16, 1
    %p39 = por %p37, %p38
    %p41 = scmp.ne.s32.totalorder %s24, %s40
    %p42 = scmp.eq.s32.totalorder %s16, 0
    %p43 = por %p41, %p42
    %s45 = sadd.s32 %s44, 1
    %p48 = scmp.eq.s32.totalorder %s10, 1
    %p49 = scmp.ne.s32.totalorder %s44, %s46
    %p50 = scmp.eq.s32.totalorder %s10, 0
    %p51 = por %p49, %p50
    %p52 = scmp.ne.s32.totalorder %s44, %s46
    %p53 = scmp.eq.s32.totalorder %s15, 1
    %p54 = por %p52, %p53
    %p55 = scmp.ne.s32.totalorder %s46, %s47
    %p56 = scmp.eq.s32.totalorder %s15, 0
    %p57 = por %p55, %p56
    %p58 = scmp.ne.s32.totalorder %s46, %s47
    %p59 = scmp.eq.s32.totalorder %s16, 1
    %p60 = por %p58, %p59
    %p62 = scmp.ne.s32.totalorder %s47, %s61
    %p63 = scmp.eq.s32.totalorder %s16, 0
    %p64 = por %p62, %p63
    %s66 = sadd.s32 %s65, 1
    %p69 = scmp.eq.s32.totalorder %s10, 1
    %p70 = scmp.ne.s32.totalorder %s65, %s67
    %p71 = scmp.eq.s32.totalorder %s10, 0
    %p72 = por %p70, %p71
    %p73 = scmp.ne.s32.totalorder %s65, %s67
    %p74 = scmp.eq.s32.totalorder %s15, 1
    %p75 = por %p73, %p74
    %p76 = scmp.ne.s32.totalorder %s67, %s68
    %p77 = scmp.eq.s32.totalorder %s15, 0
    %p78 = por %p76, %p77
    %p79 = scmp.ne.s32.totalorder %s67, %s68
    %p80 = scmp.eq.s32.totalorder %s16, 1
    %p81 = por %p79, %p80
    %p83 = scmp.ne.s32.totalorder %s68, %s82
    %p84 = scmp.eq.s32.totalorder %s16, 0
    %p85 = por %p83, %p84
    %s87 = sadd.s32 %s86, 1
    %p90 = scmp.eq.s32.totalorder %s10, 1
    %p91 = scmp.ne.s32.totalorder %s86, %s88
    %p92 = scmp.eq.s32.totalorder %s10, 0
    %p93 = por %p91, %p92
    %p94 = scmp.ne.s32.totalorder %s86, %s88
    %p95 = scmp.eq.s32.totalorder %s15, 1
    %p96 = por %p94, %p95
    %p97 = scmp.ne.s32.totalorder %s88, %s89
    %p98 = scmp.eq.s32.totalorder %s15, 0
    %p99 = por %p97, %p98
    %p100 = scmp.ne.s32.totalorder %s88, %s89
    %p101 = scmp.eq.s32.totalorder %s16, 1
    %p102 = por %p100, %p101
    %p104 = scmp.ne.s32.totalorder %s89, %s103
    %p105 = scmp.eq.s32.totalorder %s16, 0
    %p106 = por %p104, %p105
    %s107 = ssub.s32 %s10, %s17
    %p108 = scmp.eq.s32.totalorder %s107, 0
    %s110 = sadd.s32 %s109, 1
    %s111 = scalar_select %p108, %s109, %s110
    %p114 = pneg %p108
    %p115 = scmp.eq.s32.totalorder %s10, 1
    %p116 = por %p114, %p115
    %p117 = scmp.ne.s32.totalorder %s109, %s112
    %p118 = scmp.eq.s32.totalorder %s10, 0
    %p119 = por %p117, %p118
    %p120 = scmp.ne.s32.totalorder %s109, %s112
    %p121 = scmp.eq.s32.totalorder %s15, 1
    %p122 = por %p120, %p121
    %p123 = scmp.ne.s32.totalorder %s112, %s113
    %p124 = scmp.eq.s32.totalorder %s15, 0
    %p125 = por %p123, %p124
    %p126 = scmp.ne.s32.totalorder %s112, %s113
    %p127 = scmp.eq.s32.totalorder %s16, 1
    %p128 = por %p126, %p127
    %p130 = scmp.ne.s32.totalorder %s113, %s129
    %p131 = scmp.eq.s32.totalorder %s16, 0
    %p132 = por %p130, %p131
    %p133 = scmp.le.s32.totalorder 1, %s10
    %p134 = scmp.lt.s32.totalorder %s10, 3
    %p135 = pnand %p133, %p134
    %p136 = pneg %p135
    // Predicated region
    $region9: #{_lambda_.4} parent=5 // pred_check
      _
    $region10: #{_lambda_.4} parent=5 // pred_check_branch
      %138 = sbr.rel (%p135) target = $region12
    $region11: #{_lambda_.4} parent=5 // pred_region
      %s139 = ssub.s32 %s10, 1
      // Predicated region
      $region13: #{_lambda_.4} parent=11 // pred_check
        %p140 = pneg %p57
      $region14: #{_lambda_.4} parent=11 // pred_check_branch
        %142 = sbr.rel (%p140) target = $region16
      $region15: #{_lambda_.4} parent=11 // pred_region
        _
      $region16: #{_lambda_.4} parent=11 // pred_fallthru
        _
      // Predicated region
      $region17: #{_lambda_.4} parent=11 // pred_check
        %p143 = pneg %p78
      $region18: #{_lambda_.4} parent=11 // pred_check_branch
        %145 = sbr.rel (%p143) target = $region20
      $region19: #{_lambda_.4} parent=11 // pred_region
        _
      $region20: #{_lambda_.4} parent=11 // pred_fallthru
        _
      // Predicated region
      $region21: #{_lambda_.4} parent=11 // pred_check
        %p146 = pneg %p99
      $region22: #{_lambda_.4} parent=11 // pred_check_branch
        %148 = sbr.rel (%p146) target = $region24
      $region23: #{_lambda_.4} parent=11 // pred_region
        _
      $region24: #{_lambda_.4} parent=11 // pred_fallthru
        _
    $region12: #{_lambda_.4} parent=5 // pred_fallthru
      _
    %p149 = scmp.lt.s32.totalorder %s10, 2
    // Predicated region
    $region25: #{_lambda_.4} parent=5 // pred_check
      %p150 = pneg %p149
    $region26: #{_lambda_.4} parent=5 // pred_check_branch
      %152 = sbr.rel (%p150) target = $region28
    $region27: #{_lambda_.4} parent=5 // pred_region
      // Predicated region
      $region29: #{_lambda_.4} parent=27 // pred_check
        %p153 = pneg %p30
      $region30: #{_lambda_.4} parent=27 // pred_check_branch
        %155 = sbr.rel (%p153) target = $region32
      $region31: #{_lambda_.4} parent=27 // pred_region
        %p156 = scmp.lt.s32.totalorder %s10, 1
        %s157 = scalar_select %p156, %s10, 1
        %s158 = smul.addr %s157, 4
        %s159 = smul.addr %s158, 8
        %s160 = scalar_lea.vmem %s0, %s159
      $region32: #{_lambda_.4} parent=27 // pred_fallthru
        _
    $region28: #{_lambda_.4} parent=5 // pred_fallthru
      _
    %p161 = scmp.le.s32.totalorder 1, %s10
    %p162 = scmp.lt.s32.totalorder %s10, 3
    %p163 = pnand %p161, %p162
    %p164 = pneg %p163
    // Predicated region
    $region33: #{_lambda_.4} parent=5 // pred_check
      _
    $region34: #{_lambda_.4} parent=5 // pred_check_branch
      %166 = sbr.rel (%p163) target = $region36
    $region35: #{_lambda_.4} parent=5 // pred_region
      %s167 = ssub.s32 %s10, 1
      %p168 = scmp.lt.s32.totalorder %s15, 1
      %s169 = scalar_select %p168, %s15, 1
      %s170 = smul.addr %s169, 4
      %s171 = smul.addr %s170, 8
      %s172 = scalar_lea.vmem %s0, %s171
      %p173 = pneg %p36
      %p174 = pneg %p33
      %p175 = pneg %p57
      %p176 = pneg %p54
      %p177 = pneg %p78
      %p178 = pneg %p75
      %p179 = pneg %p99
      %p180 = pneg %p96
      %p181 = pneg %p125
      %p182 = pneg %p122
      %p183 = scmp.lt.s32.totalorder %s15, 1
      %s184 = scalar_select %p183, %s15, 1
      %s185 = smul.addr %s184, 4
      %s186 = scalar_lea.vmem %s4, %s185
      %p187 = scmp.lt.s32.totalorder %s15, 1
      %s188 = scalar_select %p187, %s15, 1
      %s189 = smul.addr %s188, 4
      %s190 = smul.addr %s189, 8
      %s191 = scalar_lea.vmem %s0, %s190
      %p192 = scmp.lt.s32.totalorder %s15, 1
      %s193 = scalar_select %p192, %s15, 1
      %s194 = smul.addr %s193, 4
      %s195 = scalar_lea.vmem %s4, %s194
      %v196 = vld [vmem:[%s191] sm:$0x1f]
      %v197 = vld [vmem:[%s191 + $0x8] sm:$0x1f]
      %s198 = scalar_lea.vmem %s191, 16
      %v199 = vld [vmem:[%s198] sm:$0x1f]
      %v200 = vld [vmem:[%s198 + $0x8] sm:$0x1f]
      %v201 = vld [vmem:[%s1] sm:$0xff]
      %v202 = vld [vmem:[%s1 + $0x8] sm:$0xff]
      %v203 = vld [vmem:[%s1 + $0x10] sm:$0xff]
      %v204 = vld [vmem:[%s1 + $0x18] sm:$0xff]
      %v205 = vld [vmem:[%s1 + $0x20] sm:$0xff]
      %v206 = vld [vmem:[%s1 + $0x28] sm:$0xff]
      %v207 = vld [vmem:[%s1 + $0x30] sm:$0xff]
      %v208 = vld [vmem:[%s1 + $0x38] sm:$0xff]
      %v209 = vld [vmem:[%s1 + $0x40] sm:$0xff]
      %v210 = vld [vmem:[%s1 + $0x48] sm:$0xff]
      %v211 = vld [vmem:[%s1 + $0x50] sm:$0xff]
      %v212 = vld [vmem:[%s1 + $0x58] sm:$0xff]
      %v213 = vld [vmem:[%s1 + $0x60] sm:$0xff]
      %v214 = vld [vmem:[%s1 + $0x68] sm:$0xff]
      %v215 = vld [vmem:[%s1 + $0x70] sm:$0xff]
      %v216 = vld [vmem:[%s1 + $0x78] sm:$0xff]
      %v217 = vld [vmem:[%s1 + $0x80] sm:$0xff]
      %v218 = vld [vmem:[%s1 + $0x88] sm:$0xff]
      %v219 = vld [vmem:[%s1 + $0x90] sm:$0xff]
      %v220 = vld [vmem:[%s1 + $0x98] sm:$0xff]
      %s221 = scalar_lea.vmem %s1, 160
      %v222 = vld [vmem:[%s221] sm:$0xff]
      %v223 = vld [vmem:[%s221 + $0x8] sm:$0xff]
      %v224 = vld [vmem:[%s221 + $0x10] sm:$0xff]
      %v225 = vld [vmem:[%s221 + $0x18] sm:$0xff]
      %v226 = vld [vmem:[%s221 + $0x20] sm:$0xff]
      %v227 = vld [vmem:[%s221 + $0x28] sm:$0xff]
      %v228 = vld [vmem:[%s221 + $0x30] sm:$0xff]
      %v229 = vld [vmem:[%s221 + $0x38] sm:$0xff]
      %v230 = vld [vmem:[%s221 + $0x40] sm:$0xff]
      %v231 = vld [vmem:[%s221 + $0x48] sm:$0xff]
      %v232 = vld [vmem:[%s221 + $0x50] sm:$0xff]
      %v233 = vld [vmem:[%s221 + $0x58] sm:$0xff]
      %v234 = vld [vmem:[%s221 + $0x60] sm:$0xff]
      %v235 = vld [vmem:[%s221 + $0x68] sm:$0xff]
      %v236 = vld [vmem:[%s221 + $0x70] sm:$0xff]
      %v237 = vld [vmem:[%s221 + $0x78] sm:$0xff]
      %v238 = vld [vmem:[%s221 + $0x80] sm:$0xff]
      %v239 = vld [vmem:[%s221 + $0x88] sm:$0xff]
      %v240 = vld [vmem:[%s221 + $0x90] sm:$0xff]
      %v241 = vld [vmem:[%s221 + $0x98] sm:$0xff]
      %vm242 = vcmask 261120
      %v244 = vsel %vm242, %v200, 0
      %246 = vmatpush.msra.mxu0 %v237
      %247 = vmatpush.msra.mxu0 %v236
      %248 = vmatpush.msra.mxu0 %v235
      %249 = vmatpush.msra.mxu0 %v234
      %250 = vmatpush.msra.mxu0 %v233
      %251 = vmatpush.msra.mxu0 %v232
      %252 = vmatpush.msra.mxu0 %v231
      %253 = vmatpush.msra.mxu0 %v230
      %254 = vmatpush.msra.mxu0 %v229
      %255 = vmatpush.msra.mxu0 %v228
      %256 = vmatpush.msra.mxu0 %v227
      %257 = vmatpush.msra.mxu0 %v226
      %258 = vmatpush.msra.mxu0 %v225
      %259 = vmatpush.msra.mxu0 %v224
      %260 = vmatpush.msra.mxu0 %v223
      %261 = vmatpush.msra.mxu0 %v222
      %262 = vmatmul.f32.gmra.mxu0 %v199
      %v263 = vpop.f32.mrf.mxu0
      %v264 = vadd.f32 0.0, %v263
      %265 = vdwg.mxu0
      %266 = vmatpush.msra.mxu0 0.0
      %267 = vmatpush.msra.mxu0 0.0
      %268 = vmatpush.msra.mxu0 0.0
      %269 = vmatpush.msra.mxu0 0.0
      %270 = vmatpush.msra.mxu0 0.0
      %271 = vmatpush.msra.mxu0 0.0
      %272 = vmatpush.msra.mxu0 0.0
      %273 = vmatpush.msra.mxu0 0.0
      %274 = vmatpush.msra.mxu0 0.0
      %275 = vmatpush.msra.mxu0 0.0
      %276 = vmatpush.msra.mxu0 0.0
      %277 = vmatpush.msra.mxu0 0.0
      %278 = vmatpush.msra.mxu0 %v241
      %279 = vmatpush.msra.mxu0 %v240
      %280 = vmatpush.msra.mxu0 %v239
      %281 = vmatpush.msra.mxu0 %v238
      %282 = vmatmul.f32.gmra.mxu0 %v244
      %v283 = vpop.f32.mrf.mxu0
      %v284 = vadd.f32 %v264, %v283
      %285 = vdwg.mxu0
      %v287 = vsel %vm242, %v197, 0
      %289 = vmatpush.msra.mxu0 %v216
      %290 = vmatpush.msra.mxu0 %v215
      %291 = vmatpush.msra.mxu0 %v214
      %292 = vmatpush.msra.mxu0 %v213
      %293 = vmatpush.msra.mxu0 %v212
      %294 = vmatpush.msra.mxu0 %v211
      %295 = vmatpush.msra.mxu0 %v210
      %296 = vmatpush.msra.mxu0 %v209
      %297 = vmatpush.msra.mxu0 %v208
      %298 = vmatpush.msra.mxu0 %v207
      %299 = vmatpush.msra.mxu0 %v206
      %300 = vmatpush.msra.mxu0 %v205
      %301 = vmatpush.msra.mxu0 %v204
      %302 = vmatpush.msra.mxu0 %v203
      %303 = vmatpush.msra.mxu0 %v202
      %304 = vmatpush.msra.mxu0 %v201
      %305 = vmatmul.f32.gmra.mxu0 %v196
      %v306 = vpop.f32.mrf.mxu0
      %v307 = vadd.f32 %v284, %v306
      %308 = vdwg.mxu0
      %309 = vmatpush.msra.mxu0 0.0
      %310 = vmatpush.msra.mxu0 0.0
      %311 = vmatpush.msra.mxu0 0.0
      %312 = vmatpush.msra.mxu0 0.0
      %313 = vmatpush.msra.mxu0 0.0
      %314 = vmatpush.msra.mxu0 0.0
      %315 = vmatpush.msra.mxu0 0.0
      %316 = vmatpush.msra.mxu0 0.0
      %317 = vmatpush.msra.mxu0 0.0
      %318 = vmatpush.msra.mxu0 0.0
      %319 = vmatpush.msra.mxu0 0.0
      %320 = vmatpush.msra.mxu0 0.0
      %321 = vmatpush.msra.mxu0 %v220
      %322 = vmatpush.msra.mxu0 %v219
      %323 = vmatpush.msra.mxu0 %v218
      %324 = vmatpush.msra.mxu0 %v217
      %325 = vmatmul.f32.gmra.mxu0 %v287
      %v326 = vpop.f32.mrf.mxu0
      %v327 = vadd.f32 %v307, %v326
      %328 = vdwg.mxu0
      %s329 = scalar_lea.vmem %s1, 320
      %v330 = vld [vmem:[%s329] sm:$0xff]
      %v331 = vld [vmem:[%s329 + $0x8] sm:$0xff]
      %v332 = vld [vmem:[%s329 + $0x10] sm:$0xff]
      %v333 = vld [vmem:[%s329 + $0x18] sm:$0xff]
      %v334 = vld [vmem:[%s329 + $0x20] sm:$0xff]
      %v335 = vld [vmem:[%s329 + $0x28] sm:$0xff]
      %v336 = vld [vmem:[%s329 + $0x30] sm:$0xff]
      %v337 = vld [vmem:[%s329 + $0x38] sm:$0xff]
      %v338 = vld [vmem:[%s329 + $0x40] sm:$0xff]
      %v339 = vld [vmem:[%s329 + $0x48] sm:$0xff]
      %v340 = vld [vmem:[%s329 + $0x50] sm:$0xff]
      %v341 = vld [vmem:[%s329 + $0x58] sm:$0xff]
      %v342 = vld [vmem:[%s329 + $0x60] sm:$0xff]
      %v343 = vld [vmem:[%s329 + $0x68] sm:$0xff]
      %v344 = vld [vmem:[%s329 + $0x70] sm:$0xff]
      %v345 = vld [vmem:[%s329 + $0x78] sm:$0xff]
      %v346 = vld [vmem:[%s329 + $0x80] sm:$0xff]
      %v347 = vld [vmem:[%s329 + $0x88] sm:$0xff]
      %v348 = vld [vmem:[%s329 + $0x90] sm:$0xff]
      %v349 = vld [vmem:[%s329 + $0x98] sm:$0xff]
      %v351 = vrot.slane %v196, 1
      %v352 = vrot.slane %v197, 1
      %v354 = vsel %vm242, %v352, 0
      %356 = vmatpush.msra.mxu0 %v345
      %357 = vmatpush.msra.mxu0 %v344
      %358 = vmatpush.msra.mxu0 %v343
      %359 = vmatpush.msra.mxu0 %v342
      %360 = vmatpush.msra.mxu0 %v341
      %361 = vmatpush.msra.mxu0 %v340
      %362 = vmatpush.msra.mxu0 %v339
      %363 = vmatpush.msra.mxu0 %v338
      %364 = vmatpush.msra.mxu0 %v337
      %365 = vmatpush.msra.mxu0 %v336
      %366 = vmatpush.msra.mxu0 %v335
      %367 = vmatpush.msra.mxu0 %v334
      %368 = vmatpush.msra.mxu0 %v333
      %369 = vmatpush.msra.mxu0 %v332
      %370 = vmatpush.msra.mxu0 %v331
      %371 = vmatpush.msra.mxu0 %v330
      %372 = vmatmul.f32.gmra.mxu0 %v351
      %v373 = vpop.f32.mrf.mxu0
      %v374 = vadd.f32 0.0, %v373
      %375 = vdwg.mxu0
      %376 = vmatpush.msra.mxu0 0.0
      %377 = vmatpush.msra.mxu0 0.0
      %378 = vmatpush.msra.mxu0 0.0
      %379 = vmatpush.msra.mxu0 0.0
      %380 = vmatpush.msra.mxu0 0.0
      %381 = vmatpush.msra.mxu0 0.0
      %382 = vmatpush.msra.mxu0 0.0
      %383 = vmatpush.msra.mxu0 0.0
      %384 = vmatpush.msra.mxu0 0.0
      %385 = vmatpush.msra.mxu0 0.0
      %386 = vmatpush.msra.mxu0 0.0
      %387 = vmatpush.msra.mxu0 0.0
      %388 = vmatpush.msra.mxu0 %v349
      %389 = vmatpush.msra.mxu0 %v348
      %390 = vmatpush.msra.mxu0 %v347
      %391 = vmatpush.msra.mxu0 %v346
      %392 = vmatmul.f32.gmra.mxu0 %v354
      %v393 = vpop.f32.mrf.mxu0
      %v394 = vadd.f32 %v374, %v393
      %395 = vdwg.mxu0
      %v396 = vadd.f32 %v327, %v394
      %v397 = vld [vmem:[%s2] sm:$0x1]
      %v399 = vperm.slane %v397, 0
      %v401 = vmul.f32 %v396, %v399
      %v402 = vld [vmem:[%s3] sm:$0x1]
      %v404 = vperm.slane %v402, 0
      %v406 = vadd.f32 %v401, %v404
      %v407 = vmax.f32 %v406, 0.0
      %s408 = scalar_lea.vmem %s1, 480
      %v409 = vld [vmem:[%s408] sm:$0xff]
      %v410 = vld [vmem:[%s408 + $0x8] sm:$0xff]
      %v411 = vld [vmem:[%s408 + $0x10] sm:$0xff]
      %v412 = vld [vmem:[%s408 + $0x18] sm:$0xff]
      %v413 = vld [vmem:[%s408 + $0x20] sm:$0xff]
      %v414 = vld [vmem:[%s408 + $0x28] sm:$0xff]
      %v415 = vld [vmem:[%s408 + $0x30] sm:$0xff]
      %v416 = vld [vmem:[%s408 + $0x38] sm:$0xff]
      %v417 = vld [vmem:[%s408 + $0x40] sm:$0xff]
      %v418 = vld [vmem:[%s408 + $0x48] sm:$0xff]
      %v419 = vld [vmem:[%s408 + $0x50] sm:$0xff]
      %v420 = vld [vmem:[%s408 + $0x58] sm:$0xff]
      %v421 = vld [vmem:[%s408 + $0x60] sm:$0xff]
      %v422 = vld [vmem:[%s408 + $0x68] sm:$0xff]
      %v423 = vld [vmem:[%s408 + $0x70] sm:$0xff]
      %v424 = vld [vmem:[%s408 + $0x78] sm:$0xff]
      %v425 = vld [vmem:[%s408 + $0x80] sm:$0xff]
      %v426 = vld [vmem:[%s408 + $0x88] sm:$0xff]
      %v427 = vld [vmem:[%s408 + $0x90] sm:$0xff]
      %v428 = vld [vmem:[%s408 + $0x98] sm:$0xff]
      %s429 = scalar_lea.vmem %s1, 640
      %v430 = vld [vmem:[%s429] sm:$0xff]
      %v431 = vld [vmem:[%s429 + $0x8] sm:$0xff]
      %v432 = vld [vmem:[%s429 + $0x10] sm:$0xff]
      %v433 = vld [vmem:[%s429 + $0x18] sm:$0xff]
      %v434 = vld [vmem:[%s429 + $0x20] sm:$0xff]
      %v435 = vld [vmem:[%s429 + $0x28] sm:$0xff]
      %v436 = vld [vmem:[%s429 + $0x30] sm:$0xff]
      %v437 = vld [vmem:[%s429 + $0x38] sm:$0xff]
      %v438 = vld [vmem:[%s429 + $0x40] sm:$0xff]
      %v439 = vld [vmem:[%s429 + $0x48] sm:$0xff]
      %v440 = vld [vmem:[%s429 + $0x50] sm:$0xff]
      %v441 = vld [vmem:[%s429 + $0x58] sm:$0xff]
      %v442 = vld [vmem:[%s429 + $0x60] sm:$0xff]
      %v443 = vld [vmem:[%s429 + $0x68] sm:$0xff]
      %v444 = vld [vmem:[%s429 + $0x70] sm:$0xff]
      %v445 = vld [vmem:[%s429 + $0x78] sm:$0xff]
      %v446 = vld [vmem:[%s429 + $0x80] sm:$0xff]
      %v447 = vld [vmem:[%s429 + $0x88] sm:$0xff]
      %v448 = vld [vmem:[%s429 + $0x90] sm:$0xff]
      %v449 = vld [vmem:[%s429 + $0x98] sm:$0xff]
      %450 = vmatpush.msra.mxu0 %v445
      %451 = vmatpush.msra.mxu0 %v444
      %452 = vmatpush.msra.mxu0 %v443
      %453 = vmatpush.msra.mxu0 %v442
      %454 = vmatpush.msra.mxu0 %v441
      %455 = vmatpush.msra.mxu0 %v440
      %456 = vmatpush.msra.mxu0 %v439
      %457 = vmatpush.msra.mxu0 %v438
      %458 = vmatpush.msra.mxu0 %v437
      %459 = vmatpush.msra.mxu0 %v436
      %460 = vmatpush.msra.mxu0 %v435
      %461 = vmatpush.msra.mxu0 %v434
      %462 = vmatpush.msra.mxu0 %v433
      %463 = vmatpush.msra.mxu0 %v432
      %464 = vmatpush.msra.mxu0 %v431
      %465 = vmatpush.msra.mxu0 %v430
      %466 = vmatmul.f32.gmra.mxu0 %v199
      %v467 = vpop.f32.mrf.mxu0
      %v468 = vadd.f32 0.0, %v467
      %469 = vdwg.mxu0
      %470 = vmatpush.msra.mxu0 0.0
      %471 = vmatpush.msra.mxu0 0.0
      %472 = vmatpush.msra.mxu0 0.0
      %473 = vmatpush.msra.mxu0 0.0
      %474 = vmatpush.msra.mxu0 0.0
      %475 = vmatpush.msra.mxu0 0.0
      %476 = vmatpush.msra.mxu0 0.0
      %477 = vmatpush.msra.mxu0 0.0
      %478 = vmatpush.msra.mxu0 0.0
      %479 = vmatpush.msra.mxu0 0.0
      %480 = vmatpush.msra.mxu0 0.0
      %481 = vmatpush.msra.mxu0 0.0
      %482 = vmatpush.msra.mxu0 %v449
      %483 = vmatpush.msra.mxu0 %v448
      %484 = vmatpush.msra.mxu0 %v447
      %485 = vmatpush.msra.mxu0 %v446
      %486 = vmatmul.f32.gmra.mxu0 %v244
      %v487 = vpop.f32.mrf.mxu0
      %v488 = vadd.f32 %v468, %v487
      %489 = vdwg.mxu0
      %490 = vmatpush.msra.mxu0 %v424
      %491 = vmatpush.msra.mxu0 %v423
      %492 = vmatpush.msra.mxu0 %v422
      %493 = vmatpush.msra.mxu0 %v421
      %494 = vmatpush.msra.mxu0 %v420
      %495 = vmatpush.msra.mxu0 %v419
      %496 = vmatpush.msra.mxu0 %v418
      %497 = vmatpush.msra.mxu0 %v417
      %498 = vmatpush.msra.mxu0 %v416
      %499 = vmatpush.msra.mxu0 %v415
      %500 = vmatpush.msra.mxu0 %v414
      %501 = vmatpush.msra.mxu0 %v413
      %502 = vmatpush.msra.mxu0 %v412
      %503 = vmatpush.msra.mxu0 %v411
      %504 = vmatpush.msra.mxu0 %v410
      %505 = vmatpush.msra.mxu0 %v409
      %506 = vmatmul.f32.gmra.mxu0 %v196
      %v507 = vpop.f32.mrf.mxu0
      %v508 = vadd.f32 %v488, %v507
      %509 = vdwg.mxu0
      %510 = vmatpush.msra.mxu0 0.0
      %511 = vmatpush.msra.mxu0 0.0
      %512 = vmatpush.msra.mxu0 0.0
      %513 = vmatpush.msra.mxu0 0.0
      %514 = vmatpush.msra.mxu0 0.0
      %515 = vmatpush.msra.mxu0 0.0
      %516 = vmatpush.msra.mxu0 0.0
      %517 = vmatpush.msra.mxu0 0.0
      %518 = vmatpush.msra.mxu0 0.0
      %519 = vmatpush.msra.mxu0 0.0
      %520 = vmatpush.msra.mxu0 0.0
      %521 = vmatpush.msra.mxu0 0.0
      %522 = vmatpush.msra.mxu0 %v428
      %523 = vmatpush.msra.mxu0 %v427
      %524 = vmatpush.msra.mxu0 %v426
      %525 = vmatpush.msra.mxu0 %v425
      %526 = vmatmul.f32.gmra.mxu0 %v287
      %v527 = vpop.f32.mrf.mxu0
      %v528 = vadd.f32 %v508, %v527
      %529 = vdwg.mxu0
      %s530 = scalar_lea.vmem %s1, 800
      %v531 = vld [vmem:[%s530] sm:$0xff]
      %v532 = vld [vmem:[%s530 + $0x8] sm:$0xff]
      %v533 = vld [vmem:[%s530 + $0x10] sm:$0xff]
      %v534 = vld [vmem:[%s530 + $0x18] sm:$0xff]
      %v535 = vld [vmem:[%s530 + $0x20] sm:$0xff]
      %v536 = vld [vmem:[%s530 + $0x28] sm:$0xff]
      %v537 = vld [vmem:[%s530 + $0x30] sm:$0xff]
      %v538 = vld [vmem:[%s530 + $0x38] sm:$0xff]
      %v539 = vld [vmem:[%s530 + $0x40] sm:$0xff]
      %v540 = vld [vmem:[%s530 + $0x48] sm:$0xff]
      %v541 = vld [vmem:[%s530 + $0x50] sm:$0xff]
      %v542 = vld [vmem:[%s530 + $0x58] sm:$0xff]
      %v543 = vld [vmem:[%s530 + $0x60] sm:$0xff]
      %v544 = vld [vmem:[%s530 + $0x68] sm:$0xff]
      %v545 = vld [vmem:[%s530 + $0x70] sm:$0xff]
      %v546 = vld [vmem:[%s530 + $0x78] sm:$0xff]
      %v547 = vld [vmem:[%s530 + $0x80] sm:$0xff]
      %v548 = vld [vmem:[%s530 + $0x88] sm:$0xff]
      %v549 = vld [vmem:[%s530 + $0x90] sm:$0xff]
      %v550 = vld [vmem:[%s530 + $0x98] sm:$0xff]
      %551 = vmatpush.msra.mxu0 %v546
      %552 = vmatpush.msra.mxu0 %v545
      %553 = vmatpush.msra.mxu0 %v544
      %554 = vmatpush.msra.mxu0 %v543
      %555 = vmatpush.msra.mxu0 %v542
      %556 = vmatpush.msra.mxu0 %v541
      %557 = vmatpush.msra.mxu0 %v540
      %558 = vmatpush.msra.mxu0 %v539
      %559 = vmatpush.msra.mxu0 %v538
      %560 = vmatpush.msra.mxu0 %v537
      %561 = vmatpush.msra.mxu0 %v536
      %562 = vmatpush.msra.mxu0 %v535
      %563 = vmatpush.msra.mxu0 %v534
      %564 = vmatpush.msra.mxu0 %v533
      %565 = vmatpush.msra.mxu0 %v532
      %566 = vmatpush.msra.mxu0 %v531
      %567 = vmatmul.f32.gmra.mxu0 %v351
      %v568 = vpop.f32.mrf.mxu0
      %v569 = vadd.f32 0.0, %v568
      %570 = vdwg.mxu0
      %571 = vmatpush.msra.mxu0 0.0
      %572 = vmatpush.msra.mxu0 0.0
      %573 = vmatpush.msra.mxu0 0.0
      %574 = vmatpush.msra.mxu0 0.0
      %575 = vmatpush.msra.mxu0 0.0
      %576 = vmatpush.msra.mxu0 0.0
      %577 = vmatpush.msra.mxu0 0.0
      %578 = vmatpush.msra.mxu0 0.0
      %579 = vmatpush.msra.mxu0 0.0
      %580 = vmatpush.msra.mxu0 0.0
      %581 = vmatpush.msra.mxu0 0.0
      %582 = vmatpush.msra.mxu0 0.0
      %583 = vmatpush.msra.mxu0 %v550
      %584 = vmatpush.msra.mxu0 %v549
      %585 = vmatpush.msra.mxu0 %v548
      %586 = vmatpush.msra.mxu0 %v547
      %587 = vmatmul.f32.gmra.mxu0 %v354
      %v588 = vpop.f32.mrf.mxu0
      %v589 = vadd.f32 %v569, %v588
      %590 = vdwg.mxu0
      %v591 = vadd.f32 %v528, %v589
      %v592 = vmul.f32 %v591, %v399
      %v593 = vadd.f32 %v592, %v404
      %v594 = vmax.f32 %v593, 0.0
      %v595 = vmax.f32 %v407, %v594
      %596 = vmatpush.msra.mxu0 %v237
      %597 = vmatpush.msra.mxu0 %v236
      %598 = vmatpush.msra.mxu0 %v235
      %599 = vmatpush.msra.mxu0 %v234
      %600 = vmatpush.msra.mxu0 %v233
      %601 = vmatpush.msra.mxu0 %v232
      %602 = vmatpush.msra.mxu0 %v231
      %603 = vmatpush.msra.mxu0 %v230
      %604 = vmatpush.msra.mxu0 %v229
      %605 = vmatpush.msra.mxu0 %v228
      %606 = vmatpush.msra.mxu0 %v227
      %607 = vmatpush.msra.mxu0 %v226
      %608 = vmatpush.msra.mxu0 %v225
      %609 = vmatpush.msra.mxu0 %v224
      %610 = vmatpush.msra.mxu0 %v223
      %611 = vmatpush.msra.mxu0 %v222
      %612 = vmatmul.f32.gmra.mxu0 %v351
      %v613 = vpop.f32.mrf.mxu0
      %v614 = vadd.f32 0.0, %v613
      %615 = vdwg.mxu0
      %616 = vmatpush.msra.mxu0 0.0
      %617 = vmatpush.msra.mxu0 0.0
      %618 = vmatpush.msra.mxu0 0.0
      %619 = vmatpush.msra.mxu0 0.0
      %620 = vmatpush.msra.mxu0 0.0
      %621 = vmatpush.msra.mxu0 0.0
      %622 = vmatpush.msra.mxu0 0.0
      %623 = vmatpush.msra.mxu0 0.0
      %624 = vmatpush.msra.mxu0 0.0
      %625 = vmatpush.msra.mxu0 0.0
      %626 = vmatpush.msra.mxu0 0.0
      %627 = vmatpush.msra.mxu0 0.0
      %628 = vmatpush.msra.mxu0 %v241
      %629 = vmatpush.msra.mxu0 %v240
      %630 = vmatpush.msra.mxu0 %v239
      %631 = vmatpush.msra.mxu0 %v238
      %632 = vmatmul.f32.gmra.mxu0 %v354
      %v633 = vpop.f32.mrf.mxu0
      %v634 = vadd.f32 %v614, %v633
      %635 = vdwg.mxu0
      %636 = vmatpush.msra.mxu0 %v216
      %637 = vmatpush.msra.mxu0 %v215
      %638 = vmatpush.msra.mxu0 %v214
      %639 = vmatpush.msra.mxu0 %v213
      %640 = vmatpush.msra.mxu0 %v212
      %641 = vmatpush.msra.mxu0 %v211
      %642 = vmatpush.msra.mxu0 %v210
      %643 = vmatpush.msra.mxu0 %v209
      %644 = vmatpush.msra.mxu0 %v208
      %645 = vmatpush.msra.mxu0 %v207
      %646 = vmatpush.msra.mxu0 %v206
      %647 = vmatpush.msra.mxu0 %v205
      %648 = vmatpush.msra.mxu0 %v204
      %649 = vmatpush.msra.mxu0 %v203
      %650 = vmatpush.msra.mxu0 %v202
      %651 = vmatpush.msra.mxu0 %v201
      %652 = vmatmul.f32.gmra.mxu0 %v199
      %v653 = vpop.f32.mrf.mxu0
      %v654 = vadd.f32 %v634, %v653
      %655 = vdwg.mxu0
      %656 = vmatpush.msra.mxu0 0.0
      %657 = vmatpush.msra.mxu0 0.0
      %658 = vmatpush.msra.mxu0 0.0
      %659 = vmatpush.msra.mxu0 0.0
      %660 = vmatpush.msra.mxu0 0.0
      %661 = vmatpush.msra.mxu0 0.0
      %662 = vmatpush.msra.mxu0 0.0
      %663 = vmatpush.msra.mxu0 0.0
      %664 = vmatpush.msra.mxu0 0.0
      %665 = vmatpush.msra.mxu0 0.0
      %666 = vmatpush.msra.mxu0 0.0
      %667 = vmatpush.msra.mxu0 0.0
      %668 = vmatpush.msra.mxu0 %v220
      %669 = vmatpush.msra.mxu0 %v219
      %670 = vmatpush.msra.mxu0 %v218
      %671 = vmatpush.msra.mxu0 %v217
      %672 = vmatmul.f32.gmra.mxu0 %v244
      %v673 = vpop.f32.mrf.mxu0
      %v674 = vadd.f32 %v654, %v673
      %675 = vdwg.mxu0
      %v677 = vrot.slane %v199, 1
      %v678 = vrot.slane %v200, 1
      %v680 = vsel %vm242, %v678, 0
      %682 = vmatpush.msra.mxu0 %v345
      %683 = vmatpush.msra.mxu0 %v344
      %684 = vmatpush.msra.mxu0 %v343
      %685 = vmatpush.msra.mxu0 %v342
      %686 = vmatpush.msra.mxu0 %v341
      %687 = vmatpush.msra.mxu0 %v340
      %688 = vmatpush.msra.mxu0 %v339
      %689 = vmatpush.msra.mxu0 %v338
      %690 = vmatpush.msra.mxu0 %v337
      %691 = vmatpush.msra.mxu0 %v336
      %692 = vmatpush.msra.mxu0 %v335
      %693 = vmatpush.msra.mxu0 %v334
      %694 = vmatpush.msra.mxu0 %v333
      %695 = vmatpush.msra.mxu0 %v332
      %696 = vmatpush.msra.mxu0 %v331
      %697 = vmatpush.msra.mxu0 %v330
      %698 = vmatmul.f32.gmra.mxu0 %v677
      %v699 = vpop.f32.mrf.mxu0
      %v700 = vadd.f32 0.0, %v699
      %701 = vdwg.mxu0
      %702 = vmatpush.msra.mxu0 0.0
      %703 = vmatpush.msra.mxu0 0.0
      %704 = vmatpush.msra.mxu0 0.0
      %705 = vmatpush.msra.mxu0 0.0
      %706 = vmatpush.msra.mxu0 0.0
      %707 = vmatpush.msra.mxu0 0.0
      %708 = vmatpush.msra.mxu0 0.0
      %709 = vmatpush.msra.mxu0 0.0
      %710 = vmatpush.msra.mxu0 0.0
      %711 = vmatpush.msra.mxu0 0.0
      %712 = vmatpush.msra.mxu0 0.0
      %713 = vmatpush.msra.mxu0 0.0
      %714 = vmatpush.msra.mxu0 %v349
      %715 = vmatpush.msra.mxu0 %v348
      %716 = vmatpush.msra.mxu0 %v347
      %717 = vmatpush.msra.mxu0 %v346
      %718 = vmatmul.f32.gmra.mxu0 %v680
      %v719 = vpop.f32.mrf.mxu0
      %v720 = vadd.f32 %v700, %v719
      %721 = vdwg.mxu0
      %v722 = vadd.f32 %v674, %v720
      %v723 = vmul.f32 %v722, %v399
      %v724 = vadd.f32 %v723, %v404
      %v725 = vmax.f32 %v724, 0.0
      %v726 = vmax.f32 %v595, %v725
      %727 = vmatpush.msra.mxu0 %v445
      %728 = vmatpush.msra.mxu0 %v444
      %729 = vmatpush.msra.mxu0 %v443
      %730 = vmatpush.msra.mxu0 %v442
      %731 = vmatpush.msra.mxu0 %v441
      %732 = vmatpush.msra.mxu0 %v440
      %733 = vmatpush.msra.mxu0 %v439
      %734 = vmatpush.msra.mxu0 %v438
      %735 = vmatpush.msra.mxu0 %v437
      %736 = vmatpush.msra.mxu0 %v436
      %737 = vmatpush.msra.mxu0 %v435
      %738 = vmatpush.msra.mxu0 %v434
      %739 = vmatpush.msra.mxu0 %v433
      %740 = vmatpush.msra.mxu0 %v432
      %741 = vmatpush.msra.mxu0 %v431
      %742 = vmatpush.msra.mxu0 %v430
      %743 = vmatmul.f32.gmra.mxu0 %v351
      %v744 = vpop.f32.mrf.mxu0
      %v745 = vadd.f32 0.0, %v744
      %746 = vdwg.mxu0
      %747 = vmatpush.msra.mxu0 0.0
      %748 = vmatpush.msra.mxu0 0.0
      %749 = vmatpush.msra.mxu0 0.0
      %750 = vmatpush.msra.mxu0 0.0
      %751 = vmatpush.msra.mxu0 0.0
      %752 = vmatpush.msra.mxu0 0.0
      %753 = vmatpush.msra.mxu0 0.0
      %754 = vmatpush.msra.mxu0 0.0
      %755 = vmatpush.msra.mxu0 0.0
      %756 = vmatpush.msra.mxu0 0.0
      %757 = vmatpush.msra.mxu0 0.0
      %758 = vmatpush.msra.mxu0 0.0
      %759 = vmatpush.msra.mxu0 %v449
      %760 = vmatpush.msra.mxu0 %v448
      %761 = vmatpush.msra.mxu0 %v447
      %762 = vmatpush.msra.mxu0 %v446
      %763 = vmatmul.f32.gmra.mxu0 %v354
      %v764 = vpop.f32.mrf.mxu0
      %v765 = vadd.f32 %v745, %v764
      %766 = vdwg.mxu0
      %767 = vmatpush.msra.mxu0 %v424
      %768 = vmatpush.msra.mxu0 %v423
      %769 = vmatpush.msra.mxu0 %v422
      %770 = vmatpush.msra.mxu0 %v421
      %771 = vmatpush.msra.mxu0 %v420
      %772 = vmatpush.msra.mxu0 %v419
      %773 = vmatpush.msra.mxu0 %v418
      %774 = vmatpush.msra.mxu0 %v417
      %775 = vmatpush.msra.mxu0 %v416
      %776 = vmatpush.msra.mxu0 %v415
      %777 = vmatpush.msra.mxu0 %v414
      %778 = vmatpush.msra.mxu0 %v413
      %779 = vmatpush.msra.mxu0 %v412
      %780 = vmatpush.msra.mxu0 %v411
      %781 = vmatpush.msra.mxu0 %v410
      %782 = vmatpush.msra.mxu0 %v409
      %783 = vmatmul.f32.gmra.mxu0 %v199
      %v784 = vpop.f32.mrf.mxu0
      %v785 = vadd.f32 %v765, %v784
      %786 = vdwg.mxu0
      %787 = vmatpush.msra.mxu0 0.0
      %788 = vmatpush.msra.mxu0 0.0
      %789 = vmatpush.msra.mxu0 0.0
      %790 = vmatpush.msra.mxu0 0.0
      %791 = vmatpush.msra.mxu0 0.0
      %792 = vmatpush.msra.mxu0 0.0
      %793 = vmatpush.msra.mxu0 0.0
      %794 = vmatpush.msra.mxu0 0.0
      %795 = vmatpush.msra.mxu0 0.0
      %796 = vmatpush.msra.mxu0 0.0
      %797 = vmatpush.msra.mxu0 0.0
      %798 = vmatpush.msra.mxu0 0.0
      %799 = vmatpush.msra.mxu0 %v428
      %800 = vmatpush.msra.mxu0 %v427
      %801 = vmatpush.msra.mxu0 %v426
      %802 = vmatpush.msra.mxu0 %v425
      %803 = vmatmul.f32.gmra.mxu0 %v244
      %v804 = vpop.f32.mrf.mxu0
      %v805 = vadd.f32 %v785, %v804
      %806 = vdwg.mxu0
      %807 = vmatpush.msra.mxu0 %v546
      %808 = vmatpush.msra.mxu0 %v545
      %809 = vmatpush.msra.mxu0 %v544
      %810 = vmatpush.msra.mxu0 %v543
      %811 = vmatpush.msra.mxu0 %v542
      %812 = vmatpush.msra.mxu0 %v541
      %813 = vmatpush.msra.mxu0 %v540
      %814 = vmatpush.msra.mxu0 %v539
      %815 = vmatpush.msra.mxu0 %v538
      %816 = vmatpush.msra.mxu0 %v537
      %817 = vmatpush.msra.mxu0 %v536
      %818 = vmatpush.msra.mxu0 %v535
      %819 = vmatpush.msra.mxu0 %v534
      %820 = vmatpush.msra.mxu0 %v533
      %821 = vmatpush.msra.mxu0 %v532
      %822 = vmatpush.msra.mxu0 %v531
      %823 = vmatmul.f32.gmra.mxu0 %v677
      %v824 = vpop.f32.mrf.mxu0
      %v825 = vadd.f32 0.0, %v824
      %826 = vdwg.mxu0
      %827 = vmatpush.msra.mxu0 0.0
      %828 = vmatpush.msra.mxu0 0.0
      %829 = vmatpush.msra.mxu0 0.0
      %830 = vmatpush.msra.mxu0 0.0
      %831 = vmatpush.msra.mxu0 0.0
      %832 = vmatpush.msra.mxu0 0.0
      %833 = vmatpush.msra.mxu0 0.0
      %834 = vmatpush.msra.mxu0 0.0
      %835 = vmatpush.msra.mxu0 0.0
      %836 = vmatpush.msra.mxu0 0.0
      %837 = vmatpush.msra.mxu0 0.0
      %838 = vmatpush.msra.mxu0 0.0
      %839 = vmatpush.msra.mxu0 %v550
      %840 = vmatpush.msra.mxu0 %v549
      %841 = vmatpush.msra.mxu0 %v548
      %842 = vmatpush.msra.mxu0 %v547
      %843 = vmatmul.f32.gmra.mxu0 %v680
      %v844 = vpop.f32.mrf.mxu0
      %v845 = vadd.f32 %v825, %v844
      %846 = vdwg.mxu0
      %v847 = vadd.f32 %v805, %v845
      %v848 = vmul.f32 %v847, %v399
      %v849 = vadd.f32 %v848, %v404
      %v850 = vmax.f32 %v849, 0.0
      %v851 = vmax.f32 %v726, %v850
      %vm852 = vcmask 519168
      %853 = vst.msk [vmem:[%s195] sm:$0xf] %vm852, %v851
      %p854 = scmp.lt.s32.totalorder %s15, 1
      %s855 = scalar_select %p854, %s15, 1
      %s856 = smul.addr %s855, 4
      %s857 = scalar_lea.vmem %s4, %s856
      // Predicated region
      $region37: #{_lambda_.4} parent=35 // pred_check
        %p858 = pneg %p122
      $region38: #{_lambda_.4} parent=35 // pred_check_branch
        %860 = sbr.rel (%p858) target = $region40
      $region39: #{_lambda_.4} parent=35 // pred_region
        _
      $region40: #{_lambda_.4} parent=35 // pred_fallthru
        _
    $region36: #{_lambda_.4} parent=5 // pred_fallthru
      _
    %p861 = scmp.le.s32.totalorder 2, %s10
    // Predicated region
    $region41: #{_lambda_.4} parent=5 // pred_check
      %p862 = pneg %p861
    $region42: #{_lambda_.4} parent=5 // pred_check_branch
      %864 = sbr.rel (%p862) target = $region44
    $region43: #{_lambda_.4} parent=5 // pred_region
      %s865 = ssub.s32 %s10, 2
      // Predicated region
      $region45: #{_lambda_.4} parent=43 // pred_check
        %p866 = pneg %p128
      $region46: #{_lambda_.4} parent=43 // pred_check_branch
        %868 = sbr.rel (%p866) target = $region48
      $region47: #{_lambda_.4} parent=43 // pred_region
        %p869 = scmp.lt.s32.totalorder %s16, 1
        %s870 = scalar_select %p869, %s16, 1
        %s871 = smul.addr %s870, 4
        %s872 = scalar_lea.vmem %s4, %s871
      $region48: #{_lambda_.4} parent=43 // pred_fallthru
        _
    $region44: #{_lambda_.4} parent=5 // pred_fallthru
      _
  $region6: #{_lambda_.4} parent=0 // loop_footer
    %s14 = sadd.s32 1, %s10
  $region7: #{_lambda_.4} parent=0 // loop_footer_branch
    %9 = sbr.rel target = $region3
  $region8: #{_lambda_.4} parent=0 // loop_exit
    _

// kernel: _lambda_.5
$region0: #{_lambda_.5}
  #allocation0 [shape = 'u32[]', space=smem, size = 0x4, offset = 0x4, fixed_abs, tag = 'smem constant byte address 0x4 - core index']
  #allocation1 [shape = 'u32[72,128]{1,0:T(1,128)}', space=vmem, size = 0x9000, scoped, tag = 'internal scratch']
  #allocation2 [shape = 'f32[8,64]{1,0:T(8,128)}', space=vmem, size = 0x1000, scoped, tag = 'scratch operand']
  #allocation3 [shape = 'f32[8,32]{1,0:T(8,128)}', space=vmem, size = 0x1000, scoped, tag = 'scratch operand']
  #allocation4 [shape = 'f32[8,32]{1,0:T(8,128)}', space=vmem, size = 0x1000, scoped, tag = 'scratch operand']
  %s0 = inlined_call_operand.vmem [shape: f32[8,64], index: 0, kind: input, shape index: {}]
  %s1 = inlined_call_operand.vmem [shape: f32[2,64,96], index: 1, kind: input, shape index: {}]
  %s2 = inlined_call_operand.vmem [shape: f32[2,32,96], index: 2, kind: input, shape index: {}]
  %s3 = inlined_call_operand.vmem [shape: f32[2,1,96], index: 3, kind: input, shape index: {}]
  %s4 = inlined_call_operand.vmem [shape: f32[2,1,96], index: 4, kind: input, shape index: {}]
  %s5 = inlined_call_operand.vmem [shape: f32[2,64,96], index: 5, kind: input, shape index: {}]
  %s6 = inlined_call_operand.vmem [shape: f32[2,32,96], index: 6, kind: input, shape index: {}]
  %s7 = inlined_call_operand.vmem [shape: f32[2,1,96], index: 7, kind: input, shape index: {}]
  %s8 = inlined_call_operand.vmem [shape: f32[2,1,96], index: 8, kind: input, shape index: {}]
  %s9 = inlined_call_operand.vmem [shape: f32[32,96], index: 9, kind: input, shape index: {}]
  %s10 = inlined_call_operand.vmem [shape: f32[1,96], index: 10, kind: input, shape index: {}]
  %s11 = inlined_call_operand.vmem [shape: f32[32,32], index: 11, kind: input, shape index: {}]
  %s12 = inlined_call_operand.vmem [shape: f32[1,32], index: 12, kind: input, shape index: {}]
  %s13 = inlined_call_operand.vmem [shape: f32[1,32], index: 13, kind: input, shape index: {}]
  %s14 = inlined_call_operand.vmem [shape: f32[1,32], index: 14, kind: input, shape index: {}]
  %s15 = inlined_call_operand.vmem [shape: f32[32,32], index: 15, kind: input, shape index: {}]
  %s16 = inlined_call_operand.vmem [shape: f32[1,32], index: 16, kind: input, shape index: {}]
  %s17 = inlined_call_operand.vmem [shape: f32[32,27], index: 17, kind: input, shape index: {}]
  %s18 = inlined_call_operand.vmem [shape: f32[1,27], index: 18, kind: input, shape index: {}]
  %s19 = inlined_call_operand.hbm [shape: f32[8,27], index: 19, kind: output, shape index: {}]
  %s20 = sld [smem:[#allocation0]]
  $region86: #{_lambda_.5} parent=0
    _
  %s22 = ssub.s32 1, %s20
  %s23 = scalar_select 0, %s22, %s20
  $region1: #{_lambda_.5} parent=0
    #allocation5 [shape = 'u8[4096]{0}', space=vmem, size = 0x1000, scoped, tag = 'output window, operand 0, single buffered']
    #allocation6 [shape = 's32[1]{0}', space=sflag, size = 0x4, scoped, tag = 'scoped memory for _lambda_.5']
    %24 = vsyncpa [#allocation6], 0
    // Predicated region
    $region2: #{_lambda_.5} parent=1 // pred_check
      _
    $region3: #{_lambda_.5} parent=1 // pred_check_branch
      %26 = sbr.rel (0) target = $region5
    $region4: #{_lambda_.5} parent=1 // pred_region
      _
    $region5: #{_lambda_.5} parent=1 // pred_fallthru
      _
    // Predicated region
    $region6: #{_lambda_.5} parent=1 // pred_check
      _
    $region7: #{_lambda_.5} parent=1 // pred_check_branch
      %28 = sbr.rel (0) target = $region9
    $region8: #{_lambda_.5} parent=1 // pred_region
      _
    $region9: #{_lambda_.5} parent=1 // pred_fallthru
      _
    // Predicated region
    $region10: #{_lambda_.5} parent=1 // pred_check
      _
    $region11: #{_lambda_.5} parent=1 // pred_check_branch
      %30 = sbr.rel (0) target = $region13
    $region12: #{_lambda_.5} parent=1 // pred_region
      _
    $region13: #{_lambda_.5} parent=1 // pred_fallthru
      _
    // Predicated region
    $region14: #{_lambda_.5} parent=1 // pred_check
      _
    $region15: #{_lambda_.5} parent=1 // pred_check_branch
      %32 = sbr.rel (0) target = $region17
    $region16: #{_lambda_.5} parent=1 // pred_region
      _
    $region17: #{_lambda_.5} parent=1 // pred_fallthru
      _
    // Predicated region
    $region18: #{_lambda_.5} parent=1 // pred_check
      _
    $region19: #{_lambda_.5} parent=1 // pred_check_branch
      %34 = sbr.rel (0) target = $region21
    $region20: #{_lambda_.5} parent=1 // pred_region
      _
    $region21: #{_lambda_.5} parent=1 // pred_fallthru
      _
    // Predicated region
    $region22: #{_lambda_.5} parent=1 // pred_check
      _
    $region23: #{_lambda_.5} parent=1 // pred_check_branch
      %36 = sbr.rel (0) target = $region25
    $region24: #{_lambda_.5} parent=1 // pred_region
      _
    $region25: #{_lambda_.5} parent=1 // pred_fallthru
      _
    // Predicated region
    $region26: #{_lambda_.5} parent=1 // pred_check
      _
    $region27: #{_lambda_.5} parent=1 // pred_check_branch
      %38 = sbr.rel (0) target = $region29
    $region28: #{_lambda_.5} parent=1 // pred_region
      _
    $region29: #{_lambda_.5} parent=1 // pred_fallthru
      _
    // Predicated region
    $region30: #{_lambda_.5} parent=1 // pred_check
      _
    $region31: #{_lambda_.5} parent=1 // pred_check_branch
      %40 = sbr.rel (0) target = $region33
    $region32: #{_lambda_.5} parent=1 // pred_region
      _
    $region33: #{_lambda_.5} parent=1 // pred_fallthru
      _
    // Predicated region
    $region34: #{_lambda_.5} parent=1 // pred_check
      _
    $region35: #{_lambda_.5} parent=1 // pred_check_branch
      %42 = sbr.rel (0) target = $region37
    $region36: #{_lambda_.5} parent=1 // pred_region
      _
    $region37: #{_lambda_.5} parent=1 // pred_fallthru
      _
    // Predicated region
    $region38: #{_lambda_.5} parent=1 // pred_check
      _
    $region39: #{_lambda_.5} parent=1 // pred_check_branch
      %44 = sbr.rel (0) target = $region41
    $region40: #{_lambda_.5} parent=1 // pred_region
      _
    $region41: #{_lambda_.5} parent=1 // pred_fallthru
      _
    // Predicated region
    $region42: #{_lambda_.5} parent=1 // pred_check
      _
    $region43: #{_lambda_.5} parent=1 // pred_check_branch
      %46 = sbr.rel (0) target = $region45
    $region44: #{_lambda_.5} parent=1 // pred_region
      _
    $region45: #{_lambda_.5} parent=1 // pred_fallthru
      _
    // Predicated region
    $region46: #{_lambda_.5} parent=1 // pred_check
      _
    $region47: #{_lambda_.5} parent=1 // pred_check_branch
      %48 = sbr.rel (0) target = $region49
    $region48: #{_lambda_.5} parent=1 // pred_region
      _
    $region49: #{_lambda_.5} parent=1 // pred_fallthru
      _
    // Predicated region
    $region50: #{_lambda_.5} parent=1 // pred_check
      _
    $region51: #{_lambda_.5} parent=1 // pred_check_branch
      %50 = sbr.rel (0) target = $region53
    $region52: #{_lambda_.5} parent=1 // pred_region
      _
    $region53: #{_lambda_.5} parent=1 // pred_fallthru
      _
    // Predicated region
    $region54: #{_lambda_.5} parent=1 // pred_check
      _
    $region55: #{_lambda_.5} parent=1 // pred_check_branch
      %52 = sbr.rel (0) target = $region57
    $region56: #{_lambda_.5} parent=1 // pred_region
      _
    $region57: #{_lambda_.5} parent=1 // pred_fallthru
      _
    // Predicated region
    $region58: #{_lambda_.5} parent=1 // pred_check
      _
    $region59: #{_lambda_.5} parent=1 // pred_check_branch
      %54 = sbr.rel (0) target = $region61
    $region60: #{_lambda_.5} parent=1 // pred_region
      _
    $region61: #{_lambda_.5} parent=1 // pred_fallthru
      _
    // Predicated region
    $region62: #{_lambda_.5} parent=1 // pred_check
      _
    $region63: #{_lambda_.5} parent=1 // pred_check_branch
      %56 = sbr.rel (0) target = $region65
    $region64: #{_lambda_.5} parent=1 // pred_region
      _
    $region65: #{_lambda_.5} parent=1 // pred_fallthru
      _
    // Predicated region
    $region66: #{_lambda_.5} parent=1 // pred_check
      _
    $region67: #{_lambda_.5} parent=1 // pred_check_branch
      %58 = sbr.rel (0) target = $region69
    $region68: #{_lambda_.5} parent=1 // pred_region
      _
    $region69: #{_lambda_.5} parent=1 // pred_fallthru
      _
    // Predicated region
    $region70: #{_lambda_.5} parent=1 // pred_check
      _
    $region71: #{_lambda_.5} parent=1 // pred_check_branch
      %60 = sbr.rel (0) target = $region73
    $region72: #{_lambda_.5} parent=1 // pred_region
      _
    $region73: #{_lambda_.5} parent=1 // pred_fallthru
      _
    // Predicated region
    $region74: #{_lambda_.5} parent=1 // pred_check
      _
    $region75: #{_lambda_.5} parent=1 // pred_check_branch
      %62 = sbr.rel (0) target = $region77
    $region76: #{_lambda_.5} parent=1 // pred_region
      _
    $region77: #{_lambda_.5} parent=1 // pred_fallthru
      _
    %v63 = vld [vmem:[%s0] sm:$0xff]
    %v64 = vld [vmem:[%s1] sm:$0xff]
    %v65 = vld [vmem:[%s1 + $0x8] sm:$0xff]
    %v66 = vld [vmem:[%s1 + $0x10] sm:$0xff]
    %v67 = vld [vmem:[%s1 + $0x18] sm:$0xff]
    %v68 = vld [vmem:[%s1 + $0x20] sm:$0xff]
    %v69 = vld [vmem:[%s1 + $0x28] sm:$0xff]
    %v70 = vld [vmem:[%s1 + $0x30] sm:$0xff]
    %v71 = vld [vmem:[%s1 + $0x38] sm:$0xff]
    %v72 = vld [vmem:[%s3] sm:$0x1]
    %v74 = vperm.slane %v72, 0
    %vm76 = vcmask 523264
    %v78 = vsel %vm76, %v63, 0
    %80 = vmatpush.msra.mxu0 0.0
    %81 = vmatpush.msra.mxu0 0.0
    %82 = vmatpush.msra.mxu0 0.0
    %83 = vmatpush.msra.mxu0 0.0
    %84 = vmatpush.msra.mxu0 0.0
    %85 = vmatpush.msra.mxu0 0.0
    %86 = vmatpush.msra.mxu0 0.0
    %87 = vmatpush.msra.mxu0 0.0
    %88 = vmatpush.msra.mxu0 %v71
    %89 = vmatpush.msra.mxu0 %v70
    %90 = vmatpush.msra.mxu0 %v69
    %91 = vmatpush.msra.mxu0 %v68
    %92 = vmatpush.msra.mxu0 %v67
    %93 = vmatpush.msra.mxu0 %v66
    %94 = vmatpush.msra.mxu0 %v65
    %95 = vmatpush.msra.mxu0 %v64
    %96 = vmatmul.f32.gmra.mxu0 %v78
    %v97 = vpop.f32.mrf.mxu0
    %v98 = vadd.f32 %v74, %v97
    %99 = vdwg.mxu0
    %v100 = vld [vmem:[%s2] sm:$0xff]
    %v101 = vld [vmem:[%s2 + $0x8] sm:$0xff]
    %v102 = vld [vmem:[%s2 + $0x10] sm:$0xff]
    %v103 = vld [vmem:[%s2 + $0x18] sm:$0xff]
    %v104 = vld [vmem:[%s4] sm:$0x1]
    %v106 = vperm.slane %v104, 0
    %vm108 = vcmask 261120
    %v110 = vsel %vm108, 0.0, 0
    %112 = vmatpush.msra.mxu0 0.0
    %113 = vmatpush.msra.mxu0 0.0
    %114 = vmatpush.msra.mxu0 0.0
    %115 = vmatpush.msra.mxu0 0.0
    %116 = vmatpush.msra.mxu0 0.0
    %117 = vmatpush.msra.mxu0 0.0
    %118 = vmatpush.msra.mxu0 0.0
    %119 = vmatpush.msra.mxu0 0.0
    %120 = vmatpush.msra.mxu0 0.0
    %121 = vmatpush.msra.mxu0 0.0
    %122 = vmatpush.msra.mxu0 0.0
    %123 = vmatpush.msra.mxu0 0.0
    %124 = vmatpush.msra.mxu0 %v103
    %125 = vmatpush.msra.mxu0 %v102
    %126 = vmatpush.msra.mxu0 %v101
    %127 = vmatpush.msra.mxu0 %v100
    %128 = vmatmul.f32.gmra.mxu0 %v110
    %v129 = vpop.f32.mrf.mxu0
    %v130 = vadd.f32 %v106, %v129
    %131 = vdwg.mxu0
    %v132 = vadd.f32 %v98, %v130
    %v133 = vxor.u32 %v132, 2147483648
    %v134 = vmul.f32 %v133, 1.442695
    %v135 = vpow.pop %v134
    %v136 = vadd.f32 %v135, 1.0
    %v137 = vrcp.pop %v136
    %v138 = vmul.f32 %v136, %v137
    %v139 = vsub.f32 1.0, %v138
    %v140 = vmul.f32 %v137, %v139
    %v141 = vadd.f32 %v137, %v140
    %vm142 = vweird.f32 %v136
    %vm143 = vweird.f32 %v137
    %vm144 = vmor %vm142, %vm143
    %v145 = vsel %vm144, %v137, %v141
    %v146 = vand.u32 2147483647, %v136
    %vm147 = vcmp.eq.f32.partialorder %v146, 8.507059e+37
    %v148 = vand.u32 %v136, 2147483648
    %v149 = vor.u32 1.1754944e-38, %v148
    %v150 = vsel %vm147, %v149, %v145
    %v151 = vmul.f32 1.0, %v150
    %153 = vrot.lane.b32.xlu0 %v130, 64
    %v154 = vpop.permute.xlu0 %153
    %v156 = vmul.f32 %v151, %v154
    %158 = vrot.lane.b32.xlu0 %v156, 64
    %v159 = vpop.permute.xlu0 %158
    %v161 = vadd.f32 %v98, %v159
    %v162 = vtanh.pop %v161
    %v163 = vsub.f32 1.0, %v151
    %165 = vrot.lane.b32.xlu0 %v162, 96
    %v166 = vpop.permute.xlu0 %165
    %v168 = vmul.f32 %v163, %v166
    %v169 = vmul.f32 %v151, 0.0
    %v170 = vadd.f32 %v168, %v169
    %172 = vrot.lane.b32.xlu0 %v170, 96
    %v173 = vpop.permute.xlu0 %172
    %vm175 = vcmask 254976
    %176 = vst.msk [vmem:[#allocation2] sm:$0x3] %vm175, %v173
    %v177 = vsel %vm108, %v173, 0
    %179 = vmatpush.msra.mxu0 0.0
    %180 = vmatpush.msra.mxu0 0.0
    %181 = vmatpush.msra.mxu0 0.0
    %182 = vmatpush.msra.mxu0 0.0
    %183 = vmatpush.msra.mxu0 0.0
    %184 = vmatpush.msra.mxu0 0.0
    %185 = vmatpush.msra.mxu0 0.0
    %186 = vmatpush.msra.mxu0 0.0
    %187 = vmatpush.msra.mxu0 0.0
    %188 = vmatpush.msra.mxu0 0.0
    %189 = vmatpush.msra.mxu0 0.0
    %190 = vmatpush.msra.mxu0 0.0
    %191 = vmatpush.msra.mxu0 %v103
    %192 = vmatpush.msra.mxu0 %v102
    %193 = vmatpush.msra.mxu0 %v101
    %194 = vmatpush.msra.mxu0 %v100
    %195 = vmatmul.f32.gmra.mxu0 %v177
    %v196 = vpop.f32.mrf.mxu0
    %v197 = vadd.f32 %v106, %v196
    %198 = vdwg.mxu0
    %v200 = vrot.slane %v197, 6
    %v202 = vadd.f32 %v98, %v200
    %v203 = vxor.u32 %v202, 2147483648
    %v204 = vmul.f32 %v203, 1.442695
    %v205 = vpow.pop %v204
    %v206 = vadd.f32 %v205, 1.0
    %v207 = vrcp.pop %v206
    %v208 = vmul.f32 %v206, %v207
    %v209 = vsub.f32 1.0, %v208
    %v210 = vmul.f32 %v207, %v209
    %v211 = vadd.f32 %v207, %v210
    %vm212 = vweird.f32 %v206
    %vm213 = vweird.f32 %v207
    %vm214 = vmor %vm212, %vm213
    %v215 = vsel %vm214, %v207, %v211
    %v216 = vand.u32 2147483647, %v206
    %vm217 = vcmp.eq.f32.partialorder %v216, 8.507059e+37
    %v218 = vand.u32 %v206, 2147483648
    %v219 = vor.u32 1.1754944e-38, %v218
    %v220 = vsel %vm217, %v219, %v215
    %v221 = vmul.f32 1.0, %v220
    %222 = vrot.lane.b32.xlu0 %v200, 64
    %v223 = vpop.permute.xlu0 %222
    %v225 = vmul.f32 %v221, %v223
    %227 = vrot.lane.b32.xlu0 %v225, 64
    %v228 = vpop.permute.xlu0 %227
    %v230 = vadd.f32 %v98, %v228
    %v231 = vtanh.pop %v230
    %v232 = vsub.f32 1.0, %v221
    %234 = vrot.lane.b32.xlu0 %v231, 96
    %v235 = vpop.permute.xlu0 %234
    %v237 = vmul.f32 %v232, %v235
    %v238 = vrot.slane %v170, 6
    %v240 = vmul.f32 %v221, %v238
    %v241 = vadd.f32 %v237, %v240
    %243 = vrot.lane.b32.xlu0 %v241, 96
    %v244 = vpop.permute.xlu0 %243
    %vm246 = vcmask 257026
    %247 = vst.msk [vmem:[#allocation2] sm:$0xc] %vm246, %v244
    %v248 = vrot.slane %v241, 2
    %249 = vrot.lane.b32.xlu0 %v248, 96
    %v250 = vpop.permute.xlu0 %249
    %v251 = vsel %vm108, %v250, 0
    %253 = vmatpush.msra.mxu0 0.0
    %254 = vmatpush.msra.mxu0 0.0
    %255 = vmatpush.msra.mxu0 0.0
    %256 = vmatpush.msra.mxu0 0.0
    %257 = vmatpush.msra.mxu0 0.0
    %258 = vmatpush.msra.mxu0 0.0
    %259 = vmatpush.msra.mxu0 0.0
    %260 = vmatpush.msra.mxu0 0.0
    %261 = vmatpush.msra.mxu0 0.0
    %262 = vmatpush.msra.mxu0 0.0
    %263 = vmatpush.msra.mxu0 0.0
    %264 = vmatpush.msra.mxu0 0.0
    %265 = vmatpush.msra.mxu0 %v103
    %266 = vmatpush.msra.mxu0 %v102
    %267 = vmatpush.msra.mxu0 %v101
    %268 = vmatpush.msra.mxu0 %v100
    %269 = vmatmul.f32.gmra.mxu0 %v251
    %v270 = vpop.f32.mrf.mxu0
    %v271 = vadd.f32 %v106, %v270
    %272 = vdwg.mxu0
    %v274 = vrot.slane %v271, 4
    %v276 = vadd.f32 %v98, %v274
    %v277 = vxor.u32 %v276, 2147483648
    %v278 = vmul.f32 %v277, 1.442695
    %v279 = vpow.pop %v278
    %v280 = vadd.f32 %v279, 1.0
    %v281 = vrcp.pop %v280
    %v282 = vmul.f32 %v280, %v281
    %v283 = vsub.f32 1.0, %v282
    %v284 = vmul.f32 %v281, %v283
    %v285 = vadd.f32 %v281, %v284
    %vm286 = vweird.f32 %v280
    %vm287 = vweird.f32 %v281
    %vm288 = vmor %vm286, %vm287
    %v289 = vsel %vm288, %v281, %v285
    %v290 = vand.u32 2147483647, %v280
    %vm291 = vcmp.eq.f32.partialorder %v290, 8.507059e+37
    %v292 = vand.u32 %v280, 2147483648
    %v293 = vor.u32 1.1754944e-38, %v292
    %v294 = vsel %vm291, %v293, %v289
    %v295 = vmul.f32 1.0, %v294
    %296 = vrot.lane.b32.xlu0 %v274, 64
    %v297 = vpop.permute.xlu0 %296
    %v299 = vmul.f32 %v295, %v297
    %301 = vrot.lane.b32.xlu0 %v299, 64
    %v302 = vpop.permute.xlu0 %301
    %v304 = vadd.f32 %v98, %v302
    %v305 = vtanh.pop %v304
    %v306 = vsub.f32 1.0, %v295
    %308 = vrot.lane.b32.xlu0 %v305, 96
    %v309 = vpop.permute.xlu0 %308
    %v311 = vmul.f32 %v306, %v309
    %v312 = vrot.slane %v241, 6
    %v314 = vmul.f32 %v295, %v312
    %v315 = vadd.f32 %v311, %v314
    %317 = vrot.lane.b32.xlu0 %v315, 96
    %v318 = vpop.permute.xlu0 %317
    %vm320 = vcmask 259076
    %321 = vst.msk [vmem:[#allocation2] sm:$0x30] %vm320, %v318
    %v322 = vrot.slane %v315, 4
    %323 = vrot.lane.b32.xlu0 %v322, 96
    %v324 = vpop.permute.xlu0 %323
    %v325 = vsel %vm108, %v324, 0
    %327 = vmatpush.msra.mxu0 0.0
    %328 = vmatpush.msra.mxu0 0.0
    %329 = vmatpush.msra.mxu0 0.0
    %330 = vmatpush.msra.mxu0 0.0
    %331 = vmatpush.msra.mxu0 0.0
    %332 = vmatpush.msra.mxu0 0.0
    %333 = vmatpush.msra.mxu0 0.0
    %334 = vmatpush.msra.mxu0 0.0
    %335 = vmatpush.msra.mxu0 0.0
    %336 = vmatpush.msra.mxu0 0.0
    %337 = vmatpush.msra.mxu0 0.0
    %338 = vmatpush.msra.mxu0 0.0
    %339 = vmatpush.msra.mxu0 %v103
    %340 = vmatpush.msra.mxu0 %v102
    %341 = vmatpush.msra.mxu0 %v101
    %342 = vmatpush.msra.mxu0 %v100
    %343 = vmatmul.f32.gmra.mxu0 %v325
    %v344 = vpop.f32.mrf.mxu0
    %v345 = vadd.f32 %v106, %v344
    %346 = vdwg.mxu0
    %v348 = vrot.slane %v345, 2
    %v350 = vadd.f32 %v98, %v348
    %v351 = vxor.u32 %v350, 2147483648
    %v352 = vmul.f32 %v351, 1.442695
    %v353 = vpow.pop %v352
    %v354 = vadd.f32 %v353, 1.0
    %v355 = vrcp.pop %v354
    %v356 = vmul.f32 %v354, %v355
    %v357 = vsub.f32 1.0, %v356
    %v358 = vmul.f32 %v355, %v357
    %v359 = vadd.f32 %v355, %v358
    %vm360 = vweird.f32 %v354
    %vm361 = vweird.f32 %v355
    %vm362 = vmor %vm360, %vm361
    %v363 = vsel %vm362, %v355, %v359
    %v364 = vand.u32 2147483647, %v354
    %vm365 = vcmp.eq.f32.partialorder %v364, 8.507059e+37
    %v366 = vand.u32 %v354, 2147483648
    %v367 = vor.u32 1.1754944e-38, %v366
    %v368 = vsel %vm365, %v367, %v363
    %v369 = vmul.f32 1.0, %v368
    %370 = vrot.lane.b32.xlu0 %v348, 64
    %v371 = vpop.permute.xlu0 %370
    %v373 = vmul.f32 %v369, %v371
    %375 = vrot.lane.b32.xlu0 %v373, 64
    %v376 = vpop.permute.xlu0 %375
    %v378 = vadd.f32 %v98, %v376
    %v379 = vtanh.pop %v378
    %v380 = vsub.f32 1.0, %v369
    %382 = vrot.lane.b32.xlu0 %v379, 96
    %v383 = vpop.permute.xlu0 %382
    %v385 = vmul.f32 %v380, %v383
    %v386 = vrot.slane %v315, 6
    %v388 = vmul.f32 %v369, %v386
    %v389 = vadd.f32 %v385, %v388
    %391 = vrot.lane.b32.xlu0 %v389, 96
    %v392 = vpop.permute.xlu0 %391
    %vm394 = vcmask 261126
    %395 = vst.msk [vmem:[#allocation2] sm:$0xc0] %vm394, %v392
    %s396 = scalar_lea.vmem %s1, 64
    %v397 = vld [vmem:[%s396] sm:$0xff]
    %v398 = vld [vmem:[%s396 + $0x8] sm:$0xff]
    %v399 = vld [vmem:[%s396 + $0x10] sm:$0xff]
    %v400 = vld [vmem:[%s396 + $0x18] sm:$0xff]
    %v401 = vld [vmem:[%s396 + $0x20] sm:$0xff]
    %v402 = vld [vmem:[%s396 + $0x28] sm:$0xff]
    %v403 = vld [vmem:[%s396 + $0x30] sm:$0xff]
    %v404 = vld [vmem:[%s396 + $0x38] sm:$0xff]
    %s405 = scalar_lea.vmem %s3, 1
    %v406 = vld [vmem:[%s405] sm:$0x1]
    %v408 = vperm.slane %v406, 0
    %410 = vmatpush.msra.mxu0 0.0
    %411 = vmatpush.msra.mxu0 0.0
    %412 = vmatpush.msra.mxu0 0.0
    %413 = vmatpush.msra.mxu0 0.0
    %414 = vmatpush.msra.mxu0 0.0
    %415 = vmatpush.msra.mxu0 0.0
    %416 = vmatpush.msra.mxu0 0.0
    %417 = vmatpush.msra.mxu0 0.0
    %418 = vmatpush.msra.mxu0 %v404
    %419 = vmatpush.msra.mxu0 %v403
    %420 = vmatpush.msra.mxu0 %v402
    %421 = vmatpush.msra.mxu0 %v401
    %422 = vmatpush.msra.mxu0 %v400
    %423 = vmatpush.msra.mxu0 %v399
    %424 = vmatpush.msra.mxu0 %v398
    %425 = vmatpush.msra.mxu0 %v397
    %426 = vmatmul.f32.gmra.mxu0 %v78
    %v427 = vpop.f32.mrf.mxu0
    %v428 = vadd.f32 %v408, %v427
    %429 = vdwg.mxu0
    %s430 = scalar_lea.vmem %s2, 32
    %v431 = vld [vmem:[%s430] sm:$0xff]
    %v432 = vld [vmem:[%s430 + $0x8] sm:$0xff]
    %v433 = vld [vmem:[%s430 + $0x10] sm:$0xff]
    %v434 = vld [vmem:[%s430 + $0x18] sm:$0xff]
    %s435 = scalar_lea.vmem %s4, 1
    %v436 = vld [vmem:[%s435] sm:$0x1]
    %v438 = vperm.slane %v436, 0
    %440 = vmatpush.msra.mxu0 0.0
    %441 = vmatpush.msra.mxu0 0.0
    %442 = vmatpush.msra.mxu0 0.0
    %443 = vmatpush.msra.mxu0 0.0
    %444 = vmatpush.msra.mxu0 0.0
    %445 = vmatpush.msra.mxu0 0.0
    %446 = vmatpush.msra.mxu0 0.0
    %447 = vmatpush.msra.mxu0 0.0
    %448 = vmatpush.msra.mxu0 0.0
    %449 = vmatpush.msra.mxu0 0.0
    %450 = vmatpush.msra.mxu0 0.0
    %451 = vmatpush.msra.mxu0 0.0
    %452 = vmatpush.msra.mxu0 %v434
    %453 = vmatpush.msra.mxu0 %v433
    %454 = vmatpush.msra.mxu0 %v432
    %455 = vmatpush.msra.mxu0 %v431
    %456 = vmatmul.f32.gmra.mxu0 %v110
    %v457 = vpop.f32.mrf.mxu0
    %v458 = vadd.f32 %v438, %v457
    %459 = vdwg.mxu0
    %v461 = vrot.slane %v458, 2
    %v463 = vadd.f32 %v428, %v461
    %v464 = vxor.u32 %v463, 2147483648
    %v465 = vmul.f32 %v464, 1.442695
    %v466 = vpow.pop %v465
    %v467 = vadd.f32 %v466, 1.0
    %v468 = vrcp.pop %v467
    %v469 = vmul.f32 %v467, %v468
    %v470 = vsub.f32 1.0, %v469
    %v471 = vmul.f32 %v468, %v470
    %v472 = vadd.f32 %v468, %v471
    %vm473 = vweird.f32 %v467
    %vm474 = vweird.f32 %v468
    %vm475 = vmor %vm473, %vm474
    %v476 = vsel %vm475, %v468, %v472
    %v477 = vand.u32 2147483647, %v467
    %vm478 = vcmp.eq.f32.partialorder %v477, 8.507059e+37
    %v479 = vand.u32 %v467, 2147483648
    %v480 = vor.u32 1.1754944e-38, %v479
    %v481 = vsel %vm478, %v480, %v476
    %v482 = vmul.f32 1.0, %v481
    %483 = vrot.lane.b32.xlu0 %v461, 64
    %v484 = vpop.permute.xlu0 %483
    %v486 = vmul.f32 %v482, %v484
    %488 = vrot.lane.b32.xlu0 %v486, 64
    %v489 = vpop.permute.xlu0 %488
    %v491 = vadd.f32 %v428, %v489
    %v492 = vtanh.pop %v491
    %v493 = vsub.f32 1.0, %v482
    %495 = vrot.lane.b32.xlu0 %v492, 96
    %v496 = vpop.permute.xlu0 %495
    %v498 = vmul.f32 %v493, %v496
    %v499 = vmul.f32 %v482, 0.0
    %v500 = vadd.f32 %v498, %v499
    %vm501 = vcmask 523526
    %502 = vst.msk [vmem:[#allocation2] sm:$0xc0] %vm501, %v500
    %v504 = vrot.slane %v500, 6
    %505 = vrot.lane.b32.xlu0 %v504, 96
    %v506 = vpop.permute.xlu0 %505
    %v507 = vsel %vm108, %v506, 0
    %509 = vmatpush.msra.mxu0 0.0
    %510 = vmatpush.msra.mxu0 0.0
    %511 = vmatpush.msra.mxu0 0.0
    %512 = vmatpush.msra.mxu0 0.0
    %513 = vmatpush.msra.mxu0 0.0
    %514 = vmatpush.msra.mxu0 0.0
    %515 = vmatpush.msra.mxu0 0.0
    %516 = vmatpush.msra.mxu0 0.0
    %517 = vmatpush.msra.mxu0 0.0
    %518 = vmatpush.msra.mxu0 0.0
    %519 = vmatpush.msra.mxu0 0.0
    %520 = vmatpush.msra.mxu0 0.0
    %521 = vmatpush.msra.mxu0 %v434
    %522 = vmatpush.msra.mxu0 %v433
    %523 = vmatpush.msra.mxu0 %v432
    %524 = vmatpush.msra.mxu0 %v431
    %525 = vmatmul.f32.gmra.mxu0 %v507
    %v526 = vpop.f32.mrf.mxu0
    %v527 = vadd.f32 %v438, %v526
    %528 = vdwg.mxu0
    %v530 = vrot.slane %v527, 4
    %v532 = vadd.f32 %v428, %v530
    %v533 = vxor.u32 %v532, 2147483648
    %v534 = vmul.f32 %v533, 1.442695
    %v535 = vpow.pop %v534
    %v536 = vadd.f32 %v535, 1.0
    %v537 = vrcp.pop %v536
    %v538 = vmul.f32 %v536, %v537
    %v539 = vsub.f32 1.0, %v538
    %v540 = vmul.f32 %v537, %v539
    %v541 = vadd.f32 %v537, %v540
    %vm542 = vweird.f32 %v536
    %vm543 = vweird.f32 %v537
    %vm544 = vmor %vm542, %vm543
    %v545 = vsel %vm544, %v537, %v541
    %v546 = vand.u32 2147483647, %v536
    %vm547 = vcmp.eq.f32.partialorder %v546, 8.507059e+37
    %v548 = vand.u32 %v536, 2147483648
    %v549 = vor.u32 1.1754944e-38, %v548
    %v550 = vsel %vm547, %v549, %v545
    %v551 = vmul.f32 1.0, %v550
    %552 = vrot.lane.b32.xlu0 %v530, 64
    %v553 = vpop.permute.xlu0 %552
    %v555 = vmul.f32 %v551, %v553
    %557 = vrot.lane.b32.xlu0 %v555, 64
    %v558 = vpop.permute.xlu0 %557
    %v560 = vadd.f32 %v428, %v558
    %v561 = vtanh.pop %v560
    %v562 = vsub.f32 1.0, %v551
    %564 = vrot.lane.b32.xlu0 %v561, 96
    %v565 = vpop.permute.xlu0 %564
    %v567 = vmul.f32 %v562, %v565
    %v568 = vrot.slane %v500, 2
    %v570 = vmul.f32 %v551, %v568
    %v571 = vadd.f32 %v567, %v570
    %vm572 = vcmask 521476
    %573 = vst.msk [vmem:[#allocation2] sm:$0x30] %vm572, %v571
    %v575 = vrot.slane %v571, 4
    %576 = vrot.lane.b32.xlu0 %v575, 96
    %v577 = vpop.permute.xlu0 %576
    %v578 = vsel %vm108, %v577, 0
    %580 = vmatpush.msra.mxu0 0.0
    %581 = vmatpush.msra.mxu0 0.0
    %582 = vmatpush.msra.mxu0 0.0
    %583 = vmatpush.msra.mxu0 0.0
    %584 = vmatpush.msra.mxu0 0.0
    %585 = vmatpush.msra.mxu0 0.0
    %586 = vmatpush.msra.mxu0 0.0
    %587 = vmatpush.msra.mxu0 0.0
    %588 = vmatpush.msra.mxu0 0.0
    %589 = vmatpush.msra.mxu0 0.0
    %590 = vmatpush.msra.mxu0 0.0
    %591 = vmatpush.msra.mxu0 0.0
    %592 = vmatpush.msra.mxu0 %v434
    %593 = vmatpush.msra.mxu0 %v433
    %594 = vmatpush.msra.mxu0 %v432
    %595 = vmatpush.msra.mxu0 %v431
    %596 = vmatmul.f32.gmra.mxu0 %v578
    %v597 = vpop.f32.mrf.mxu0
    %v598 = vadd.f32 %v438, %v597
    %599 = vdwg.mxu0
    %v601 = vrot.slane %v598, 6
    %v603 = vadd.f32 %v428, %v601
    %v604 = vxor.u32 %v603, 2147483648
    %v605 = vmul.f32 %v604, 1.442695
    %v606 = vpow.pop %v605
    %v607 = vadd.f32 %v606, 1.0
    %v608 = vrcp.pop %v607
    %v609 = vmul.f32 %v607, %v608
    %v610 = vsub.f32 1.0, %v609
    %v611 = vmul.f32 %v608, %v610
    %v612 = vadd.f32 %v608, %v611
    %vm613 = vweird.f32 %v607
    %vm614 = vweird.f32 %v608
    %vm615 = vmor %vm613, %vm614
    %v616 = vsel %vm615, %v608, %v612
    %v617 = vand.u32 2147483647, %v607
    %vm618 = vcmp.eq.f32.partialorder %v617, 8.507059e+37
    %v619 = vand.u32 %v607, 2147483648
    %v620 = vor.u32 1.1754944e-38, %v619
    %v621 = vsel %vm618, %v620, %v616
    %v622 = vmul.f32 1.0, %v621
    %623 = vrot.lane.b32.xlu0 %v601, 64
    %v624 = vpop.permute.xlu0 %623
    %v626 = vmul.f32 %v622, %v624
    %628 = vrot.lane.b32.xlu0 %v626, 64
    %v629 = vpop.permute.xlu0 %628
    %v631 = vadd.f32 %v428, %v629
    %v632 = vtanh.pop %v631
    %v633 = vsub.f32 1.0, %v622
    %635 = vrot.lane.b32.xlu0 %v632, 96
    %v636 = vpop.permute.xlu0 %635
    %v638 = vmul.f32 %v633, %v636
    %v639 = vrot.slane %v571, 2
    %v641 = vmul.f32 %v622, %v639
    %v642 = vadd.f32 %v638, %v641
    %vm643 = vcmask 519426
    %644 = vst.msk [vmem:[#allocation2] sm:$0xc] %vm643, %v642
    %v646 = vrot.slane %v642, 2
    %647 = vrot.lane.b32.xlu0 %v646, 96
    %v648 = vpop.permute.xlu0 %647
    %v649 = vsel %vm108, %v648, 0
    %651 = vmatpush.msra.mxu0 0.0
    %652 = vmatpush.msra.mxu0 0.0
    %653 = vmatpush.msra.mxu0 0.0
    %654 = vmatpush.msra.mxu0 0.0
    %655 = vmatpush.msra.mxu0 0.0
    %656 = vmatpush.msra.mxu0 0.0
    %657 = vmatpush.msra.mxu0 0.0
    %658 = vmatpush.msra.mxu0 0.0
    %659 = vmatpush.msra.mxu0 0.0
    %660 = vmatpush.msra.mxu0 0.0
    %661 = vmatpush.msra.mxu0 0.0
    %662 = vmatpush.msra.mxu0 0.0
    %663 = vmatpush.msra.mxu0 %v434
    %664 = vmatpush.msra.mxu0 %v433
    %665 = vmatpush.msra.mxu0 %v432
    %666 = vmatpush.msra.mxu0 %v431
    %667 = vmatmul.f32.gmra.mxu0 %v649
    %v668 = vpop.f32.mrf.mxu0
    %v669 = vadd.f32 %v438, %v668
    %670 = vdwg.mxu0
    %v671 = vadd.f32 %v428, %v669
    %v672 = vxor.u32 %v671, 2147483648
    %v673 = vmul.f32 %v672, 1.442695
    %v674 = vpow.pop %v673
    %v675 = vadd.f32 %v674, 1.0
    %v676 = vrcp.pop %v675
    %v677 = vmul.f32 %v675, %v676
    %v678 = vsub.f32 1.0, %v677
    %v679 = vmul.f32 %v676, %v678
    %v680 = vadd.f32 %v676, %v679
    %vm681 = vweird.f32 %v675
    %vm682 = vweird.f32 %v676
    %vm683 = vmor %vm681, %vm682
    %v684 = vsel %vm683, %v676, %v680
    %v685 = vand.u32 2147483647, %v675
    %vm686 = vcmp.eq.f32.partialorder %v685, 8.507059e+37
    %v687 = vand.u32 %v675, 2147483648
    %v688 = vor.u32 1.1754944e-38, %v687
    %v689 = vsel %vm686, %v688, %v684
    %v690 = vmul.f32 1.0, %v689
    %692 = vrot.lane.b32.xlu0 %v669, 64
    %v693 = vpop.permute.xlu0 %692
    %v695 = vmul.f32 %v690, %v693
    %697 = vrot.lane.b32.xlu0 %v695, 64
    %v698 = vpop.permute.xlu0 %697
    %v700 = vadd.f32 %v428, %v698
    %v701 = vtanh.pop %v700
    %v702 = vsub.f32 1.0, %v690
    %704 = vrot.lane.b32.xlu0 %v701, 96
    %v705 = vpop.permute.xlu0 %704
    %v707 = vmul.f32 %v702, %v705
    %v709 = vmul.f32 %v690, %v646
    %v710 = vadd.f32 %v707, %v709
    %vm711 = vcmask 517376
    %712 = vst.msk [vmem:[#allocation2] sm:$0x3] %vm711, %v710
    %v713 = vld [vmem:[#allocation2] sm:$0xff]
    %v714 = vld [vmem:[%s5] sm:$0xff]
    %v715 = vld [vmem:[%s5 + $0x8] sm:$0xff]
    %v716 = vld [vmem:[%s5 + $0x10] sm:$0xff]
    %v717 = vld [vmem:[%s5 + $0x18] sm:$0xff]
    %v718 = vld [vmem:[%s5 + $0x20] sm:$0xff]
    %v719 = vld [vmem:[%s5 + $0x28] sm:$0xff]
    %v720 = vld [vmem:[%s5 + $0x30] sm:$0xff]
    %v721 = vld [vmem:[%s5 + $0x38] sm:$0xff]
    %v722 = vld [vmem:[%s7] sm:$0x1]
    %v724 = vperm.slane %v722, 0
    %v727 = vsel %vm76, %v713, 0
    %729 = vmatpush.msra.mxu0 0.0
    %730 = vmatpush.msra.mxu0 0.0
    %731 = vmatpush.msra.mxu0 0.0
    %732 = vmatpush.msra.mxu0 0.0
    %733 = vmatpush.msra.mxu0 0.0
    %734 = vmatpush.msra.mxu0 0.0
    %735 = vmatpush.msra.mxu0 0.0
    %736 = vmatpush.msra.mxu0 0.0
    %737 = vmatpush.msra.mxu0 %v721
    %738 = vmatpush.msra.mxu0 %v720
    %739 = vmatpush.msra.mxu0 %v719
    %740 = vmatpush.msra.mxu0 %v718
    %741 = vmatpush.msra.mxu0 %v717
    %742 = vmatpush.msra.mxu0 %v716
    %743 = vmatpush.msra.mxu0 %v715
    %744 = vmatpush.msra.mxu0 %v714
    %745 = vmatmul.f32.gmra.mxu0 %v727
    %v746 = vpop.f32.mrf.mxu0
    %v747 = vadd.f32 %v724, %v746
    %748 = vdwg.mxu0
    %v749 = vld [vmem:[%s6] sm:$0xff]
    %v750 = vld [vmem:[%s6 + $0x8] sm:$0xff]
    %v751 = vld [vmem:[%s6 + $0x10] sm:$0xff]
    %v752 = vld [vmem:[%s6 + $0x18] sm:$0xff]
    %v753 = vld [vmem:[%s8] sm:$0x1]
    %v755 = vperm.slane %v753, 0
    %757 = vmatpush.msra.mxu0 0.0
    %758 = vmatpush.msra.mxu0 0.0
    %759 = vmatpush.msra.mxu0 0.0
    %760 = vmatpush.msra.mxu0 0.0
    %761 = vmatpush.msra.mxu0 0.0
    %762 = vmatpush.msra.mxu0 0.0
    %763 = vmatpush.msra.mxu0 0.0
    %764 = vmatpush.msra.mxu0 0.0
    %765 = vmatpush.msra.mxu0 0.0
    %766 = vmatpush.msra.mxu0 0.0
    %767 = vmatpush.msra.mxu0 0.0
    %768 = vmatpush.msra.mxu0 0.0
    %769 = vmatpush.msra.mxu0 %v752
    %770 = vmatpush.msra.mxu0 %v751
    %771 = vmatpush.msra.mxu0 %v750
    %772 = vmatpush.msra.mxu0 %v749
    %773 = vmatmul.f32.gmra.mxu0 %v110
    %v774 = vpop.f32.mrf.mxu0
    %v775 = vadd.f32 %v755, %v774
    %776 = vdwg.mxu0
    %v777 = vadd.f32 %v747, %v775
    %v778 = vxor.u32 %v777, 2147483648
    %v779 = vmul.f32 %v778, 1.442695
    %v780 = vpow.pop %v779
    %v781 = vadd.f32 %v780, 1.0
    %v782 = vrcp.pop %v781
    %v783 = vmul.f32 %v781, %v782
    %v784 = vsub.f32 1.0, %v783
    %v785 = vmul.f32 %v782, %v784
    %v786 = vadd.f32 %v782, %v785
    %vm787 = vweird.f32 %v781
    %vm788 = vweird.f32 %v782
    %vm789 = vmor %vm787, %vm788
    %v790 = vsel %vm789, %v782, %v786
    %v791 = vand.u32 2147483647, %v781
    %vm792 = vcmp.eq.f32.partialorder %v791, 8.507059e+37
    %v793 = vand.u32 %v781, 2147483648
    %v794 = vor.u32 1.1754944e-38, %v793
    %v795 = vsel %vm792, %v794, %v790
    %v796 = vmul.f32 1.0, %v795
    %798 = vrot.lane.b32.xlu0 %v775, 64
    %v799 = vpop.permute.xlu0 %798
    %v801 = vmul.f32 %v796, %v799
    %803 = vrot.lane.b32.xlu0 %v801, 64
    %v804 = vpop.permute.xlu0 %803
    %v806 = vadd.f32 %v747, %v804
    %v807 = vtanh.pop %v806
    %v808 = vsub.f32 1.0, %v796
    %810 = vrot.lane.b32.xlu0 %v807, 96
    %v811 = vpop.permute.xlu0 %810
    %v813 = vmul.f32 %v808, %v811
    %v814 = vmul.f32 %v796, 0.0
    %v815 = vadd.f32 %v813, %v814
    %817 = vrot.lane.b32.xlu0 %v815, 96
    %v818 = vpop.permute.xlu0 %817
    %820 = vst.msk [vmem:[#allocation2] sm:$0x3] %vm175, %v818
    %v821 = vsel %vm108, %v818, 0
    %823 = vmatpush.msra.mxu0 0.0
    %824 = vmatpush.msra.mxu0 0.0
    %825 = vmatpush.msra.mxu0 0.0
    %826 = vmatpush.msra.mxu0 0.0
    %827 = vmatpush.msra.mxu0 0.0
    %828 = vmatpush.msra.mxu0 0.0
    %829 = vmatpush.msra.mxu0 0.0
    %830 = vmatpush.msra.mxu0 0.0
    %831 = vmatpush.msra.mxu0 0.0
    %832 = vmatpush.msra.mxu0 0.0
    %833 = vmatpush.msra.mxu0 0.0
    %834 = vmatpush.msra.mxu0 0.0
    %835 = vmatpush.msra.mxu0 %v752
    %836 = vmatpush.msra.mxu0 %v751
    %837 = vmatpush.msra.mxu0 %v750
    %838 = vmatpush.msra.mxu0 %v749
    %839 = vmatmul.f32.gmra.mxu0 %v821
    %v840 = vpop.f32.mrf.mxu0
    %v841 = vadd.f32 %v755, %v840
    %842 = vdwg.mxu0
    %v844 = vrot.slane %v841, 6
    %v846 = vadd.f32 %v747, %v844
    %v847 = vxor.u32 %v846, 2147483648
    %v848 = vmul.f32 %v847, 1.442695
    %v849 = vpow.pop %v848
    %v850 = vadd.f32 %v849, 1.0
    %v851 = vrcp.pop %v850
    %v852 = vmul.f32 %v850, %v851
    %v853 = vsub.f32 1.0, %v852
    %v854 = vmul.f32 %v851, %v853
    %v855 = vadd.f32 %v851, %v854
    %vm856 = vweird.f32 %v850
    %vm857 = vweird.f32 %v851
    %vm858 = vmor %vm856, %vm857
    %v859 = vsel %vm858, %v851, %v855
    %v860 = vand.u32 2147483647, %v850
    %vm861 = vcmp.eq.f32.partialorder %v860, 8.507059e+37
    %v862 = vand.u32 %v850, 2147483648
    %v863 = vor.u32 1.1754944e-38, %v862
    %v864 = vsel %vm861, %v863, %v859
    %v865 = vmul.f32 1.0, %v864
    %866 = vrot.lane.b32.xlu0 %v844, 64
    %v867 = vpop.permute.xlu0 %866
    %v869 = vmul.f32 %v865, %v867
    %871 = vrot.lane.b32.xlu0 %v869, 64
    %v872 = vpop.permute.xlu0 %871
    %v874 = vadd.f32 %v747, %v872
    %v875 = vtanh.pop %v874
    %v876 = vsub.f32 1.0, %v865
    %878 = vrot.lane.b32.xlu0 %v875, 96
    %v879 = vpop.permute.xlu0 %878
    %v881 = vmul.f32 %v876, %v879
    %v882 = vrot.slane %v815, 6
    %v884 = vmul.f32 %v865, %v882
    %v885 = vadd.f32 %v881, %v884
    %887 = vrot.lane.b32.xlu0 %v885, 96
    %v888 = vpop.permute.xlu0 %887
    %890 = vst.msk [vmem:[#allocation2] sm:$0xc] %vm246, %v888
    %v891 = vrot.slane %v885, 2
    %892 = vrot.lane.b32.xlu0 %v891, 96
    %v893 = vpop.permute.xlu0 %892
    %v894 = vsel %vm108, %v893, 0
    %896 = vmatpush.msra.mxu0 0.0
    %897 = vmatpush.msra.mxu0 0.0
    %898 = vmatpush.msra.mxu0 0.0
    %899 = vmatpush.msra.mxu0 0.0
    %900 = vmatpush.msra.mxu0 0.0
    %901 = vmatpush.msra.mxu0 0.0
    %902 = vmatpush.msra.mxu0 0.0
    %903 = vmatpush.msra.mxu0 0.0
    %904 = vmatpush.msra.mxu0 0.0
    %905 = vmatpush.msra.mxu0 0.0
    %906 = vmatpush.msra.mxu0 0.0
    %907 = vmatpush.msra.mxu0 0.0
    %908 = vmatpush.msra.mxu0 %v752
    %909 = vmatpush.msra.mxu0 %v751
    %910 = vmatpush.msra.mxu0 %v750
    %911 = vmatpush.msra.mxu0 %v749
    %912 = vmatmul.f32.gmra.mxu0 %v894
    %v913 = vpop.f32.mrf.mxu0
    %v914 = vadd.f32 %v755, %v913
    %915 = vdwg.mxu0
    %v917 = vrot.slane %v914, 4
    %v919 = vadd.f32 %v747, %v917
    %v920 = vxor.u32 %v919, 2147483648
    %v921 = vmul.f32 %v920, 1.442695
    %v922 = vpow.pop %v921
    %v923 = vadd.f32 %v922, 1.0
    %v924 = vrcp.pop %v923
    %v925 = vmul.f32 %v923, %v924
    %v926 = vsub.f32 1.0, %v925
    %v927 = vmul.f32 %v924, %v926
    %v928 = vadd.f32 %v924, %v927
    %vm929 = vweird.f32 %v923
    %vm930 = vweird.f32 %v924
    %vm931 = vmor %vm929, %vm930
    %v932 = vsel %vm931, %v924, %v928
    %v933 = vand.u32 2147483647, %v923
    %vm934 = vcmp.eq.f32.partialorder %v933, 8.507059e+37
    %v935 = vand.u32 %v923, 2147483648
    %v936 = vor.u32 1.1754944e-38, %v935
    %v937 = vsel %vm934, %v936, %v932
    %v938 = vmul.f32 1.0, %v937
    %939 = vrot.lane.b32.xlu0 %v917, 64
    %v940 = vpop.permute.xlu0 %939
    %v942 = vmul.f32 %v938, %v940
    %944 = vrot.lane.b32.xlu0 %v942, 64
    %v945 = vpop.permute.xlu0 %944
    %v947 = vadd.f32 %v747, %v945
    %v948 = vtanh.pop %v947
    %v949 = vsub.f32 1.0, %v938
    %951 = vrot.lane.b32.xlu0 %v948, 96
    %v952 = vpop.permute.xlu0 %951
    %v954 = vmul.f32 %v949, %v952
    %v955 = vrot.slane %v885, 6
    %v957 = vmul.f32 %v938, %v955
    %v958 = vadd.f32 %v954, %v957
    %960 = vrot.lane.b32.xlu0 %v958, 96
    %v961 = vpop.permute.xlu0 %960
    %963 = vst.msk [vmem:[#allocation2] sm:$0x30] %vm320, %v961
    %v964 = vrot.slane %v958, 4
    %965 = vrot.lane.b32.xlu0 %v964, 96
    %v966 = vpop.permute.xlu0 %965
    %v967 = vsel %vm108, %v966, 0
    %969 = vmatpush.msra.mxu0 0.0
    %970 = vmatpush.msra.mxu0 0.0
    %971 = vmatpush.msra.mxu0 0.0
    %972 = vmatpush.msra.mxu0 0.0
    %973 = vmatpush.msra.mxu0 0.0
    %974 = vmatpush.msra.mxu0 0.0
    %975 = vmatpush.msra.mxu0 0.0
    %976 = vmatpush.msra.mxu0 0.0
    %977 = vmatpush.msra.mxu0 0.0
    %978 = vmatpush.msra.mxu0 0.0
    %979 = vmatpush.msra.mxu0 0.0
    %980 = vmatpush.msra.mxu0 0.0
    %981 = vmatpush.msra.mxu0 %v752
    %982 = vmatpush.msra.mxu0 %v751
    %983 = vmatpush.msra.mxu0 %v750
    %984 = vmatpush.msra.mxu0 %v749
    %985 = vmatmul.f32.gmra.mxu0 %v967
    %v986 = vpop.f32.mrf.mxu0
    %v987 = vadd.f32 %v755, %v986
    %988 = vdwg.mxu0
    %v990 = vrot.slane %v987, 2
    %v992 = vadd.f32 %v747, %v990
    %v993 = vxor.u32 %v992, 2147483648
    %v994 = vmul.f32 %v993, 1.442695
    %v995 = vpow.pop %v994
    %v996 = vadd.f32 %v995, 1.0
    %v997 = vrcp.pop %v996
    %v998 = vmul.f32 %v996, %v997
    %v999 = vsub.f32 1.0, %v998
    %v1000 = vmul.f32 %v997, %v999
    %v1001 = vadd.f32 %v997, %v1000
    %vm1002 = vweird.f32 %v996
    %vm1003 = vweird.f32 %v997
    %vm1004 = vmor %vm1002, %vm1003
    %v1005 = vsel %vm1004, %v997, %v1001
    %v1006 = vand.u32 2147483647, %v996
    %vm1007 = vcmp.eq.f32.partialorder %v1006, 8.507059e+37
    %v1008 = vand.u32 %v996, 2147483648
    %v1009 = vor.u32 1.1754944e-38, %v1008
    %v1010 = vsel %vm1007, %v1009, %v1005
    %v1011 = vmul.f32 1.0, %v1010
    %1012 = vrot.lane.b32.xlu0 %v990, 64
    %v1013 = vpop.permute.xlu0 %1012
    %v1015 = vmul.f32 %v1011, %v1013
    %1017 = vrot.lane.b32.xlu0 %v1015, 64
    %v1018 = vpop.permute.xlu0 %1017
    %v1020 = vadd.f32 %v747, %v1018
    %v1021 = vtanh.pop %v1020
    %v1022 = vsub.f32 1.0, %v1011
    %1024 = vrot.lane.b32.xlu0 %v1021, 96
    %v1025 = vpop.permute.xlu0 %1024
    %v1027 = vmul.f32 %v1022, %v1025
    %v1028 = vrot.slane %v958, 6
    %v1030 = vmul.f32 %v1011, %v1028
    %v1031 = vadd.f32 %v1027, %v1030
    %1033 = vrot.lane.b32.xlu0 %v1031, 96
    %v1034 = vpop.permute.xlu0 %1033
    %1036 = vst.msk [vmem:[#allocation2] sm:$0xc0] %vm394, %v1034
    %s1037 = scalar_lea.vmem %s5, 64
    %v1038 = vld [vmem:[%s1037] sm:$0xff]
    %v1039 = vld [vmem:[%s1037 + $0x8] sm:$0xff]
    %v1040 = vld [vmem:[%s1037 + $0x10] sm:$0xff]
    %v1041 = vld [vmem:[%s1037 + $0x18] sm:$0xff]
    %v1042 = vld [vmem:[%s1037 + $0x20] sm:$0xff]
    %v1043 = vld [vmem:[%s1037 + $0x28] sm:$0xff]
    %v1044 = vld [vmem:[%s1037 + $0x30] sm:$0xff]
    %v1045 = vld [vmem:[%s1037 + $0x38] sm:$0xff]
    %s1046 = scalar_lea.vmem %s7, 1
    %v1047 = vld [vmem:[%s1046] sm:$0x1]
    %v1049 = vperm.slane %v1047, 0
    %1051 = vmatpush.msra.mxu0 0.0
    %1052 = vmatpush.msra.mxu0 0.0
    %1053 = vmatpush.msra.mxu0 0.0
    %1054 = vmatpush.msra.mxu0 0.0
    %1055 = vmatpush.msra.mxu0 0.0
    %1056 = vmatpush.msra.mxu0 0.0
    %1057 = vmatpush.msra.mxu0 0.0
    %1058 = vmatpush.msra.mxu0 0.0
    %1059 = vmatpush.msra.mxu0 %v1045
    %1060 = vmatpush.msra.mxu0 %v1044
    %1061 = vmatpush.msra.mxu0 %v1043
    %1062 = vmatpush.msra.mxu0 %v1042
    %1063 = vmatpush.msra.mxu0 %v1041
    %1064 = vmatpush.msra.mxu0 %v1040
    %1065 = vmatpush.msra.mxu0 %v1039
    %1066 = vmatpush.msra.mxu0 %v1038
    %1067 = vmatmul.f32.gmra.mxu0 %v727
    %v1068 = vpop.f32.mrf.mxu0
    %v1069 = vadd.f32 %v1049, %v1068
    %1070 = vdwg.mxu0
    %s1071 = scalar_lea.vmem %s6, 32
    %v1072 = vld [vmem:[%s1071] sm:$0xff]
    %v1073 = vld [vmem:[%s1071 + $0x8] sm:$0xff]
    %v1074 = vld [vmem:[%s1071 + $0x10] sm:$0xff]
    %v1075 = vld [vmem:[%s1071 + $0x18] sm:$0xff]
    %s1076 = scalar_lea.vmem %s8, 1
    %v1077 = vld [vmem:[%s1076] sm:$0x1]
    %v1079 = vperm.slane %v1077, 0
    %1081 = vmatpush.msra.mxu0 0.0
    %1082 = vmatpush.msra.mxu0 0.0
    %1083 = vmatpush.msra.mxu0 0.0
    %1084 = vmatpush.msra.mxu0 0.0
    %1085 = vmatpush.msra.mxu0 0.0
    %1086 = vmatpush.msra.mxu0 0.0
    %1087 = vmatpush.msra.mxu0 0.0
    %1088 = vmatpush.msra.mxu0 0.0
    %1089 = vmatpush.msra.mxu0 0.0
    %1090 = vmatpush.msra.mxu0 0.0
    %1091 = vmatpush.msra.mxu0 0.0
    %1092 = vmatpush.msra.mxu0 0.0
    %1093 = vmatpush.msra.mxu0 %v1075
    %1094 = vmatpush.msra.mxu0 %v1074
    %1095 = vmatpush.msra.mxu0 %v1073
    %1096 = vmatpush.msra.mxu0 %v1072
    %1097 = vmatmul.f32.gmra.mxu0 %v110
    %v1098 = vpop.f32.mrf.mxu0
    %v1099 = vadd.f32 %v1079, %v1098
    %1100 = vdwg.mxu0
    %v1102 = vrot.slane %v1099, 2
    %v1104 = vadd.f32 %v1069, %v1102
    %v1105 = vxor.u32 %v1104, 2147483648
    %v1106 = vmul.f32 %v1105, 1.442695
    %v1107 = vpow.pop %v1106
    %v1108 = vadd.f32 %v1107, 1.0
    %v1109 = vrcp.pop %v1108
    %v1110 = vmul.f32 %v1108, %v1109
    %v1111 = vsub.f32 1.0, %v1110
    %v1112 = vmul.f32 %v1109, %v1111
    %v1113 = vadd.f32 %v1109, %v1112
    %vm1114 = vweird.f32 %v1108
    %vm1115 = vweird.f32 %v1109
    %vm1116 = vmor %vm1114, %vm1115
    %v1117 = vsel %vm1116, %v1109, %v1113
    %v1118 = vand.u32 2147483647, %v1108
    %vm1119 = vcmp.eq.f32.partialorder %v1118, 8.507059e+37
    %v1120 = vand.u32 %v1108, 2147483648
    %v1121 = vor.u32 1.1754944e-38, %v1120
    %v1122 = vsel %vm1119, %v1121, %v1117
    %v1123 = vmul.f32 1.0, %v1122
    %1124 = vrot.lane.b32.xlu0 %v1102, 64
    %v1125 = vpop.permute.xlu0 %1124
    %v1127 = vmul.f32 %v1123, %v1125
    %1129 = vrot.lane.b32.xlu0 %v1127, 64
    %v1130 = vpop.permute.xlu0 %1129
    %v1132 = vadd.f32 %v1069, %v1130
    %v1133 = vtanh.pop %v1132
    %v1134 = vsub.f32 1.0, %v1123
    %1136 = vrot.lane.b32.xlu0 %v1133, 96
    %v1137 = vpop.permute.xlu0 %1136
    %v1139 = vmul.f32 %v1134, %v1137
    %v1140 = vmul.f32 %v1123, 0.0
    %v1141 = vadd.f32 %v1139, %v1140
    %1142 = vst.msk [vmem:[#allocation2] sm:$0xc0] %vm501, %v1141
    %v1144 = vrot.slane %v1141, 6
    %1145 = vrot.lane.b32.xlu0 %v1144, 96
    %v1146 = vpop.permute.xlu0 %1145
    %v1147 = vsel %vm108, %v1146, 0
    %1149 = vmatpush.msra.mxu0 0.0
    %1150 = vmatpush.msra.mxu0 0.0
    %1151 = vmatpush.msra.mxu0 0.0
    %1152 = vmatpush.msra.mxu0 0.0
    %1153 = vmatpush.msra.mxu0 0.0
    %1154 = vmatpush.msra.mxu0 0.0
    %1155 = vmatpush.msra.mxu0 0.0
    %1156 = vmatpush.msra.mxu0 0.0
    %1157 = vmatpush.msra.mxu0 0.0
    %1158 = vmatpush.msra.mxu0 0.0
    %1159 = vmatpush.msra.mxu0 0.0
    %1160 = vmatpush.msra.mxu0 0.0
    %1161 = vmatpush.msra.mxu0 %v1075
    %1162 = vmatpush.msra.mxu0 %v1074
    %1163 = vmatpush.msra.mxu0 %v1073
    %1164 = vmatpush.msra.mxu0 %v1072
    %1165 = vmatmul.f32.gmra.mxu0 %v1147
    %v1166 = vpop.f32.mrf.mxu0
    %v1167 = vadd.f32 %v1079, %v1166
    %1168 = vdwg.mxu0
    %v1170 = vrot.slane %v1167, 4
    %v1172 = vadd.f32 %v1069, %v1170
    %v1173 = vxor.u32 %v1172, 2147483648
    %v1174 = vmul.f32 %v1173, 1.442695
    %v1175 = vpow.pop %v1174
    %v1176 = vadd.f32 %v1175, 1.0
    %v1177 = vrcp.pop %v1176
    %v1178 = vmul.f32 %v1176, %v1177
    %v1179 = vsub.f32 1.0, %v1178
    %v1180 = vmul.f32 %v1177, %v1179
    %v1181 = vadd.f32 %v1177, %v1180
    %vm1182 = vweird.f32 %v1176
    %vm1183 = vweird.f32 %v1177
    %vm1184 = vmor %vm1182, %vm1183
    %v1185 = vsel %vm1184, %v1177, %v1181
    %v1186 = vand.u32 2147483647, %v1176
    %vm1187 = vcmp.eq.f32.partialorder %v1186, 8.507059e+37
    %v1188 = vand.u32 %v1176, 2147483648
    %v1189 = vor.u32 1.1754944e-38, %v1188
    %v1190 = vsel %vm1187, %v1189, %v1185
    %v1191 = vmul.f32 1.0, %v1190
    %1192 = vrot.lane.b32.xlu0 %v1170, 64
    %v1193 = vpop.permute.xlu0 %1192
    %v1195 = vmul.f32 %v1191, %v1193
    %1197 = vrot.lane.b32.xlu0 %v1195, 64
    %v1198 = vpop.permute.xlu0 %1197
    %v1200 = vadd.f32 %v1069, %v1198
    %v1201 = vtanh.pop %v1200
    %v1202 = vsub.f32 1.0, %v1191
    %1204 = vrot.lane.b32.xlu0 %v1201, 96
    %v1205 = vpop.permute.xlu0 %1204
    %v1207 = vmul.f32 %v1202, %v1205
    %v1208 = vrot.slane %v1141, 2
    %v1210 = vmul.f32 %v1191, %v1208
    %v1211 = vadd.f32 %v1207, %v1210
    %1212 = vst.msk [vmem:[#allocation2] sm:$0x30] %vm572, %v1211
    %v1214 = vrot.slane %v1211, 4
    %1215 = vrot.lane.b32.xlu0 %v1214, 96
    %v1216 = vpop.permute.xlu0 %1215
    %v1217 = vsel %vm108, %v1216, 0
    %1219 = vmatpush.msra.mxu0 0.0
    %1220 = vmatpush.msra.mxu0 0.0
    %1221 = vmatpush.msra.mxu0 0.0
    %1222 = vmatpush.msra.mxu0 0.0
    %1223 = vmatpush.msra.mxu0 0.0
    %1224 = vmatpush.msra.mxu0 0.0
    %1225 = vmatpush.msra.mxu0 0.0
    %1226 = vmatpush.msra.mxu0 0.0
    %1227 = vmatpush.msra.mxu0 0.0
    %1228 = vmatpush.msra.mxu0 0.0
    %1229 = vmatpush.msra.mxu0 0.0
    %1230 = vmatpush.msra.mxu0 0.0
    %1231 = vmatpush.msra.mxu0 %v1075
    %1232 = vmatpush.msra.mxu0 %v1074
    %1233 = vmatpush.msra.mxu0 %v1073
    %1234 = vmatpush.msra.mxu0 %v1072
    %1235 = vmatmul.f32.gmra.mxu0 %v1217
    %v1236 = vpop.f32.mrf.mxu0
    %v1237 = vadd.f32 %v1079, %v1236
    %1238 = vdwg.mxu0
    %v1240 = vrot.slane %v1237, 6
    %v1242 = vadd.f32 %v1069, %v1240
    %v1243 = vxor.u32 %v1242, 2147483648
    %v1244 = vmul.f32 %v1243, 1.442695
    %v1245 = vpow.pop %v1244
    %v1246 = vadd.f32 %v1245, 1.0
    %v1247 = vrcp.pop %v1246
    %v1248 = vmul.f32 %v1246, %v1247
    %v1249 = vsub.f32 1.0, %v1248
    %v1250 = vmul.f32 %v1247, %v1249
    %v1251 = vadd.f32 %v1247, %v1250
    %vm1252 = vweird.f32 %v1246
    %vm1253 = vweird.f32 %v1247
    %vm1254 = vmor %vm1252, %vm1253
    %v1255 = vsel %vm1254, %v1247, %v1251
    %v1256 = vand.u32 2147483647, %v1246
    %vm1257 = vcmp.eq.f32.partialorder %v1256, 8.507059e+37
    %v1258 = vand.u32 %v1246, 2147483648
    %v1259 = vor.u32 1.1754944e-38, %v1258
    %v1260 = vsel %vm1257, %v1259, %v1255
    %v1261 = vmul.f32 1.0, %v1260
    %1262 = vrot.lane.b32.xlu0 %v1240, 64
    %v1263 = vpop.permute.xlu0 %1262
    %v1265 = vmul.f32 %v1261, %v1263
    %1267 = vrot.lane.b32.xlu0 %v1265, 64
    %v1268 = vpop.permute.xlu0 %1267
    %v1270 = vadd.f32 %v1069, %v1268
    %v1271 = vtanh.pop %v1270
    %v1272 = vsub.f32 1.0, %v1261
    %1274 = vrot.lane.b32.xlu0 %v1271, 96
    %v1275 = vpop.permute.xlu0 %1274
    %v1277 = vmul.f32 %v1272, %v1275
    %v1278 = vrot.slane %v1211, 2
    %v1280 = vmul.f32 %v1261, %v1278
    %v1281 = vadd.f32 %v1277, %v1280
    %1282 = vst.msk [vmem:[#allocation2] sm:$0xc] %vm643, %v1281
    %v1284 = vrot.slane %v1281, 2
    %1285 = vrot.lane.b32.xlu0 %v1284, 96
    %v1286 = vpop.permute.xlu0 %1285
    %v1287 = vsel %vm108, %v1286, 0
    %1289 = vmatpush.msra.mxu0 0.0
    %1290 = vmatpush.msra.mxu0 0.0
    %1291 = vmatpush.msra.mxu0 0.0
    %1292 = vmatpush.msra.mxu0 0.0
    %1293 = vmatpush.msra.mxu0 0.0
    %1294 = vmatpush.msra.mxu0 0.0
    %1295 = vmatpush.msra.mxu0 0.0
    %1296 = vmatpush.msra.mxu0 0.0
    %1297 = vmatpush.msra.mxu0 0.0
    %1298 = vmatpush.msra.mxu0 0.0
    %1299 = vmatpush.msra.mxu0 0.0
    %1300 = vmatpush.msra.mxu0 0.0
    %1301 = vmatpush.msra.mxu0 %v1075
    %1302 = vmatpush.msra.mxu0 %v1074
    %1303 = vmatpush.msra.mxu0 %v1073
    %1304 = vmatpush.msra.mxu0 %v1072
    %1305 = vmatmul.f32.gmra.mxu0 %v1287
    %v1306 = vpop.f32.mrf.mxu0
    %v1307 = vadd.f32 %v1079, %v1306
    %1308 = vdwg.mxu0
    %v1309 = vadd.f32 %v1069, %v1307
    %v1310 = vxor.u32 %v1309, 2147483648
    %v1311 = vmul.f32 %v1310, 1.442695
    %v1312 = vpow.pop %v1311
    %v1313 = vadd.f32 %v1312, 1.0
    %v1314 = vrcp.pop %v1313
    %v1315 = vmul.f32 %v1313, %v1314
    %v1316 = vsub.f32 1.0, %v1315
    %v1317 = vmul.f32 %v1314, %v1316
    %v1318 = vadd.f32 %v1314, %v1317
    %vm1319 = vweird.f32 %v1313
    %vm1320 = vweird.f32 %v1314
    %vm1321 = vmor %vm1319, %vm1320
    %v1322 = vsel %vm1321, %v1314, %v1318
    %v1323 = vand.u32 2147483647, %v1313
    %vm1324 = vcmp.eq.f32.partialorder %v1323, 8.507059e+37
    %v1325 = vand.u32 %v1313, 2147483648
    %v1326 = vor.u32 1.1754944e-38, %v1325
    %v1327 = vsel %vm1324, %v1326, %v1322
    %v1328 = vmul.f32 1.0, %v1327
    %1330 = vrot.lane.b32.xlu0 %v1307, 64
    %v1331 = vpop.permute.xlu0 %1330
    %v1333 = vmul.f32 %v1328, %v1331
    %1335 = vrot.lane.b32.xlu0 %v1333, 64
    %v1336 = vpop.permute.xlu0 %1335
    %v1338 = vadd.f32 %v1069, %v1336
    %v1339 = vtanh.pop %v1338
    %v1340 = vsub.f32 1.0, %v1328
    %1342 = vrot.lane.b32.xlu0 %v1339, 96
    %v1343 = vpop.permute.xlu0 %1342
    %v1345 = vmul.f32 %v1340, %v1343
    %v1347 = vmul.f32 %v1328, %v1284
    %v1348 = vadd.f32 %v1345, %v1347
    %1349 = vst.msk [vmem:[#allocation2] sm:$0x3] %vm711, %v1348
    %v1350 = vld [vmem:[#allocation2] sm:$0xff]
    %v1351 = vtanh.pop %v1350
    %1353 = vrot.lane.b32.xlu0 %v1351, 32
    %v1354 = vpop.permute.xlu0 %1353
    %v1356 = vmul.f32 %v1351, %v1354
    %1358 = vrot.lane.b32.xlu0 %v1356, 96
    %v1359 = vpop.permute.xlu0 %1358
    %vm1361 = vcmask 253952
    %1362 = vst.msk [vmem:[#allocation3] sm:$0x1] %vm1361, %v1359
    %vm1363 = vcmask 256002
    %1364 = vst.msk [vmem:[#allocation3 - $0x1] sm:$0x4] %vm1363, %v1359
    %vm1365 = vcmask 258052
    %1366 = vst.msk [vmem:[#allocation3 - $0x2] sm:$0x10] %vm1365, %v1359
    %vm1367 = vcmask 260102
    %1368 = vst.msk [vmem:[#allocation3 - $0x3] sm:$0x40] %vm1367, %v1359
    %vm1369 = vcmask 254977
    %1370 = vst.msk [vmem:[#allocation3 + $0x3] sm:$0x2] %vm1369, %v1359
    %vm1371 = vcmask 257027
    %1372 = vst.msk [vmem:[#allocation3 + $0x2] sm:$0x8] %vm1371, %v1359
    %vm1373 = vcmask 259077
    %1374 = vst.msk [vmem:[#allocation3 + $0x1] sm:$0x20] %vm1373, %v1359
    %vm1375 = vcmask 261127
    %1376 = vst.msk [vmem:[#allocation3] sm:$0x80] %vm1375, %v1359
    %v1377 = vld [vmem:[#allocation3] sm:$0xff]
    %v1378 = vld [vmem:[%s9] sm:$0xff]
    %v1379 = vld [vmem:[%s9 + $0x8] sm:$0xff]
    %v1380 = vld [vmem:[%s9 + $0x10] sm:$0xff]
    %v1381 = vld [vmem:[%s9 + $0x18] sm:$0xff]
    %v1382 = vld [vmem:[%s10] sm:$0x1]
    %v1384 = vperm.slane %v1382, 0
    %v1387 = vsel %vm108, %v1377, 0
    %1389 = vmatpush.msra.mxu0 0.0
    %1390 = vmatpush.msra.mxu0 0.0
    %1391 = vmatpush.msra.mxu0 0.0
    %1392 = vmatpush.msra.mxu0 0.0
    %1393 = vmatpush.msra.mxu0 0.0
    %1394 = vmatpush.msra.mxu0 0.0
    %1395 = vmatpush.msra.mxu0 0.0
    %1396 = vmatpush.msra.mxu0 0.0
    %1397 = vmatpush.msra.mxu0 0.0
    %1398 = vmatpush.msra.mxu0 0.0
    %1399 = vmatpush.msra.mxu0 0.0
    %1400 = vmatpush.msra.mxu0 0.0
    %1401 = vmatpush.msra.mxu0 %v1381
    %1402 = vmatpush.msra.mxu0 %v1380
    %1403 = vmatpush.msra.mxu0 %v1379
    %1404 = vmatpush.msra.mxu0 %v1378
    %1405 = vmatmul.f32.gmra.mxu0 %v1387
    %v1406 = vpop.f32.mrf.mxu0
    %v1407 = vadd.f32 %v1384, %v1406
    %1408 = vdwg.mxu0
    %v1409 = vmul.f32 %v1407, 0.35355338
    %1411 = vrot.lane.b32.xlu0 %v1407, 96
    %v1412 = vpop.permute.xlu0 %1411
    %vm1413 = vcmask 64512
    %v1415 = vsel %vm1413, %v1409, 0
    %v1417 = vsel %vm1413, %v1412, 0
    %1419 = vmatpush.xpose.msra.mxu0 0.0
    %1420 = vmatpush.xpose.msra.mxu0 0.0
    %1421 = vmatpush.xpose.msra.mxu0 0.0
    %1422 = vmatpush.xpose.msra.mxu0 0.0
    %1423 = vmatpush.xpose.msra.mxu0 0.0
    %1424 = vmatpush.xpose.msra.mxu0 0.0
    %1425 = vmatpush.xpose.msra.mxu0 0.0
    %1426 = vmatpush.xpose.msra.mxu0 0.0
    %1427 = vmatpush.xpose.msra.mxu0 0.0
    %1428 = vmatpush.xpose.msra.mxu0 0.0
    %1429 = vmatpush.xpose.msra.mxu0 0.0
    %1430 = vmatpush.xpose.msra.mxu0 0.0
    %1431 = vmatpush.xpose.msra.mxu0 0.0
    %1432 = vmatpush.xpose.msra.mxu0 0.0
    %1433 = vmatpush.xpose.msra.mxu0 0.0
    %1434 = vmatpush.xpose.msra.mxu0 %v1417
    %1435 = vmatmul.f32.gmra.mxu0 %v1415
    %v1436 = vpop.f32.mrf.mxu0
    %v1437 = vadd.f32 0.0, %v1436
    %1438 = vdwg.mxu0
    %vm1439 = vcmask 27648
    %v1440 = vsel %vm1439, %v1437, -inf
    %1441 = vmax.xlane.f32.xlu0 %v1440
    %v1442 = vpop.xlane.xlu0 %1441
    %v1443 = vsub.f32 %v1437, %v1442
    %v1444 = vmul.f32 %v1443, 1.442695
    %v1445 = vpow.pop %v1444
    %v1446 = vsel %vm1439, %v1445, 0.0
    %1447 = vadd.xlane.f32.xlu0 %v1446
    %v1448 = vpop.xlane.xlu0 %1447
    %v1449 = vrcp.pop %v1448
    %v1450 = vmul.f32 %v1445, %v1449
    %1451 = vrot.lane.b32.xlu0 %v1407, 64
    %v1452 = vpop.permute.xlu0 %1451
    %vm1453 = vcmask 31744
    %v1455 = vsel %vm1453, %v1450, 0
    %vm1457 = vcmask 1043456
    %v1458 = vsel %vm1457, %v1452, 0
    %1460 = vmatpush.msra.mxu0 0.0
    %1461 = vmatpush.msra.mxu0 0.0
    %1462 = vmatpush.msra.mxu0 0.0
    %1463 = vmatpush.msra.mxu0 0.0
    %1464 = vmatpush.msra.mxu0 0.0
    %1465 = vmatpush.msra.mxu0 0.0
    %1466 = vmatpush.msra.mxu0 0.0
    %1467 = vmatpush.msra.mxu0 0.0
    %1468 = vmatpush.msra.mxu0 0.0
    %1469 = vmatpush.msra.mxu0 0.0
    %1470 = vmatpush.msra.mxu0 0.0
    %1471 = vmatpush.msra.mxu0 0.0
    %1472 = vmatpush.msra.mxu0 0.0
    %1473 = vmatpush.msra.mxu0 0.0
    %1474 = vmatpush.msra.mxu0 0.0
    %1475 = vmatpush.msra.mxu0 %v1458
    %1476 = vmatmul.f32.gmra.mxu0 %v1455
    %v1477 = vpop.f32.mrf.mxu0
    %v1478 = vadd.f32 0.0, %v1477
    %1479 = vdwg.mxu0
    %vm1480 = vcmask 60416
    %1481 = vst.msk [vmem:[#allocation4] sm:$0xf] %vm1480, %v1478
    %1482 = vrot.lane.b32.xlu0 %v1409, 120
    %v1483 = vpop.permute.xlu0 %1482
    %1484 = vrot.lane.b32.xlu0 %v1407, 88
    %v1485 = vpop.permute.xlu0 %1484
    %v1486 = vsel %vm1413, %v1483, 0
    %v1488 = vsel %vm1413, %v1485, 0
    %1490 = vmatpush.xpose.msra.mxu0 0.0
    %1491 = vmatpush.xpose.msra.mxu0 0.0
    %1492 = vmatpush.xpose.msra.mxu0 0.0
    %1493 = vmatpush.xpose.msra.mxu0 0.0
    %1494 = vmatpush.xpose.msra.mxu0 0.0
    %1495 = vmatpush.xpose.msra.mxu0 0.0
    %1496 = vmatpush.xpose.msra.mxu0 0.0
    %1497 = vmatpush.xpose.msra.mxu0 0.0
    %1498 = vmatpush.xpose.msra.mxu0 0.0
    %1499 = vmatpush.xpose.msra.mxu0 0.0
    %1500 = vmatpush.xpose.msra.mxu0 0.0
    %1501 = vmatpush.xpose.msra.mxu0 0.0
    %1502 = vmatpush.xpose.msra.mxu0 0.0
    %1503 = vmatpush.xpose.msra.mxu0 0.0
    %1504 = vmatpush.xpose.msra.mxu0 0.0
    %1505 = vmatpush.xpose.msra.mxu0 %v1488
    %1506 = vmatmul.f32.gmra.mxu0 %v1486
    %v1507 = vpop.f32.mrf.mxu0
    %v1508 = vadd.f32 0.0, %v1507
    %1509 = vdwg.mxu0
    %v1510 = vsel %vm1439, %v1508, -inf
    %1511 = vmax.xlane.f32.xlu0 %v1510
    %v1512 = vpop.xlane.xlu0 %1511
    %v1513 = vsub.f32 %v1508, %v1512
    %v1514 = vmul.f32 %v1513, 1.442695
    %v1515 = vpow.pop %v1514
    %v1516 = vsel %vm1439, %v1515, 0.0
    %1517 = vadd.xlane.f32.xlu0 %v1516
    %v1518 = vpop.xlane.xlu0 %1517
    %v1519 = vrcp.pop %v1518
    %v1520 = vmul.f32 %v1515, %v1519
    %1521 = vrot.lane.b32.xlu0 %v1407, 56
    %v1522 = vpop.permute.xlu0 %1521
    %v1524 = vsel %vm1453, %v1520, 0
    %v1526 = vsel %vm1457, %v1522, 0
    %1528 = vmatpush.msra.mxu0 0.0
    %1529 = vmatpush.msra.mxu0 0.0
    %1530 = vmatpush.msra.mxu0 0.0
    %1531 = vmatpush.msra.mxu0 0.0
    %1532 = vmatpush.msra.mxu0 0.0
    %1533 = vmatpush.msra.mxu0 0.0
    %1534 = vmatpush.msra.mxu0 0.0
    %1535 = vmatpush.msra.mxu0 0.0
    %1536 = vmatpush.msra.mxu0 0.0
    %1537 = vmatpush.msra.mxu0 0.0
    %1538 = vmatpush.msra.mxu0 0.0
    %1539 = vmatpush.msra.mxu0 0.0
    %1540 = vmatpush.msra.mxu0 0.0
    %1541 = vmatpush.msra.mxu0 0.0
    %1542 = vmatpush.msra.mxu0 0.0
    %1543 = vmatpush.msra.mxu0 %v1526
    %1544 = vmatmul.f32.gmra.mxu0 %v1524
    %v1545 = vpop.f32.mrf.mxu0
    %v1546 = vadd.f32 0.0, %v1545
    %1547 = vdwg.mxu0
    %1549 = vrot.lane.b32.xlu0 %v1546, 8
    %v1550 = vpop.permute.xlu0 %1549
    %vm1552 = vcmask 126016
    %1553 = vst.msk [vmem:[#allocation4] sm:$0xf] %vm1552, %v1550
    %1554 = vrot.lane.b32.xlu0 %v1409, 112
    %v1555 = vpop.permute.xlu0 %1554
    %1556 = vrot.lane.b32.xlu0 %v1407, 80
    %v1557 = vpop.permute.xlu0 %1556
    %v1558 = vsel %vm1413, %v1555, 0
    %v1560 = vsel %vm1413, %v1557, 0
    %1562 = vmatpush.xpose.msra.mxu0 0.0
    %1563 = vmatpush.xpose.msra.mxu0 0.0
    %1564 = vmatpush.xpose.msra.mxu0 0.0
    %1565 = vmatpush.xpose.msra.mxu0 0.0
    %1566 = vmatpush.xpose.msra.mxu0 0.0
    %1567 = vmatpush.xpose.msra.mxu0 0.0
    %1568 = vmatpush.xpose.msra.mxu0 0.0
    %1569 = vmatpush.xpose.msra.mxu0 0.0
    %1570 = vmatpush.xpose.msra.mxu0 0.0
    %1571 = vmatpush.xpose.msra.mxu0 0.0
    %1572 = vmatpush.xpose.msra.mxu0 0.0
    %1573 = vmatpush.xpose.msra.mxu0 0.0
    %1574 = vmatpush.xpose.msra.mxu0 0.0
    %1575 = vmatpush.xpose.msra.mxu0 0.0
    %1576 = vmatpush.xpose.msra.mxu0 0.0
    %1577 = vmatpush.xpose.msra.mxu0 %v1560
    %1578 = vmatmul.f32.gmra.mxu0 %v1558
    %v1579 = vpop.f32.mrf.mxu0
    %v1580 = vadd.f32 0.0, %v1579
    %1581 = vdwg.mxu0
    %v1582 = vsel %vm1439, %v1580, -inf
    %1583 = vmax.xlane.f32.xlu0 %v1582
    %v1584 = vpop.xlane.xlu0 %1583
    %v1585 = vsub.f32 %v1580, %v1584
    %v1586 = vmul.f32 %v1585, 1.442695
    %v1587 = vpow.pop %v1586
    %v1588 = vsel %vm1439, %v1587, 0.0
    %1589 = vadd.xlane.f32.xlu0 %v1588
    %v1590 = vpop.xlane.xlu0 %1589
    %v1591 = vrcp.pop %v1590
    %v1592 = vmul.f32 %v1587, %v1591
    %1593 = vrot.lane.b32.xlu0 %v1407, 48
    %v1594 = vpop.permute.xlu0 %1593
    %v1596 = vsel %vm1453, %v1592, 0
    %v1598 = vsel %vm1457, %v1594, 0
    %1600 = vmatpush.msra.mxu0 0.0
    %1601 = vmatpush.msra.mxu0 0.0
    %1602 = vmatpush.msra.mxu0 0.0
    %1603 = vmatpush.msra.mxu0 0.0
    %1604 = vmatpush.msra.mxu0 0.0
    %1605 = vmatpush.msra.mxu0 0.0
    %1606 = vmatpush.msra.mxu0 0.0
    %1607 = vmatpush.msra.mxu0 0.0
    %1608 = vmatpush.msra.mxu0 0.0
    %1609 = vmatpush.msra.mxu0 0.0
    %1610 = vmatpush.msra.mxu0 0.0
    %1611 = vmatpush.msra.mxu0 0.0
    %1612 = vmatpush.msra.mxu0 0.0
    %1613 = vmatpush.msra.mxu0 0.0
    %1614 = vmatpush.msra.mxu0 0.0
    %1615 = vmatpush.msra.mxu0 %v1598
    %1616 = vmatmul.f32.gmra.mxu0 %v1596
    %v1617 = vpop.f32.mrf.mxu0
    %v1618 = vadd.f32 0.0, %v1617
    %1619 = vdwg.mxu0
    %1621 = vrot.lane.b32.xlu0 %v1618, 16
    %v1622 = vpop.permute.xlu0 %1621
    %vm1624 = vcmask 191616
    %1625 = vst.msk [vmem:[#allocation4] sm:$0xf] %vm1624, %v1622
    %1626 = vrot.lane.b32.xlu0 %v1409, 104
    %v1627 = vpop.permute.xlu0 %1626
    %1628 = vrot.lane.b32.xlu0 %v1407, 72
    %v1629 = vpop.permute.xlu0 %1628
    %v1630 = vsel %vm1413, %v1627, 0
    %v1632 = vsel %vm1413, %v1629, 0
    %1634 = vmatpush.xpose.msra.mxu0 0.0
    %1635 = vmatpush.xpose.msra.mxu0 0.0
    %1636 = vmatpush.xpose.msra.mxu0 0.0
    %1637 = vmatpush.xpose.msra.mxu0 0.0
    %1638 = vmatpush.xpose.msra.mxu0 0.0
    %1639 = vmatpush.xpose.msra.mxu0 0.0
    %1640 = vmatpush.xpose.msra.mxu0 0.0
    %1641 = vmatpush.xpose.msra.mxu0 0.0
    %1642 = vmatpush.xpose.msra.mxu0 0.0
    %1643 = vmatpush.xpose.msra.mxu0 0.0
    %1644 = vmatpush.xpose.msra.mxu0 0.0
    %1645 = vmatpush.xpose.msra.mxu0 0.0
    %1646 = vmatpush.xpose.msra.mxu0 0.0
    %1647 = vmatpush.xpose.msra.mxu0 0.0
    %1648 = vmatpush.xpose.msra.mxu0 0.0
    %1649 = vmatpush.xpose.msra.mxu0 %v1632
    %1650 = vmatmul.f32.gmra.mxu0 %v1630
    %v1651 = vpop.f32.mrf.mxu0
    %v1652 = vadd.f32 0.0, %v1651
    %1653 = vdwg.mxu0
    %v1654 = vsel %vm1439, %v1652, -inf
    %1655 = vmax.xlane.f32.xlu0 %v1654
    %v1656 = vpop.xlane.xlu0 %1655
    %v1657 = vsub.f32 %v1652, %v1656
    %v1658 = vmul.f32 %v1657, 1.442695
    %v1659 = vpow.pop %v1658
    %v1660 = vsel %vm1439, %v1659, 0.0
    %1661 = vadd.xlane.f32.xlu0 %v1660
    %v1662 = vpop.xlane.xlu0 %1661
    %v1663 = vrcp.pop %v1662
    %v1664 = vmul.f32 %v1659, %v1663
    %1665 = vrot.lane.b32.xlu0 %v1407, 40
    %v1666 = vpop.permute.xlu0 %1665
    %v1668 = vsel %vm1453, %v1664, 0
    %v1670 = vsel %vm1457, %v1666, 0
    %1672 = vmatpush.msra.mxu0 0.0
    %1673 = vmatpush.msra.mxu0 0.0
    %1674 = vmatpush.msra.mxu0 0.0
    %1675 = vmatpush.msra.mxu0 0.0
    %1676 = vmatpush.msra.mxu0 0.0
    %1677 = vmatpush.msra.mxu0 0.0
    %1678 = vmatpush.msra.mxu0 0.0
    %1679 = vmatpush.msra.mxu0 0.0
    %1680 = vmatpush.msra.mxu0 0.0
    %1681 = vmatpush.msra.mxu0 0.0
    %1682 = vmatpush.msra.mxu0 0.0
    %1683 = vmatpush.msra.mxu0 0.0
    %1684 = vmatpush.msra.mxu0 0.0
    %1685 = vmatpush.msra.mxu0 0.0
    %1686 = vmatpush.msra.mxu0 0.0
    %1687 = vmatpush.msra.mxu0 %v1670
    %1688 = vmatmul.f32.gmra.mxu0 %v1668
    %v1689 = vpop.f32.mrf.mxu0
    %v1690 = vadd.f32 0.0, %v1689
    %1691 = vdwg.mxu0
    %1693 = vrot.lane.b32.xlu0 %v1690, 24
    %v1694 = vpop.permute.xlu0 %1693
    %vm1696 = vcmask 257216
    %1697 = vst.msk [vmem:[#allocation4] sm:$0xf] %vm1696, %v1694
    %v1698 = vrot.slane %v1409, 4
    %v1699 = vrot.slane %v1407, 4
    %1700 = vrot.lane.b32.xlu0 %v1699, 96
    %v1701 = vpop.permute.xlu0 %1700
    %v1702 = vsel %vm1413, %v1698, 0
    %v1704 = vsel %vm1413, %v1701, 0
    %1706 = vmatpush.xpose.msra.mxu0 0.0
    %1707 = vmatpush.xpose.msra.mxu0 0.0
    %1708 = vmatpush.xpose.msra.mxu0 0.0
    %1709 = vmatpush.xpose.msra.mxu0 0.0
    %1710 = vmatpush.xpose.msra.mxu0 0.0
    %1711 = vmatpush.xpose.msra.mxu0 0.0
    %1712 = vmatpush.xpose.msra.mxu0 0.0
    %1713 = vmatpush.xpose.msra.mxu0 0.0
    %1714 = vmatpush.xpose.msra.mxu0 0.0
    %1715 = vmatpush.xpose.msra.mxu0 0.0
    %1716 = vmatpush.xpose.msra.mxu0 0.0
    %1717 = vmatpush.xpose.msra.mxu0 0.0
    %1718 = vmatpush.xpose.msra.mxu0 0.0
    %1719 = vmatpush.xpose.msra.mxu0 0.0
    %1720 = vmatpush.xpose.msra.mxu0 0.0
    %1721 = vmatpush.xpose.msra.mxu0 %v1704
    %1722 = vmatmul.f32.gmra.mxu0 %v1702
    %v1723 = vpop.f32.mrf.mxu0
    %v1724 = vadd.f32 0.0, %v1723
    %1725 = vdwg.mxu0
    %v1726 = vsel %vm1439, %v1724, -inf
    %1727 = vmax.xlane.f32.xlu0 %v1726
    %v1728 = vpop.xlane.xlu0 %1727
    %v1729 = vsub.f32 %v1724, %v1728
    %v1730 = vmul.f32 %v1729, 1.442695
    %v1731 = vpow.pop %v1730
    %v1732 = vsel %vm1439, %v1731, 0.0
    %1733 = vadd.xlane.f32.xlu0 %v1732
    %v1734 = vpop.xlane.xlu0 %1733
    %v1735 = vrcp.pop %v1734
    %v1736 = vmul.f32 %v1731, %v1735
    %1737 = vrot.lane.b32.xlu0 %v1699, 64
    %v1738 = vpop.permute.xlu0 %1737
    %v1740 = vsel %vm1453, %v1736, 0
    %v1742 = vsel %vm1457, %v1738, 0
    %1744 = vmatpush.msra.mxu0 0.0
    %1745 = vmatpush.msra.mxu0 0.0
    %1746 = vmatpush.msra.mxu0 0.0
    %1747 = vmatpush.msra.mxu0 0.0
    %1748 = vmatpush.msra.mxu0 0.0
    %1749 = vmatpush.msra.mxu0 0.0
    %1750 = vmatpush.msra.mxu0 0.0
    %1751 = vmatpush.msra.mxu0 0.0
    %1752 = vmatpush.msra.mxu0 0.0
    %1753 = vmatpush.msra.mxu0 0.0
    %1754 = vmatpush.msra.mxu0 0.0
    %1755 = vmatpush.msra.mxu0 0.0
    %1756 = vmatpush.msra.mxu0 0.0
    %1757 = vmatpush.msra.mxu0 0.0
    %1758 = vmatpush.msra.mxu0 0.0
    %1759 = vmatpush.msra.mxu0 %v1742
    %1760 = vmatmul.f32.gmra.mxu0 %v1740
    %v1761 = vpop.f32.mrf.mxu0
    %v1762 = vadd.f32 0.0, %v1761
    %1763 = vdwg.mxu0
    %1764 = vst.msk [vmem:[#allocation4 + $0x4] sm:$0xf] %vm1480, %v1762
    %1765 = vrot.lane.b32.xlu0 %v1698, 120
    %v1766 = vpop.permute.xlu0 %1765
    %1767 = vrot.lane.b32.xlu0 %v1699, 88
    %v1768 = vpop.permute.xlu0 %1767
    %v1769 = vsel %vm1413, %v1766, 0
    %v1771 = vsel %vm1413, %v1768, 0
    %1773 = vmatpush.xpose.msra.mxu0 0.0
    %1774 = vmatpush.xpose.msra.mxu0 0.0
    %1775 = vmatpush.xpose.msra.mxu0 0.0
    %1776 = vmatpush.xpose.msra.mxu0 0.0
    %1777 = vmatpush.xpose.msra.mxu0 0.0
    %1778 = vmatpush.xpose.msra.mxu0 0.0
    %1779 = vmatpush.xpose.msra.mxu0 0.0
    %1780 = vmatpush.xpose.msra.mxu0 0.0
    %1781 = vmatpush.xpose.msra.mxu0 0.0
    %1782 = vmatpush.xpose.msra.mxu0 0.0
    %1783 = vmatpush.xpose.msra.mxu0 0.0
    %1784 = vmatpush.xpose.msra.mxu0 0.0
    %1785 = vmatpush.xpose.msra.mxu0 0.0
    %1786 = vmatpush.xpose.msra.mxu0 0.0
    %1787 = vmatpush.xpose.msra.mxu0 0.0
    %1788 = vmatpush.xpose.msra.mxu0 %v1771
    %1789 = vmatmul.f32.gmra.mxu0 %v1769
    %v1790 = vpop.f32.mrf.mxu0
    %v1791 = vadd.f32 0.0, %v1790
    %1792 = vdwg.mxu0
    %v1793 = vsel %vm1439, %v1791, -inf
    %1794 = vmax.xlane.f32.xlu0 %v1793
    %v1795 = vpop.xlane.xlu0 %1794
    %v1796 = vsub.f32 %v1791, %v1795
    %v1797 = vmul.f32 %v1796, 1.442695
    %v1798 = vpow.pop %v1797
    %v1799 = vsel %vm1439, %v1798, 0.0
    %1800 = vadd.xlane.f32.xlu0 %v1799
    %v1801 = vpop.xlane.xlu0 %1800
    %v1802 = vrcp.pop %v1801
    %v1803 = vmul.f32 %v1798, %v1802
    %1804 = vrot.lane.b32.xlu0 %v1699, 56
    %v1805 = vpop.permute.xlu0 %1804
    %v1807 = vsel %vm1453, %v1803, 0
    %v1809 = vsel %vm1457, %v1805, 0
    %1811 = vmatpush.msra.mxu0 0.0
    %1812 = vmatpush.msra.mxu0 0.0
    %1813 = vmatpush.msra.mxu0 0.0
    %1814 = vmatpush.msra.mxu0 0.0
    %1815 = vmatpush.msra.mxu0 0.0
    %1816 = vmatpush.msra.mxu0 0.0
    %1817 = vmatpush.msra.mxu0 0.0
    %1818 = vmatpush.msra.mxu0 0.0
    %1819 = vmatpush.msra.mxu0 0.0
    %1820 = vmatpush.msra.mxu0 0.0
    %1821 = vmatpush.msra.mxu0 0.0
    %1822 = vmatpush.msra.mxu0 0.0
    %1823 = vmatpush.msra.mxu0 0.0
    %1824 = vmatpush.msra.mxu0 0.0
    %1825 = vmatpush.msra.mxu0 0.0
    %1826 = vmatpush.msra.mxu0 %v1809
    %1827 = vmatmul.f32.gmra.mxu0 %v1807
    %v1828 = vpop.f32.mrf.mxu0
    %v1829 = vadd.f32 0.0, %v1828
    %1830 = vdwg.mxu0
    %1832 = vrot.lane.b32.xlu0 %v1829, 8
    %v1833 = vpop.permute.xlu0 %1832
    %1835 = vst.msk [vmem:[#allocation4 + $0x4] sm:$0xf] %vm1552, %v1833
    %1836 = vrot.lane.b32.xlu0 %v1698, 112
    %v1837 = vpop.permute.xlu0 %1836
    %1838 = vrot.lane.b32.xlu0 %v1699, 80
    %v1839 = vpop.permute.xlu0 %1838
    %v1840 = vsel %vm1413, %v1837, 0
    %v1842 = vsel %vm1413, %v1839, 0
    %1844 = vmatpush.xpose.msra.mxu0 0.0
    %1845 = vmatpush.xpose.msra.mxu0 0.0
    %1846 = vmatpush.xpose.msra.mxu0 0.0
    %1847 = vmatpush.xpose.msra.mxu0 0.0
    %1848 = vmatpush.xpose.msra.mxu0 0.0
    %1849 = vmatpush.xpose.msra.mxu0 0.0
    %1850 = vmatpush.xpose.msra.mxu0 0.0
    %1851 = vmatpush.xpose.msra.mxu0 0.0
    %1852 = vmatpush.xpose.msra.mxu0 0.0
    %1853 = vmatpush.xpose.msra.mxu0 0.0
    %1854 = vmatpush.xpose.msra.mxu0 0.0
    %1855 = vmatpush.xpose.msra.mxu0 0.0
    %1856 = vmatpush.xpose.msra.mxu0 0.0
    %1857 = vmatpush.xpose.msra.mxu0 0.0
    %1858 = vmatpush.xpose.msra.mxu0 0.0
    %1859 = vmatpush.xpose.msra.mxu0 %v1842
    %1860 = vmatmul.f32.gmra.mxu0 %v1840
    %v1861 = vpop.f32.mrf.mxu0
    %v1862 = vadd.f32 0.0, %v1861
    %1863 = vdwg.mxu0
    %v1864 = vsel %vm1439, %v1862, -inf
    %1865 = vmax.xlane.f32.xlu0 %v1864
    %v1866 = vpop.xlane.xlu0 %1865
    %v1867 = vsub.f32 %v1862, %v1866
    %v1868 = vmul.f32 %v1867, 1.442695
    %v1869 = vpow.pop %v1868
    %v1870 = vsel %vm1439, %v1869, 0.0
    %1871 = vadd.xlane.f32.xlu0 %v1870
    %v1872 = vpop.xlane.xlu0 %1871
    %v1873 = vrcp.pop %v1872
    %v1874 = vmul.f32 %v1869, %v1873
    %1875 = vrot.lane.b32.xlu0 %v1699, 48
    %v1876 = vpop.permute.xlu0 %1875
    %v1878 = vsel %vm1453, %v1874, 0
    %v1880 = vsel %vm1457, %v1876, 0
    %1882 = vmatpush.msra.mxu0 0.0
    %1883 = vmatpush.msra.mxu0 0.0
    %1884 = vmatpush.msra.mxu0 0.0
    %1885 = vmatpush.msra.mxu0 0.0
    %1886 = vmatpush.msra.mxu0 0.0
    %1887 = vmatpush.msra.mxu0 0.0
    %1888 = vmatpush.msra.mxu0 0.0
    %1889 = vmatpush.msra.mxu0 0.0
    %1890 = vmatpush.msra.mxu0 0.0
    %1891 = vmatpush.msra.mxu0 0.0
    %1892 = vmatpush.msra.mxu0 0.0
    %1893 = vmatpush.msra.mxu0 0.0
    %1894 = vmatpush.msra.mxu0 0.0
    %1895 = vmatpush.msra.mxu0 0.0
    %1896 = vmatpush.msra.mxu0 0.0
    %1897 = vmatpush.msra.mxu0 %v1880
    %1898 = vmatmul.f32.gmra.mxu0 %v1878
    %v1899 = vpop.f32.mrf.mxu0
    %v1900 = vadd.f32 0.0, %v1899
    %1901 = vdwg.mxu0
    %1903 = vrot.lane.b32.xlu0 %v1900, 16
    %v1904 = vpop.permute.xlu0 %1903
    %1906 = vst.msk [vmem:[#allocation4 + $0x4] sm:$0xf] %vm1624, %v1904
    %1907 = vrot.lane.b32.xlu0 %v1698, 104
    %v1908 = vpop.permute.xlu0 %1907
    %1909 = vrot.lane.b32.xlu0 %v1699, 72
    %v1910 = vpop.permute.xlu0 %1909
    %v1911 = vsel %vm1413, %v1908, 0
    %v1913 = vsel %vm1413, %v1910, 0
    %1915 = vmatpush.xpose.msra.mxu0 0.0
    %1916 = vmatpush.xpose.msra.mxu0 0.0
    %1917 = vmatpush.xpose.msra.mxu0 0.0
    %1918 = vmatpush.xpose.msra.mxu0 0.0
    %1919 = vmatpush.xpose.msra.mxu0 0.0
    %1920 = vmatpush.xpose.msra.mxu0 0.0
    %1921 = vmatpush.xpose.msra.mxu0 0.0
    %1922 = vmatpush.xpose.msra.mxu0 0.0
    %1923 = vmatpush.xpose.msra.mxu0 0.0
    %1924 = vmatpush.xpose.msra.mxu0 0.0
    %1925 = vmatpush.xpose.msra.mxu0 0.0
    %1926 = vmatpush.xpose.msra.mxu0 0.0
    %1927 = vmatpush.xpose.msra.mxu0 0.0
    %1928 = vmatpush.xpose.msra.mxu0 0.0
    %1929 = vmatpush.xpose.msra.mxu0 0.0
    %1930 = vmatpush.xpose.msra.mxu0 %v1913
    %1931 = vmatmul.f32.gmra.mxu0 %v1911
    %v1932 = vpop.f32.mrf.mxu0
    %v1933 = vadd.f32 0.0, %v1932
    %1934 = vdwg.mxu0
    %v1935 = vsel %vm1439, %v1933, -inf
    %1936 = vmax.xlane.f32.xlu0 %v1935
    %v1937 = vpop.xlane.xlu0 %1936
    %v1938 = vsub.f32 %v1933, %v1937
    %v1939 = vmul.f32 %v1938, 1.442695
    %v1940 = vpow.pop %v1939
    %v1941 = vsel %vm1439, %v1940, 0.0
    %1942 = vadd.xlane.f32.xlu0 %v1941
    %v1943 = vpop.xlane.xlu0 %1942
    %v1944 = vrcp.pop %v1943
    %v1945 = vmul.f32 %v1940, %v1944
    %1946 = vrot.lane.b32.xlu0 %v1699, 40
    %v1947 = vpop.permute.xlu0 %1946
    %v1949 = vsel %vm1453, %v1945, 0
    %v1951 = vsel %vm1457, %v1947, 0
    %1953 = vmatpush.msra.mxu0 0.0
    %1954 = vmatpush.msra.mxu0 0.0
    %1955 = vmatpush.msra.mxu0 0.0
    %1956 = vmatpush.msra.mxu0 0.0
    %1957 = vmatpush.msra.mxu0 0.0
    %1958 = vmatpush.msra.mxu0 0.0
    %1959 = vmatpush.msra.mxu0 0.0
    %1960 = vmatpush.msra.mxu0 0.0
    %1961 = vmatpush.msra.mxu0 0.0
    %1962 = vmatpush.msra.mxu0 0.0
    %1963 = vmatpush.msra.mxu0 0.0
    %1964 = vmatpush.msra.mxu0 0.0
    %1965 = vmatpush.msra.mxu0 0.0
    %1966 = vmatpush.msra.mxu0 0.0
    %1967 = vmatpush.msra.mxu0 0.0
    %1968 = vmatpush.msra.mxu0 %v1951
    %1969 = vmatmul.f32.gmra.mxu0 %v1949
    %v1970 = vpop.f32.mrf.mxu0
    %v1971 = vadd.f32 0.0, %v1970
    %1972 = vdwg.mxu0
    %1974 = vrot.lane.b32.xlu0 %v1971, 24
    %v1975 = vpop.permute.xlu0 %1974
    %1977 = vst.msk [vmem:[#allocation4 + $0x4] sm:$0xf] %vm1696, %v1975
    %v1978 = vld [vmem:[#allocation4] sm:$0xff]
    %v1979 = vld [vmem:[%s11] sm:$0xff]
    %v1980 = vld [vmem:[%s11 + $0x8] sm:$0xff]
    %v1981 = vld [vmem:[%s11 + $0x10] sm:$0xff]
    %v1982 = vld [vmem:[%s11 + $0x18] sm:$0xff]
    %v1983 = vld [vmem:[%s12] sm:$0x1]
    %v1985 = vperm.slane %v1983, 0
    %v1988 = vsel %vm108, %v1978, 0
    %1990 = vmatpush.msra.mxu0 0.0
    %1991 = vmatpush.msra.mxu0 0.0
    %1992 = vmatpush.msra.mxu0 0.0
    %1993 = vmatpush.msra.mxu0 0.0
    %1994 = vmatpush.msra.mxu0 0.0
    %1995 = vmatpush.msra.mxu0 0.0
    %1996 = vmatpush.msra.mxu0 0.0
    %1997 = vmatpush.msra.mxu0 0.0
    %1998 = vmatpush.msra.mxu0 0.0
    %1999 = vmatpush.msra.mxu0 0.0
    %2000 = vmatpush.msra.mxu0 0.0
    %2001 = vmatpush.msra.mxu0 0.0
    %2002 = vmatpush.msra.mxu0 %v1982
    %2003 = vmatpush.msra.mxu0 %v1981
    %2004 = vmatpush.msra.mxu0 %v1980
    %2005 = vmatpush.msra.mxu0 %v1979
    %2006 = vmatmul.f32.gmra.mxu0 %v1988
    %v2007 = vpop.f32.mrf.mxu0
    %v2008 = vadd.f32 %v1985, %v2007
    %2009 = vdwg.mxu0
    %v2010 = vadd.f32 %v2008, %v1377
    %v2011 = vsel %vm108, %v2010, 0.0
    %2012 = vadd.xlane.f32.xlu0 %v2011
    %v2013 = vpop.xlane.xlu0 %2012
    %v2014 = vrcp.pop 32.0
    %v2015 = vmul.f32 32.0, %v2014
    %v2016 = vsub.f32 1.0, %v2015
    %v2017 = vmul.f32 %v2014, %v2016
    %v2018 = vadd.f32 %v2014, %v2017
    %vm2019 = vweird.f32 %v2014
    %v2020 = vsel %vm2019, %v2014, %v2018
    %v2021 = vmul.f32 %v2013, %v2020
    %v2022 = vsub.f32 %v2010, %v2021
    %v2023 = vmul.f32 %v2022, %v2022
    %v2024 = vsel %vm108, %v2023, 0.0
    %2025 = vadd.xlane.f32.xlu0 %v2024
    %v2026 = vpop.xlane.xlu0 %2025
    %v2027 = vmul.f32 %v2026, %v2020
    %v2028 = vadd.f32 %v2027, 1e-05
    %v2029 = vrsqrt.pop %v2028
    %v2030 = vmul.f32 %v2029, %v2028
    %v2031 = vmul.f32 %v2030, %v2029
    %v2032 = vmul.f32 0.5, %v2031
    %v2033 = vsub.f32 1.5, %v2032
    %v2034 = vmul.f32 %v2029, %v2033
    %vm2035 = vweird.f32 %v2028
    %vm2036 = vweird.f32 %v2029
    %vm2037 = vmor %vm2035, %vm2036
    %v2038 = vsel %vm2037, %v2029, %v2034
    %v2039 = vmul.f32 %v2022, %v2038
    %v2040 = vld [vmem:[%s13] sm:$0x1]
    %v2042 = vperm.slane %v2040, 0
    %v2044 = vmul.f32 %v2039, %v2042
    %v2045 = vld [vmem:[%s14] sm:$0x1]
    %v2047 = vperm.slane %v2045, 0
    %v2049 = vadd.f32 %v2044, %v2047
    %v2050 = vld [vmem:[%s15] sm:$0xff]
    %v2051 = vld [vmem:[%s15 + $0x8] sm:$0xff]
    %v2052 = vld [vmem:[%s15 + $0x10] sm:$0xff]
    %v2053 = vld [vmem:[%s15 + $0x18] sm:$0xff]
    %v2054 = vld [vmem:[%s16] sm:$0x1]
    %v2056 = vperm.slane %v2054, 0
    %v2059 = vsel %vm108, %v2049, 0
    %2061 = vmatpush.msra.mxu0 0.0
    %2062 = vmatpush.msra.mxu0 0.0
    %2063 = vmatpush.msra.mxu0 0.0
    %2064 = vmatpush.msra.mxu0 0.0
    %2065 = vmatpush.msra.mxu0 0.0
    %2066 = vmatpush.msra.mxu0 0.0
    %2067 = vmatpush.msra.mxu0 0.0
    %2068 = vmatpush.msra.mxu0 0.0
    %2069 = vmatpush.msra.mxu0 0.0
    %2070 = vmatpush.msra.mxu0 0.0
    %2071 = vmatpush.msra.mxu0 0.0
    %2072 = vmatpush.msra.mxu0 0.0
    %2073 = vmatpush.msra.mxu0 %v2053
    %2074 = vmatpush.msra.mxu0 %v2052
    %2075 = vmatpush.msra.mxu0 %v2051
    %2076 = vmatpush.msra.mxu0 %v2050
    %2077 = vmatmul.f32.gmra.mxu0 %v2059
    %v2078 = vpop.f32.mrf.mxu0
    %v2079 = vadd.f32 %v2056, %v2078
    %2080 = vdwg.mxu0
    %v2081 = vld [vmem:[%s17] sm:$0xff]
    %v2082 = vld [vmem:[%s17 + $0x8] sm:$0xff]
    %v2083 = vld [vmem:[%s17 + $0x10] sm:$0xff]
    %v2084 = vld [vmem:[%s17 + $0x18] sm:$0xff]
    %v2085 = vld [vmem:[%s18] sm:$0x1]
    %v2087 = vperm.slane %v2085, 0
    %v2090 = vsel %vm108, %v2079, 0
    %2092 = vmatpush.msra.mxu0 0.0
    %2093 = vmatpush.msra.mxu0 0.0
    %2094 = vmatpush.msra.mxu0 0.0
    %2095 = vmatpush.msra.mxu0 0.0
    %2096 = vmatpush.msra.mxu0 0.0
    %2097 = vmatpush.msra.mxu0 0.0
    %2098 = vmatpush.msra.mxu0 0.0
    %2099 = vmatpush.msra.mxu0 0.0
    %2100 = vmatpush.msra.mxu0 0.0
    %2101 = vmatpush.msra.mxu0 0.0
    %2102 = vmatpush.msra.mxu0 0.0
    %2103 = vmatpush.msra.mxu0 0.0
    %2104 = vmatpush.msra.mxu0 %v2084
    %2105 = vmatpush.msra.mxu0 %v2083
    %2106 = vmatpush.msra.mxu0 %v2082
    %2107 = vmatpush.msra.mxu0 %v2081
    %2108 = vmatmul.f32.gmra.mxu0 %v2090
    %v2109 = vpop.f32.mrf.mxu0
    %v2110 = vadd.f32 %v2087, %v2109
    %2111 = vdwg.mxu0
    %v2112 = vtanh.pop %v2110
    %vm2113 = vcmask 220160
    %2114 = vst.msk [vmem:[#allocation5] sm:$0xff] %vm2113, %v2112
    // Predicated region
    $region78: #{_lambda_.5} parent=1 // pred_check
      _
    $region79: #{_lambda_.5} parent=1 // pred_check_branch
      %2116 = sbr.rel (0) target = $region81
    $region80: #{_lambda_.5} parent=1 // pred_region
      %2118 = vsyncadd [#allocation6], 0
      %s2120 = sshll.u32 [#allocation5], 4
      %s2121 = int_to_ptr.vmem [resolvable:$true] %s2120
      %s2122 = sshll.u32 %s19, 4
      %s2123 = int_to_ptr.hbm [resolvable:$true] %s2122
      %2125 = dma.vmem_to_hbm [thread:$0]  %s2121, 128, %s2123, [#allocation6]
    $region81: #{_lambda_.5} parent=1 // pred_fallthru
      _
    // Predicated region
    $region82: #{_lambda_.5} parent=1 // pred_check
      _
    $region83: #{_lambda_.5} parent=1 // pred_check_branch
      %2127 = sbr.rel (0) target = $region85
    $region84: #{_lambda_.5} parent=1 // pred_region
      %2129 = dma.done [#allocation6], 128
    $region85: #{_lambda_.5} parent=1 // pred_fallthru
      _
    %2130 = vsyncpa [#allocation6], 1

</llo_original>
